<compile_context>
chip_gen: v7x
topology: tpu7x:2x2x1
jax: 0.10.0
libtpu: 0.0.40
codegen_flags: <defaults>
</compile_context>

<pallas_src>
import math
from functools import partial

import jax
import jax.numpy as jnp
from jax.experimental import pallas as pl
from jax.experimental.pallas import tpu as pltpu

CIN = 8            # padded input-channel width (point C=6, global C=7)
CP = 128           # padded hidden width
BN_EPS = 1e-5
BN_SCALE = 1.0 / math.sqrt(1.0 + BN_EPS)   # eval-mode BN with fresh running stats


def _cdiv(a, b):
    return -(-a // b)


# ----------------------------------------------------------------------------
# Kernel 1: STN point features -> running max-pool -> head -> raw 2x2 params.
# grid = (nb, nn); n (point tiles, innermost) is the reduction axis.
# Orientation: channels on sublanes, points (streaming) / batch (head) on lanes.
# ----------------------------------------------------------------------------
def stn_kernel(x_ref, w0_ref, ws_ref, bs_ref, t_ref, pool_ref, *,
               n_points, tn, tb, c_in):
    n = pl.program_id(1)

    @pl.when(n == 0)
    def _init():
        # Pooled values are post-ReLU (>= 0) and masked tail columns are set to
        # 0, so 0 is a safe identity for the running max.
        pool_ref[...] = jnp.zeros_like(pool_ref)

    ragged = (n_points % tn) != 0
    if ragged:
        col = jax.lax.broadcasted_iota(jnp.int32, (1, tn), 1)
        valid = col < (n_points - n * tn)

    w0 = w0_ref[...]                                   # (CP, CIN) bf16 (resident)
    w1 = ws_ref[0]                                     # (CP, CP)  bf16
    b0 = bs_ref[0]                                     # (CP, 1)   f32
    b1 = bs_ref[1]
    zrows = jnp.zeros((CIN - c_in, tn), jnp.float32) if c_in < CIN else None

    for b in range(tb):                                # static; bounds intermediates
        xb = x_ref[b].astype(jnp.float32)              # (C, tn)
        if c_in < CIN:
            xb = jnp.concatenate([xb, zrows], axis=0)  # (CIN, tn), zero-padded rows
        xb = xb.astype(jnp.bfloat16)
        h = jnp.dot(w0, xb, preferred_element_type=jnp.float32)       # conv 2 -> 16
        h = jnp.maximum(h + b0, 0.0)
        h = jnp.dot(w1, h.astype(jnp.bfloat16),
                    preferred_element_type=jnp.float32)               # conv 16 -> 64
        h = jnp.maximum(h + b1, 0.0)
        if ragged:
            h = jnp.where(valid, h, 0.0)
        cmax = jnp.max(h, axis=1, keepdims=True)                      # (CP, 1)
        pool_ref[:, b:b + 1] = jnp.maximum(pool_ref[:, b:b + 1], cmax)

    @pl.when(n == pl.num_programs(1) - 1)
    def _head():                                       # once per batch tile
        g = pool_ref[...].astype(jnp.bfloat16)                        # (CP, tb)
        g = jnp.maximum(jnp.dot(ws_ref[1], g,
                                preferred_element_type=jnp.float32) + bs_ref[2], 0.0)
        g = jnp.maximum(jnp.dot(ws_ref[2], g.astype(jnp.bfloat16),
                                preferred_element_type=jnp.float32) + bs_ref[3], 0.0)
        t = jnp.dot(ws_ref[3], g.astype(jnp.bfloat16),
                    preferred_element_type=jnp.float32) + bs_ref[4]   # 16 -> 4 (raw)
        t_ref[0] = t[:8, :]


# ----------------------------------------------------------------------------
# Kernel 2: trunk.  The per-batch STN 2x2 transform (+identity) is folded into
# conv1's weight inside the kernel (built once per batch tile).
# ----------------------------------------------------------------------------
def trunk_kernel(x_ref, t_ref, xg_ref, w1_ref, ws_ref, wg_ref, bs_ref,
                 o_ref, pool_ref, w1e_ref, *, n_points, tn, tb, c_in):
    n = pl.program_id(1)

    @pl.when(n == 0)
    def _init():
        pool_ref[...] = jnp.zeros_like(pool_ref)
        # Fold per-batch transform: W1eff[:,0] = W1[:,0]*(1+t00) + W1[:,1]*t10
        #                           W1eff[:,1] = W1[:,0]*t01     + W1[:,1]*(1+t11)
        w1 = w1_ref[...]                               # (CP, CIN) f32 (BN folded)
        c0 = w1[:, 0:1]
        c1 = w1[:, 1:2]
        tt = t_ref[0]                                  # (8, tb) raw STN params
        for b in range(tb):
            t00 = tt[0:1, b:b + 1]
            t01 = tt[1:2, b:b + 1]
            t10 = tt[2:3, b:b + 1]
            t11 = tt[3:4, b:b + 1]
            w1e_ref[b, :, 0:1] = (c0 * (1.0 + t00) + c1 * t10).astype(jnp.bfloat16)
            w1e_ref[b, :, 1:2] = (c0 * t01 + c1 * (1.0 + t11)).astype(jnp.bfloat16)
            w1e_ref[b, :, 2:] = w1[:, 2:].astype(jnp.bfloat16)

    ragged = (n_points % tn) != 0
    if ragged:
        col = jax.lax.broadcasted_iota(jnp.int32, (1, tn), 1)
        valid = col < (n_points - n * tn)

    w2 = ws_ref[0]                                     # (CP, CP) bf16 (resident)
    b1 = bs_ref[0]
    b2 = bs_ref[1]
    zrows = jnp.zeros((CIN - c_in, tn), jnp.float32) if c_in < CIN else None

    for b in range(tb):
        xb = x_ref[b].astype(jnp.float32)
        if c_in < CIN:
            xb = jnp.concatenate([xb, zrows], axis=0)
        xb = xb.astype(jnp.bfloat16)                   # (CIN, tn)
        w1e = w1e_ref[b]                               # (CP, CIN) bf16, T pre-folded
        h = jnp.dot(w1e, xb, preferred_element_type=jnp.float32)      # conv 6 -> 32
        h = jnp.maximum(h + b1, 0.0)
        h = jnp.dot(w2, h.astype(jnp.bfloat16),
                    preferred_element_type=jnp.float32)               # conv 32 -> 128
        h = jnp.maximum(h + b2, 0.0)
        if ragged:
            h = jnp.where(valid, h, 0.0)
        pool_ref[:, b:b + 1] = jnp.maximum(pool_ref[:, b:b + 1],
                                           jnp.max(h, axis=1, keepdims=True))

    @pl.when(n == pl.num_programs(1) - 1)
    def _head():
        g = pool_ref[...].astype(jnp.bfloat16)                        # (CP, tb)
        xg = xg_ref[0].astype(jnp.bfloat16)                           # (CIN, tb)
        y = (jnp.dot(ws_ref[1], g, preferred_element_type=jnp.float32)
             + jnp.dot(wg_ref[...], xg, preferred_element_type=jnp.float32)
             + bs_ref[2])
        y = jnp.maximum(y, 0.0)                                       # 135 -> 34
        y = jnp.maximum(jnp.dot(ws_ref[2], y.astype(jnp.bfloat16),
                                preferred_element_type=jnp.float32) + bs_ref[3], 0.0)
        y = jnp.maximum(jnp.dot(ws_ref[3], y.astype(jnp.bfloat16),
                                preferred_element_type=jnp.float32) + bs_ref[4], 0.0)
        o = jnp.dot(ws_ref[4], y.astype(jnp.bfloat16),
                    preferred_element_type=jnp.float32) + bs_ref[5]   # 32 -> out
        o_ref[0] = o[:8, :]


# ----------------------------------------------------------------------------
# Parameter construction (deterministic, PyTorch-like uniform init)
# ----------------------------------------------------------------------------
def init_linear(key, out_f, in_f):
    kw, kb = jax.random.split(key)
    bound = 1.0 / math.sqrt(in_f)
    W = jax.random.uniform(kw, (out_f, in_f), jnp.float32, -bound, bound)
    b = jax.random.uniform(kb, (out_f,), jnp.float32, -bound, bound)
    return W, b


def make_params(key, num_features=6, num_global_features=7, out_features=4):
    ks = jax.random.split(key, 10)
    P = {}
    P['stn_w1'], P['stn_b1'] = init_linear(ks[0], 16, 2)
    P['stn_w2'], P['stn_b2'] = init_linear(ks[1], 64, 16)
    P['stn_w3'], P['stn_b3'] = init_linear(ks[2], 32, 64)
    P['stn_w4'], P['stn_b4'] = init_linear(ks[3], 16, 32)
    P['stn_wp'] = jnp.zeros((4, 16), jnp.float32)          # nn.init.zeros_
    P['stn_bp'] = jnp.zeros((4,), jnp.float32)
    P['ptn_w1'], P['ptn_b1'] = init_linear(ks[4], 32, num_features)
    P['ptn_w2'], P['ptn_b2'] = init_linear(ks[5], 128, 32)
    P['ptn_w3'], P['ptn_b3'] = init_linear(ks[6], 34, 128 + num_global_features)
    P['ptn_w4'], P['ptn_b4'] = init_linear(ks[7], 32, 34)
    P['ptn_w5a'], P['ptn_b5a'] = init_linear(ks[8], 32, 32)
    P['ptn_w5b'], P['ptn_b5b'] = init_linear(ks[9], out_features, 32)
    return P


def _pack_w(w_oi, cin, bn=True, dtype=jnp.bfloat16):
    """torch (out, in) weight -> (CP, cin) 'out on sublanes' matrix, BN folded."""
    w = w_oi * BN_SCALE if bn else w_oi
    out = jnp.zeros((CP, cin), jnp.float32).at[:w.shape[0], :w.shape[1]].set(w)
    return out.astype(dtype)


def _pack_b(b, bn=True):
    b = b * BN_SCALE if bn else b
    return jnp.zeros((CP, 1), jnp.float32).at[:b.shape[0], 0].set(b)


def pack_params(P):
    return {
        # ---- STN ----
        'stn_w0': _pack_w(P['stn_w1'], CIN),                        # 2 -> 16
        'stn_ws': jnp.stack([_pack_w(P['stn_w2'], CP),              # 16 -> 64
                             _pack_w(P['stn_w3'], CP),              # 64 -> 32
                             _pack_w(P['stn_w4'], CP),              # 32 -> 16
                             _pack_w(P['stn_wp'], CP, bn=False)]),  # 16 -> 4
        'stn_bs': jnp.stack([_pack_b(P['stn_b1']), _pack_b(P['stn_b2']),
                             _pack_b(P['stn_b3']), _pack_b(P['stn_b4']),
                             _pack_b(P['stn_bp'], bn=False)]),
        # ---- trunk ----
        'ptn_w1': _pack_w(P['ptn_w1'], CIN, dtype=jnp.float32),     # f32; T folded in-kernel
        'ptn_ws': jnp.stack([_pack_w(P['ptn_w2'], CP),              # 32 -> 128
                             _pack_w(P['ptn_w3'][:, :CP], CP),      # pool part of 135 -> 34
                             _pack_w(P['ptn_w4'], CP),              # 34 -> 32
                             _pack_w(P['ptn_w5a'], CP),             # 32 -> 32
                             _pack_w(P['ptn_w5b'], CP, bn=False)]), # 32 -> out
        'ptn_wg': _pack_w(P['ptn_w3'][:, CP:], CIN),                # global part of 135 -> 34
        'ptn_bs': jnp.stack([_pack_b(P['ptn_b1']), _pack_b(P['ptn_b2']),
                             _pack_b(P['ptn_b3']), _pack_b(P['ptn_b4']),
                             _pack_b(P['ptn_b5a']), _pack_b(P['ptn_b5b'], bn=False)]),
    }


# ----------------------------------------------------------------------------
# Wrapper
# ----------------------------------------------------------------------------
def _pick_tb(B):
    """Largest tb <= 8 dividing B with >= 2 batch tiles when B >= 2 (megacore)."""
    if B <= 1:
        return 1
    for cand in range(min(8, B // 2), 0, -1):
        if B % cand == 0:
            return cand
    return 1


def pointnet_forward(x, x_global, packed, out_features=4, tn_max=2048):
    B, C, N = x.shape
    CG = x_global.shape[1]
    assert C <= CIN and CG <= CIN and out_features <= 8

    # --- tiling: exact batch tiles, large point tiles, ragged tail masked ---
    tb = _pick_tb(B)
    nb = B // tb
    tn = N if N <= tn_max else tn_max        # tn_max must be a multiple of 128
    assert tn == N or tn % 128 == 0
    nn = _cdiv(N, tn)
    grid = (nb, nn)
    cparams = pltpu.CompilerParams(
        dimension_semantics=("parallel", "arbitrary"),
        vmem_limit_bytes=40 * 1024 * 1024)

    # x_global padded to CIN channels, laid out (nb, CIN, tb) -- tiny.
    xg = jnp.zeros((B, CIN), jnp.float32).at[:, :CG].set(x_global.astype(jnp.float32))
    xg = xg.reshape(nb, tb, CIN).transpose(0, 2, 1)

    # ---------------- kernel 1: STN ----------------
    t_raw = pl.pallas_call(
        partial(stn_kernel, n_points=N, tn=tn, tb=tb, c_in=C),
        out_shape=jax.ShapeDtypeStruct((nb, 8, tb), jnp.float32),
        grid_spec=pltpu.PrefetchScalarGridSpec(
            num_scalar_prefetch=0,
            grid=grid,
            in_specs=[
                pl.BlockSpec((tb, C, tn), lambda b, n: (b, 0, n)),
                pl.BlockSpec((CP, CIN), lambda b, n: (0, 0)),         # resident
                pl.BlockSpec((4, CP, CP), lambda b, n: (0, 0, 0)),    # resident
                pl.BlockSpec((5, CP, 1), lambda b, n: (0, 0, 0)),     # resident
            ],
            out_specs=pl.BlockSpec((1, 8, tb), lambda b, n: (b, 0, 0)),
            scratch_shapes=[pltpu.VMEM((CP, tb), jnp.float32)],
        ),
        compiler_params=cparams,
    )(x, packed['stn_w0'], packed['stn_ws'], packed['stn_bs'])

    # ---------------- kernel 2: trunk ----------------
    out = pl.pallas_call(
        partial(trunk_kernel, n_points=N, tn=tn, tb=tb, c_in=C),
        out_shape=jax.ShapeDtypeStruct((nb, 8, tb), jnp.float32),
        grid_spec=pltpu.PrefetchScalarGridSpec(
            num_scalar_prefetch=0,
            grid=grid,
            in_specs=[
                pl.BlockSpec((tb, C, tn), lambda b, n: (b, 0, n)),
                pl.BlockSpec((1, 8, tb), lambda b, n: (b, 0, 0)),     # raw STN params
                pl.BlockSpec((1, CIN, tb), lambda b, n: (b, 0, 0)),   # x_global
                pl.BlockSpec((CP, CIN), lambda b, n: (0, 0)),         # resident
                pl.BlockSpec((5, CP, CP), lambda b, n: (0, 0, 0)),    # resident
                pl.BlockSpec((CP, CIN), lambda b, n: (0, 0)),         # resident
                pl.BlockSpec((6, CP, 1), lambda b, n: (0, 0, 0)),     # resident
            ],
            out_specs=pl.BlockSpec((1, 8, tb), lambda b, n: (b, 0, 0)),
            scratch_shapes=[pltpu.VMEM((CP, tb), jnp.float32),
                            pltpu.VMEM((tb, CP, CIN), jnp.bfloat16)],
        ),
        compiler_params=cparams,
    )(x, t_raw, xg, packed['ptn_w1'], packed['ptn_ws'],
      packed['ptn_wg'], packed['ptn_bs'])

    out = jnp.transpose(out, (0, 2, 1)).reshape(B, 8)
    return out[:, :out_features]


# ----------------------------------------------------------------------------
# Pure-JAX reference (same eval-mode BN semantics) for verification
# ----------------------------------------------------------------------------
def ref_forward(x, xg, P):
    relu = lambda v: jnp.maximum(v, 0.0)

    def conv(h, W, b):  # h (B,C,N), W (O,C)
        return relu((jnp.einsum('oc,bcn->bon', W, h) + b[None, :, None]) * BN_SCALE)

    def lin(h, W, b, bn=True, act=True):
        y = h @ W.T + b
        if bn:
            y = y * BN_SCALE
        return relu(y) if act else y

    xy = x[:, :2, :]
    h = conv(xy, P['stn_w1'], P['stn_b1'])
    h = conv(h, P['stn_w2'], P['stn_b2'])
    h = jnp.max(h, axis=2)
    h = lin(h, P['stn_w3'], P['stn_b3'])
    h = lin(h, P['stn_w4'], P['stn_b4'])
    t = lin(h, P['stn_wp'], P['stn_bp'], bn=False, act=False)
    T = t.reshape(-1, 2, 2) + jnp.eye(2, dtype=jnp.float32)[None]
    xy_t = jnp.einsum('bij,bjn->bin', T, xy)
    xc = jnp.concatenate([xy_t, x[:, 2:, :]], axis=1)
    h = conv(xc, P['ptn_w1'], P['ptn_b1'])
    h = conv(h, P['ptn_w2'], P['ptn_b2'])
    h = jnp.max(h, axis=2)
    h = jnp.concatenate([h, xg], axis=1)
    h = lin(h, P['ptn_w3'], P['ptn_b3'])
    h = lin(h, P['ptn_w4'], P['ptn_b4'])
    h = lin(h, P['ptn_w5a'], P['ptn_b5a'])
    h = lin(h, P['ptn_w5b'], P['ptn_b5b'], bn=False, act=False)
    return h


if __name__ == "__main__":
    B, NUM_FEATURES, NUM_GLOBAL, OUT_FEATURES, N_POINTS = 2, 6, 7, 4, 16

    key = jax.random.PRNGKey(0)
    kx, kg, kp, kw, kb2 = jax.random.split(key, 5)
    x = jax.random.normal(kx, (B, NUM_FEATURES, N_POINTS), jnp.float32)
    x_global = jax.random.normal(kg, (B, NUM_GLOBAL), jnp.float32)

    params = make_params(kp, NUM_FEATURES, NUM_GLOBAL, OUT_FEATURES)
    packed = pack_params(params)

    fwd = jax.jit(partial(pointnet_forward, out_features=OUT_FEATURES))

    # 1) faithful init (stn_proj is zero-initialized -> identity STN transform)
    out = jax.block_until_ready(fwd(x, x_global, packed))
    ref = ref_forward(x, x_global, params)
    assert out.shape == (B, OUT_FEATURES)
    assert jnp.allclose(out, ref, rtol=5e-2, atol=5e-2), (out, ref)

    # 2) non-zero STN projection so the learned 2x2 transform / fold path is exercised
    params2 = dict(params)
    params2['stn_wp'] = jax.random.uniform(kw, (4, 16), jnp.float32, -0.25, 0.25)
    params2['stn_bp'] = jax.random.uniform(kb2, (4,), jnp.float32, -0.25, 0.25)
    packed2 = pack_params(params2)
    out2 = jax.block_until_ready(fwd(x, x_global, packed2))
    ref2 = ref_forward(x, x_global, params2)
    assert jnp.allclose(out2, ref2, rtol=5e-2, atol=5e-2), (out2, ref2)

    # 3) multi-tile check: several point tiles (ragged tail) + multiple batch tiles
    B3, N3 = 6, 4500
    x3 = jax.random.normal(jax.random.fold_in(kx, 3), (B3, NUM_FEATURES, N3), jnp.float32)
    xg3 = jax.random.normal(jax.random.fold_in(kg, 3), (B3, NUM_GLOBAL), jnp.float32)
    out3 = jax.block_until_ready(fwd(x3, xg3, packed2))
    ref3 = ref_forward(x3, xg3, params2)
    assert out3.shape == (B3, OUT_FEATURES)
    assert jnp.allclose(out3, ref3, rtol=5e-2, atol=8e-2), float(jnp.max(jnp.abs(out3 - ref3)))

    print("KERNEL_OK")
</pallas_src>

<mosaic_0001>
module attributes {stable_mosaic.version = 11 : i64} {
  func.func @stn_kernel(%arg0: i32, %arg1: i32, %arg2: memref<1x6x16xf32, #tpu.memory_space<vmem>>, %arg3: memref<128x8xbf16, #tpu.memory_space<vmem>>, %arg4: memref<4x128x128xbf16, #tpu.memory_space<vmem>>, %arg5: memref<5x128x1xf32, #tpu.memory_space<vmem>>, %arg6: memref<1x8x1xf32, #tpu.memory_space<vmem>>, %arg7: memref<128x1xf32, #tpu.memory_space<vmem>>) attributes {dimension_semantics = [#tpu.dimension_semantics<parallel>, #tpu.dimension_semantics<arbitrary>], iteration_bounds = array<i64: 2, 1>, scalar_prefetch = 0 : i64, scratch_operands = 1 : i64, tpu.core_type = #tpu.core_type<tc>, window_params = [{transform_indices = @transform_0, window_bounds = array<i64: 1, 6, 16>}, {pipeline_mode = #tpu.pipeline_mode<synchronous>, transform_indices = @transform_1, window_bounds = array<i64: 128, 8>}, {pipeline_mode = #tpu.pipeline_mode<synchronous>, transform_indices = @transform_2, window_bounds = array<i64: 4, 128, 128>}, {pipeline_mode = #tpu.pipeline_mode<synchronous>, transform_indices = @transform_3, window_bounds = array<i64: 5, 128, 1>}, {transform_indices = @transform_4, window_bounds = array<i64: 1, 8, 1>}]} {
    %c0_i32 = arith.constant 0 : i32
    %0 = arith.cmpi eq, %arg1, %c0_i32 : i32
    %1 = arith.extui %0 : i1 to i32
    %c0_i32_0 = arith.constant 0 : i32
    %2 = arith.cmpi ne, %1, %c0_i32_0 : i32
    scf.if %2 {
      %cst_24 = arith.constant 0.000000e+00 : f32
      %34 = vector.broadcast %cst_24 : f32 to vector<128x1xf32>
      %c0_25 = arith.constant 0 : index
      %c0_26 = arith.constant 0 : index
      %35 = vector.load %arg7[%c0_25, %c0_26] : memref<128x1xf32, #tpu.memory_space<vmem>>, vector<128x1xf32>
      tpu.vector_store %arg7[%c0_25, %c0_26], %34 {strides = array<i32>} : memref<128x1xf32, #tpu.memory_space<vmem>>, vector<128x1xf32>,
    } else {
    }
    %c0 = arith.constant 0 : index
    %c0_1 = arith.constant 0 : index
    %3 = vector.load %arg3[%c0, %c0_1] : memref<128x8xbf16, #tpu.memory_space<vmem>>, vector<128x8xbf16>
    %c0_2 = arith.constant 0 : index
    %c0_3 = arith.constant 0 : index
    %c0_4 = arith.constant 0 : index
    %4 = vector.load %arg4[%c0_2, %c0_3, %c0_4] : memref<4x128x128xbf16, #tpu.memory_space<vmem>>, vector<1x128x128xbf16>
    %5 = vector.shape_cast %4 : vector<1x128x128xbf16> to vector<128x128xbf16>
    %c0_5 = arith.constant 0 : index
    %c0_6 = arith.constant 0 : index
    %c0_7 = arith.constant 0 : index
    %6 = vector.load %arg5[%c0_5, %c0_6, %c0_7] : memref<5x128x1xf32, #tpu.memory_space<vmem>>, vector<1x128x1xf32>
    %7 = vector.shape_cast %6 : vector<1x128x1xf32> to vector<128x1xf32>
    %c1 = arith.constant 1 : index
    %c0_8 = arith.constant 0 : index
    %c0_9 = arith.constant 0 : index
    %8 = vector.load %arg5[%c1, %c0_8, %c0_9] : memref<5x128x1xf32, #tpu.memory_space<vmem>>, vector<1x128x1xf32>
    %9 = vector.shape_cast %8 : vector<1x128x1xf32> to vector<128x1xf32>
    %cst = arith.constant 0.000000e+00 : f32
    %10 = vector.broadcast %cst : f32 to vector<2x16xf32>
    %c0_10 = arith.constant 0 : index
    %c0_11 = arith.constant 0 : index
    %c0_12 = arith.constant 0 : index
    %11 = vector.load %arg2[%c0_10, %c0_11, %c0_12] : memref<1x6x16xf32, #tpu.memory_space<vmem>>, vector<1x6x16xf32>
    %12 = vector.shape_cast %11 : vector<1x6x16xf32> to vector<6x16xf32>
    %13 = tpu.concatenate %12, %10 in 0 : vector<6x16xf32>, vector<2x16xf32> -> vector<8x16xf32>
    %14 = arith.truncf %13 : vector<8x16xf32> to vector<8x16xbf16>
    %cst_13 = arith.constant dense<0.000000e+00> : vector<128x16xf32>
    %15 = tpu.matmul %3, %14, %cst_13 {dimension_numbers = #tpu.dot_dimension_numbers<[1], [0], [0], [1], [0, 0, 1, 1], [], []>} : vector<128x8xbf16>, vector<8x16xbf16>, vector<128x16xf32> -> vector<128x16xf32>
    %16 = vector.broadcast %7 : vector<128x1xf32> to vector<128x16xf32>
    %17 = arith.addf %15, %16 : vector<128x16xf32>
    %cst_14 = arith.constant 0.000000e+00 : f32
    %18 = vector.broadcast %cst_14 : f32 to vector<128x16xf32>
    %19 = arith.maximumf %17, %18 : vector<128x16xf32>
    %20 = arith.truncf %19 : vector<128x16xf32> to vector<128x16xbf16>
    %cst_15 = arith.constant dense<0.000000e+00> : vector<128x16xf32>
    %21 = tpu.matmul %5, %20, %cst_15 {dimension_numbers = #tpu.dot_dimension_numbers<[1], [0], [0], [1], [0, 0, 1, 1], [], []>} : vector<128x128xbf16>, vector<128x16xbf16>, vector<128x16xf32> -> vector<128x16xf32>
    %22 = vector.broadcast %9 : vector<128x1xf32> to vector<128x16xf32>
    %23 = arith.addf %21, %22 : vector<128x16xf32>
    %cst_16 = arith.constant 0.000000e+00 : f32
    %24 = vector.broadcast %cst_16 : f32 to vector<128x16xf32>
    %25 = arith.maximumf %23, %24 : vector<128x16xf32>
    %cst_17 = arith.constant dense<0xFF800000> : vector<128xf32>
    %26 = vector.multi_reduction <maximumf>, %25, %cst_17 [1] : vector<128x16xf32> to vector<128xf32>
    %27 = vector.shape_cast %26 : vector<128xf32> to vector<128x1xf32>
    %c0_18 = arith.constant 0 : index
    %c0_19 = arith.constant 0 : index
    %28 = vector.load %arg7[%c0_18, %c0_19] : memref<128x1xf32, #tpu.memory_space<vmem>>, vector<128x1xf32>
    %29 = arith.maximumf %28, %27 : vector<128x1xf32>
    %c0_20 = arith.constant 0 : index
    %c0_21 = arith.constant 0 : index
    %30 = vector.load %arg7[%c0_20, %c0_21] : memref<128x1xf32, #tpu.memory_space<vmem>>, vector<128x1xf32>
    tpu.vector_store %arg7[%c0_20, %c0_21], %29 {strides = array<i32>} : memref<128x1xf32, #tpu.memory_space<vmem>>, vector<128x1xf32>,
    %c0_i32_22 = arith.constant 0 : i32
    %31 = arith.cmpi eq, %arg1, %c0_i32_22 : i32
    %32 = arith.extui %31 : i1 to i32
    %c0_i32_23 = arith.constant 0 : i32
    %33 = arith.cmpi ne, %32, %c0_i32_23 : i32
    scf.if %33 {
      %c0_24 = arith.constant 0 : index
      %c0_25 = arith.constant 0 : index
      %34 = vector.load %arg7[%c0_24, %c0_25] : memref<128x1xf32, #tpu.memory_space<vmem>>, vector<128x1xf32>
      %35 = arith.truncf %34 : vector<128x1xf32> to vector<128x1xbf16>
      %c1_26 = arith.constant 1 : index
      %c0_27 = arith.constant 0 : index
      %c0_28 = arith.constant 0 : index
      %36 = vector.load %arg4[%c1_26, %c0_27, %c0_28] : memref<4x128x128xbf16, #tpu.memory_space<vmem>>, vector<1x128x128xbf16>
      %37 = vector.shape_cast %36 : vector<1x128x128xbf16> to vector<128x128xbf16>
      %cst_29 = arith.constant dense<0.000000e+00> : vector<128x1xf32>
      %38 = tpu.matmul %37, %35, %cst_29 {dimension_numbers = #tpu.dot_dimension_numbers<[1], [0], [0], [1], [0, 0, 1, 1], [], []>} : vector<128x128xbf16>, vector<128x1xbf16>, vector<128x1xf32> -> vector<128x1xf32>
      %c2 = arith.constant 2 : index
      %c0_30 = arith.constant 0 : index
      %c0_31 = arith.constant 0 : index
      %39 = vector.load %arg5[%c2, %c0_30, %c0_31] : memref<5x128x1xf32, #tpu.memory_space<vmem>>, vector<1x128x1xf32>
      %40 = vector.shape_cast %39 : vector<1x128x1xf32> to vector<128x1xf32>
      %41 = arith.addf %38, %40 : vector<128x1xf32>
      %cst_32 = arith.constant 0.000000e+00 : f32
      %42 = vector.broadcast %cst_32 : f32 to vector<128x1xf32>
      %43 = arith.maximumf %41, %42 : vector<128x1xf32>
      %c2_33 = arith.constant 2 : index
      %c0_34 = arith.constant 0 : index
      %c0_35 = arith.constant 0 : index
      %44 = vector.load %arg4[%c2_33, %c0_34, %c0_35] : memref<4x128x128xbf16, #tpu.memory_space<vmem>>, vector<1x128x128xbf16>
      %45 = vector.shape_cast %44 : vector<1x128x128xbf16> to vector<128x128xbf16>
      %46 = arith.truncf %43 : vector<128x1xf32> to vector<128x1xbf16>
      %cst_36 = arith.constant dense<0.000000e+00> : vector<128x1xf32>
      %47 = tpu.matmul %45, %46, %cst_36 {dimension_numbers = #tpu.dot_dimension_numbers<[1], [0], [0], [1], [0, 0, 1, 1], [], []>} : vector<128x128xbf16>, vector<128x1xbf16>, vector<128x1xf32> -> vector<128x1xf32>
      %c3 = arith.constant 3 : index
      %c0_37 = arith.constant 0 : index
      %c0_38 = arith.constant 0 : index
      %48 = vector.load %arg5[%c3, %c0_37, %c0_38] : memref<5x128x1xf32, #tpu.memory_space<vmem>>, vector<1x128x1xf32>
      %49 = vector.shape_cast %48 : vector<1x128x1xf32> to vector<128x1xf32>
      %50 = arith.addf %47, %49 : vector<128x1xf32>
      %cst_39 = arith.constant 0.000000e+00 : f32
      %51 = vector.broadcast %cst_39 : f32 to vector<128x1xf32>
      %52 = arith.maximumf %50, %51 : vector<128x1xf32>
      %c3_40 = arith.constant 3 : index
      %c0_41 = arith.constant 0 : index
      %c0_42 = arith.constant 0 : index
      %53 = vector.load %arg4[%c3_40, %c0_41, %c0_42] : memref<4x128x128xbf16, #tpu.memory_space<vmem>>, vector<1x128x128xbf16>
      %54 = vector.shape_cast %53 : vector<1x128x128xbf16> to vector<128x128xbf16>
      %55 = arith.truncf %52 : vector<128x1xf32> to vector<128x1xbf16>
      %cst_43 = arith.constant dense<0.000000e+00> : vector<128x1xf32>
      %56 = tpu.matmul %54, %55, %cst_43 {dimension_numbers = #tpu.dot_dimension_numbers<[1], [0], [0], [1], [0, 0, 1, 1], [], []>} : vector<128x128xbf16>, vector<128x1xbf16>, vector<128x1xf32> -> vector<128x1xf32>
      %c4 = arith.constant 4 : index
      %c0_44 = arith.constant 0 : index
      %c0_45 = arith.constant 0 : index
      %57 = vector.load %arg5[%c4, %c0_44, %c0_45] : memref<5x128x1xf32, #tpu.memory_space<vmem>>, vector<1x128x1xf32>
      %58 = vector.shape_cast %57 : vector<1x128x1xf32> to vector<128x1xf32>
      %59 = arith.addf %56, %58 : vector<128x1xf32>
      %60 = vector.extract_strided_slice %59 {offsets = [0, 0], sizes = [8, 1], strides = [1, 1]} : vector<128x1xf32> to vector<8x1xf32>
      %c0_46 = arith.constant 0 : index
      %c0_47 = arith.constant 0 : index
      %c0_48 = arith.constant 0 : index
      %61 = vector.load %arg6[%c0_46, %c0_47, %c0_48] : memref<1x8x1xf32, #tpu.memory_space<vmem>>, vector<1x8x1xf32>
      %62 = vector.shape_cast %61 : vector<1x8x1xf32> to vector<8x1xf32>
      %63 = vector.shape_cast %60 : vector<8x1xf32> to vector<1x8x1xf32>
      tpu.vector_store %arg6[%c0_46, %c0_47, %c0_48], %63 {strides = array<i32>} : memref<1x8x1xf32, #tpu.memory_space<vmem>>, vector<1x8x1xf32>,
    } else {
    }
    return
  }
  func.func @transform_0(%arg0: i32, %arg1: i32) -> (i32, i32, i32) {
    %c0_i32 = arith.constant 0 : i32
    %c0_i32_0 = arith.constant 0 : i32
    return %arg0, %c0_i32, %arg1 : i32, i32, i32
  }
  func.func @transform_1(%arg0: i32, %arg1: i32) -> (i32, i32) {
    %c0_i32 = arith.constant 0 : i32
    %c0_i32_0 = arith.constant 0 : i32
    %c0_i32_1 = arith.constant 0 : i32
    return %c0_i32, %c0_i32_0 : i32, i32
  }
  func.func @transform_2(%arg0: i32, %arg1: i32) -> (i32, i32, i32) {
    %c0_i32 = arith.constant 0 : i32
    %c0_i32_0 = arith.constant 0 : i32
    %c0_i32_1 = arith.constant 0 : i32
    %c0_i32_2 = arith.constant 0 : i32
    return %c0_i32, %c0_i32_0, %c0_i32_1 : i32, i32, i32
  }
  func.func @transform_3(%arg0: i32, %arg1: i32) -> (i32, i32, i32) {
    %c0_i32 = arith.constant 0 : i32
    %c0_i32_0 = arith.constant 0 : i32
    %c0_i32_1 = arith.constant 0 : i32
    %c0_i32_2 = arith.constant 0 : i32
    return %c0_i32, %c0_i32_0, %c0_i32_1 : i32, i32, i32
  }
  func.func @transform_4(%arg0: i32, %arg1: i32) -> (i32, i32, i32) {
    %c0_i32 = arith.constant 0 : i32
    %c0_i32_0 = arith.constant 0 : i32
    %c0_i32_1 = arith.constant 0 : i32
    return %arg0, %c0_i32, %c0_i32_0 : i32, i32, i32
  }
}

module attributes {stable_mosaic.version = 11 : i64} {
  func.func @trunk_kernel(%arg0: i32, %arg1: i32, %arg2: memref<1x6x16xf32, #tpu.memory_space<vmem>>, %arg3: memref<1x8x1xf32, #tpu.memory_space<vmem>>, %arg4: memref<1x8x1xf32, #tpu.memory_space<vmem>>, %arg5: memref<128x8xf32, #tpu.memory_space<vmem>>, %arg6: memref<5x128x128xbf16, #tpu.memory_space<vmem>>, %arg7: memref<128x8xbf16, #tpu.memory_space<vmem>>, %arg8: memref<6x128x1xf32, #tpu.memory_space<vmem>>, %arg9: memref<1x8x1xf32, #tpu.memory_space<vmem>>, %arg10: memref<128x1xf32, #tpu.memory_space<vmem>>, %arg11: memref<1x128x8xbf16, #tpu.memory_space<vmem>>) attributes {dimension_semantics = [#tpu.dimension_semantics<parallel>, #tpu.dimension_semantics<arbitrary>], iteration_bounds = array<i64: 2, 1>, scalar_prefetch = 0 : i64, scratch_operands = 2 : i64, tpu.core_type = #tpu.core_type<tc>, window_params = [{transform_indices = @transform_0, window_bounds = array<i64: 1, 6, 16>}, {transform_indices = @transform_1, window_bounds = array<i64: 1, 8, 1>}, {transform_indices = @transform_2, window_bounds = array<i64: 1, 8, 1>}, {pipeline_mode = #tpu.pipeline_mode<synchronous>, transform_indices = @transform_3, window_bounds = array<i64: 128, 8>}, {pipeline_mode = #tpu.pipeline_mode<synchronous>, transform_indices = @transform_4, window_bounds = array<i64: 5, 128, 128>}, {pipeline_mode = #tpu.pipeline_mode<synchronous>, transform_indices = @transform_5, window_bounds = array<i64: 128, 8>}, {pipeline_mode = #tpu.pipeline_mode<synchronous>, transform_indices = @transform_6, window_bounds = array<i64: 6, 128, 1>}, {transform_indices = @transform_7, window_bounds = array<i64: 1, 8, 1>}]} {
    %c0_i32 = arith.constant 0 : i32
    %0 = arith.cmpi eq, %arg1, %c0_i32 : i32
    %1 = arith.extui %0 : i1 to i32
    %c0_i32_0 = arith.constant 0 : i32
    %2 = arith.cmpi ne, %1, %c0_i32_0 : i32
    scf.if %2 {
      %cst_25 = arith.constant 0.000000e+00 : f32
      %35 = vector.broadcast %cst_25 : f32 to vector<128x1xf32>
      %c0_26 = arith.constant 0 : index
      %c0_27 = arith.constant 0 : index
      %36 = vector.load %arg10[%c0_26, %c0_27] : memref<128x1xf32, #tpu.memory_space<vmem>>, vector<128x1xf32>
      tpu.vector_store %arg10[%c0_26, %c0_27], %35 {strides = array<i32>} : memref<128x1xf32, #tpu.memory_space<vmem>>, vector<128x1xf32>,
      %c0_28 = arith.constant 0 : index
      %c0_29 = arith.constant 0 : index
      %37 = vector.load %arg5[%c0_28, %c0_29] : memref<128x8xf32, #tpu.memory_space<vmem>>, vector<128x8xf32>
      %38 = vector.extract_strided_slice %37 {offsets = [0, 0], sizes = [128, 1], strides = [1, 1]} : vector<128x8xf32> to vector<128x1xf32>
      %39 = vector.extract_strided_slice %37 {offsets = [0, 1], sizes = [128, 1], strides = [1, 1]} : vector<128x8xf32> to vector<128x1xf32>
      %c0_30 = arith.constant 0 : index
      %c0_31 = arith.constant 0 : index
      %c0_32 = arith.constant 0 : index
      %40 = vector.load %arg3[%c0_30, %c0_31, %c0_32] : memref<1x8x1xf32, #tpu.memory_space<vmem>>, vector<1x8x1xf32>
      %41 = vector.shape_cast %40 : vector<1x8x1xf32> to vector<8x1xf32>
      %42 = vector.extract_strided_slice %41 {offsets = [0, 0], sizes = [1, 1], strides = [1, 1]} : vector<8x1xf32> to vector<1x1xf32>
      %43 = vector.extract_strided_slice %41 {offsets = [1, 0], sizes = [1, 1], strides = [1, 1]} : vector<8x1xf32> to vector<1x1xf32>
      %44 = vector.extract_strided_slice %41 {offsets = [2, 0], sizes = [1, 1], strides = [1, 1]} : vector<8x1xf32> to vector<1x1xf32>
      %45 = vector.extract_strided_slice %41 {offsets = [3, 0], sizes = [1, 1], strides = [1, 1]} : vector<8x1xf32> to vector<1x1xf32>
      %cst_33 = arith.constant 1.000000e+00 : f32
      %46 = vector.broadcast %cst_33 : f32 to vector<1x1xf32>
      %47 = arith.addf %46, %42 : vector<1x1xf32>
      %48 = vector.broadcast %47 : vector<1x1xf32> to vector<128x1xf32>
      %49 = arith.mulf %38, %48 : vector<128x1xf32>
      %50 = vector.broadcast %44 : vector<1x1xf32> to vector<128x1xf32>
      %51 = arith.mulf %39, %50 : vector<128x1xf32>
      %52 = arith.addf %49, %51 : vector<128x1xf32>
      %53 = arith.truncf %52 : vector<128x1xf32> to vector<128x1xbf16>
      %c0_34 = arith.constant 0 : index
      %c0_35 = arith.constant 0 : index
      %c0_36 = arith.constant 0 : index
      %54 = vector.load %arg11[%c0_34, %c0_35, %c0_36] : memref<1x128x8xbf16, #tpu.memory_space<vmem>>, vector<1x128x1xbf16>
      %55 = vector.shape_cast %54 : vector<1x128x1xbf16> to vector<128x1xbf16>
      %56 = vector.shape_cast %53 : vector<128x1xbf16> to vector<1x128x1xbf16>
      tpu.vector_store %arg11[%c0_34, %c0_35, %c0_36], %56 {strides = array<i32>} : memref<1x128x8xbf16, #tpu.memory_space<vmem>>, vector<1x128x1xbf16>,
      %57 = vector.broadcast %43 : vector<1x1xf32> to vector<128x1xf32>
      %58 = arith.mulf %38, %57 : vector<128x1xf32>
      %cst_37 = arith.constant 1.000000e+00 : f32
      %59 = vector.broadcast %cst_37 : f32 to vector<1x1xf32>
      %60 = arith.addf %59, %45 : vector<1x1xf32>
      %61 = vector.broadcast %60 : vector<1x1xf32> to vector<128x1xf32>
      %62 = arith.mulf %39, %61 : vector<128x1xf32>
      %63 = arith.addf %58, %62 : vector<128x1xf32>
      %64 = arith.truncf %63 : vector<128x1xf32> to vector<128x1xbf16>
      %c0_38 = arith.constant 0 : index
      %c0_39 = arith.constant 0 : index
      %c1_40 = arith.constant 1 : index
      %65 = vector.load %arg11[%c0_38, %c0_39, %c1_40] : memref<1x128x8xbf16, #tpu.memory_space<vmem>>, vector<1x128x1xbf16>
      %66 = vector.shape_cast %65 : vector<1x128x1xbf16> to vector<128x1xbf16>
      %67 = vector.shape_cast %64 : vector<128x1xbf16> to vector<1x128x1xbf16>
      tpu.vector_store %arg11[%c0_38, %c0_39, %c1_40], %67 {strides = array<i32>} : memref<1x128x8xbf16, #tpu.memory_space<vmem>>, vector<1x128x1xbf16>,
      %68 = vector.extract_strided_slice %37 {offsets = [0, 2], sizes = [128, 6], strides = [1, 1]} : vector<128x8xf32> to vector<128x6xf32>
      %69 = arith.truncf %68 : vector<128x6xf32> to vector<128x6xbf16>
      %c0_41 = arith.constant 0 : index
      %c0_42 = arith.constant 0 : index
      %c2 = arith.constant 2 : index
      %70 = vector.load %arg11[%c0_41, %c0_42, %c2] : memref<1x128x8xbf16, #tpu.memory_space<vmem>>, vector<1x128x6xbf16>
      %71 = vector.shape_cast %70 : vector<1x128x6xbf16> to vector<128x6xbf16>
      %72 = vector.shape_cast %69 : vector<128x6xbf16> to vector<1x128x6xbf16>
      tpu.vector_store %arg11[%c0_41, %c0_42, %c2], %72 {strides = array<i32>} : memref<1x128x8xbf16, #tpu.memory_space<vmem>>, vector<1x128x6xbf16>,
    } else {
    }
    %c0 = arith.constant 0 : index
    %c0_1 = arith.constant 0 : index
    %c0_2 = arith.constant 0 : index
    %3 = vector.load %arg6[%c0, %c0_1, %c0_2] : memref<5x128x128xbf16, #tpu.memory_space<vmem>>, vector<1x128x128xbf16>
    %4 = vector.shape_cast %3 : vector<1x128x128xbf16> to vector<128x128xbf16>
    %c0_3 = arith.constant 0 : index
    %c0_4 = arith.constant 0 : index
    %c0_5 = arith.constant 0 : index
    %5 = vector.load %arg8[%c0_3, %c0_4, %c0_5] : memref<6x128x1xf32, #tpu.memory_space<vmem>>, vector<1x128x1xf32>
    %6 = vector.shape_cast %5 : vector<1x128x1xf32> to vector<128x1xf32>
    %c1 = arith.constant 1 : index
    %c0_6 = arith.constant 0 : index
    %c0_7 = arith.constant 0 : index
    %7 = vector.load %arg8[%c1, %c0_6, %c0_7] : memref<6x128x1xf32, #tpu.memory_space<vmem>>, vector<1x128x1xf32>
    %8 = vector.shape_cast %7 : vector<1x128x1xf32> to vector<128x1xf32>
    %cst = arith.constant 0.000000e+00 : f32
    %9 = vector.broadcast %cst : f32 to vector<2x16xf32>
    %c0_8 = arith.constant 0 : index
    %c0_9 = arith.constant 0 : index
    %c0_10 = arith.constant 0 : index
    %10 = vector.load %arg2[%c0_8, %c0_9, %c0_10] : memref<1x6x16xf32, #tpu.memory_space<vmem>>, vector<1x6x16xf32>
    %11 = vector.shape_cast %10 : vector<1x6x16xf32> to vector<6x16xf32>
    %12 = tpu.concatenate %11, %9 in 0 : vector<6x16xf32>, vector<2x16xf32> -> vector<8x16xf32>
    %13 = arith.truncf %12 : vector<8x16xf32> to vector<8x16xbf16>
    %c0_11 = arith.constant 0 : index
    %c0_12 = arith.constant 0 : index
    %c0_13 = arith.constant 0 : index
    %14 = vector.load %arg11[%c0_11, %c0_12, %c0_13] : memref<1x128x8xbf16, #tpu.memory_space<vmem>>, vector<1x128x8xbf16>
    %15 = vector.shape_cast %14 : vector<1x128x8xbf16> to vector<128x8xbf16>
    %cst_14 = arith.constant dense<0.000000e+00> : vector<128x16xf32>
    %16 = tpu.matmul %15, %13, %cst_14 {dimension_numbers = #tpu.dot_dimension_numbers<[1], [0], [0], [1], [0, 0, 1, 1], [], []>} : vector<128x8xbf16>, vector<8x16xbf16>, vector<128x16xf32> -> vector<128x16xf32>
    %17 = vector.broadcast %6 : vector<128x1xf32> to vector<128x16xf32>
    %18 = arith.addf %16, %17 : vector<128x16xf32>
    %cst_15 = arith.constant 0.000000e+00 : f32
    %19 = vector.broadcast %cst_15 : f32 to vector<128x16xf32>
    %20 = arith.maximumf %18, %19 : vector<128x16xf32>
    %21 = arith.truncf %20 : vector<128x16xf32> to vector<128x16xbf16>
    %cst_16 = arith.constant dense<0.000000e+00> : vector<128x16xf32>
    %22 = tpu.matmul %4, %21, %cst_16 {dimension_numbers = #tpu.dot_dimension_numbers<[1], [0], [0], [1], [0, 0, 1, 1], [], []>} : vector<128x128xbf16>, vector<128x16xbf16>, vector<128x16xf32> -> vector<128x16xf32>
    %23 = vector.broadcast %8 : vector<128x1xf32> to vector<128x16xf32>
    %24 = arith.addf %22, %23 : vector<128x16xf32>
    %cst_17 = arith.constant 0.000000e+00 : f32
    %25 = vector.broadcast %cst_17 : f32 to vector<128x16xf32>
    %26 = arith.maximumf %24, %25 : vector<128x16xf32>
    %c0_18 = arith.constant 0 : index
    %c0_19 = arith.constant 0 : index
    %27 = vector.load %arg10[%c0_18, %c0_19] : memref<128x1xf32, #tpu.memory_space<vmem>>, vector<128x1xf32>
    %cst_20 = arith.constant dense<0xFF800000> : vector<128xf32>
    %28 = vector.multi_reduction <maximumf>, %26, %cst_20 [1] : vector<128x16xf32> to vector<128xf32>
    %29 = vector.shape_cast %28 : vector<128xf32> to vector<128x1xf32>
    %30 = arith.maximumf %27, %29 : vector<128x1xf32>
    %c0_21 = arith.constant 0 : index
    %c0_22 = arith.constant 0 : index
    %31 = vector.load %arg10[%c0_21, %c0_22] : memref<128x1xf32, #tpu.memory_space<vmem>>, vector<128x1xf32>
    tpu.vector_store %arg10[%c0_21, %c0_22], %30 {strides = array<i32>} : memref<128x1xf32, #tpu.memory_space<vmem>>, vector<128x1xf32>,
    %c0_i32_23 = arith.constant 0 : i32
    %32 = arith.cmpi eq, %arg1, %c0_i32_23 : i32
    %33 = arith.extui %32 : i1 to i32
    %c0_i32_24 = arith.constant 0 : i32
    %34 = arith.cmpi ne, %33, %c0_i32_24 : i32
    scf.if %34 {
      %c0_25 = arith.constant 0 : index
      %c0_26 = arith.constant 0 : index
      %35 = vector.load %arg10[%c0_25, %c0_26] : memref<128x1xf32, #tpu.memory_space<vmem>>, vector<128x1xf32>
      %36 = arith.truncf %35 : vector<128x1xf32> to vector<128x1xbf16>
      %c0_27 = arith.constant 0 : index
      %c0_28 = arith.constant 0 : index
      %c0_29 = arith.constant 0 : index
      %37 = vector.load %arg4[%c0_27, %c0_28, %c0_29] : memref<1x8x1xf32, #tpu.memory_space<vmem>>, vector<1x8x1xf32>
      %38 = vector.shape_cast %37 : vector<1x8x1xf32> to vector<8x1xf32>
      %39 = arith.truncf %38 : vector<8x1xf32> to vector<8x1xbf16>
      %c1_30 = arith.constant 1 : index
      %c0_31 = arith.constant 0 : index
      %c0_32 = arith.constant 0 : index
      %40 = vector.load %arg6[%c1_30, %c0_31, %c0_32] : memref<5x128x128xbf16, #tpu.memory_space<vmem>>, vector<1x128x128xbf16>
      %41 = vector.shape_cast %40 : vector<1x128x128xbf16> to vector<128x128xbf16>
      %cst_33 = arith.constant dense<0.000000e+00> : vector<128x1xf32>
      %42 = tpu.matmul %41, %36, %cst_33 {dimension_numbers = #tpu.dot_dimension_numbers<[1], [0], [0], [1], [0, 0, 1, 1], [], []>} : vector<128x128xbf16>, vector<128x1xbf16>, vector<128x1xf32> -> vector<128x1xf32>
      %c0_34 = arith.constant 0 : index
      %c0_35 = arith.constant 0 : index
      %43 = vector.load %arg7[%c0_34, %c0_35] : memref<128x8xbf16, #tpu.memory_space<vmem>>, vector<128x8xbf16>
      %cst_36 = arith.constant dense<0.000000e+00> : vector<128x1xf32>
      %44 = tpu.matmul %43, %39, %cst_36 {dimension_numbers = #tpu.dot_dimension_numbers<[1], [0], [0], [1], [0, 0, 1, 1], [], []>} : vector<128x8xbf16>, vector<8x1xbf16>, vector<128x1xf32> -> vector<128x1xf32>
      %45 = arith.addf %42, %44 : vector<128x1xf32>
      %c2 = arith.constant 2 : index
      %c0_37 = arith.constant 0 : index
      %c0_38 = arith.constant 0 : index
      %46 = vector.load %arg8[%c2, %c0_37, %c0_38] : memref<6x128x1xf32, #tpu.memory_space<vmem>>, vector<1x128x1xf32>
      %47 = vector.shape_cast %46 : vector<1x128x1xf32> to vector<128x1xf32>
      %48 = arith.addf %45, %47 : vector<128x1xf32>
      %cst_39 = arith.constant 0.000000e+00 : f32
      %49 = vector.broadcast %cst_39 : f32 to vector<128x1xf32>
      %50 = arith.maximumf %48, %49 : vector<128x1xf32>
      %c2_40 = arith.constant 2 : index
      %c0_41 = arith.constant 0 : index
      %c0_42 = arith.constant 0 : index
      %51 = vector.load %arg6[%c2_40, %c0_41, %c0_42] : memref<5x128x128xbf16, #tpu.memory_space<vmem>>, vector<1x128x128xbf16>
      %52 = vector.shape_cast %51 : vector<1x128x128xbf16> to vector<128x128xbf16>
      %53 = arith.truncf %50 : vector<128x1xf32> to vector<128x1xbf16>
      %cst_43 = arith.constant dense<0.000000e+00> : vector<128x1xf32>
      %54 = tpu.matmul %52, %53, %cst_43 {dimension_numbers = #tpu.dot_dimension_numbers<[1], [0], [0], [1], [0, 0, 1, 1], [], []>} : vector<128x128xbf16>, vector<128x1xbf16>, vector<128x1xf32> -> vector<128x1xf32>
      %c3 = arith.constant 3 : index
      %c0_44 = arith.constant 0 : index
      %c0_45 = arith.constant 0 : index
      %55 = vector.load %arg8[%c3, %c0_44, %c0_45] : memref<6x128x1xf32, #tpu.memory_space<vmem>>, vector<1x128x1xf32>
      %56 = vector.shape_cast %55 : vector<1x128x1xf32> to vector<128x1xf32>
      %57 = arith.addf %54, %56 : vector<128x1xf32>
      %cst_46 = arith.constant 0.000000e+00 : f32
      %58 = vector.broadcast %cst_46 : f32 to vector<128x1xf32>
      %59 = arith.maximumf %57, %58 : vector<128x1xf32>
      %c3_47 = arith.constant 3 : index
      %c0_48 = arith.constant 0 : index
      %c0_49 = arith.constant 0 : index
      %60 = vector.load %arg6[%c3_47, %c0_48, %c0_49] : memref<5x128x128xbf16, #tpu.memory_space<vmem>>, vector<1x128x128xbf16>
      %61 = vector.shape_cast %60 : vector<1x128x128xbf16> to vector<128x128xbf16>
      %62 = arith.truncf %59 : vector<128x1xf32> to vector<128x1xbf16>
      %cst_50 = arith.constant dense<0.000000e+00> : vector<128x1xf32>
      %63 = tpu.matmul %61, %62, %cst_50 {dimension_numbers = #tpu.dot_dimension_numbers<[1], [0], [0], [1], [0, 0, 1, 1], [], []>} : vector<128x128xbf16>, vector<128x1xbf16>, vector<128x1xf32> -> vector<128x1xf32>
      %c4 = arith.constant 4 : index
      %c0_51 = arith.constant 0 : index
      %c0_52 = arith.constant 0 : index
      %64 = vector.load %arg8[%c4, %c0_51, %c0_52] : memref<6x128x1xf32, #tpu.memory_space<vmem>>, vector<1x128x1xf32>
      %65 = vector.shape_cast %64 : vector<1x128x1xf32> to vector<128x1xf32>
      %66 = arith.addf %63, %65 : vector<128x1xf32>
      %cst_53 = arith.constant 0.000000e+00 : f32
      %67 = vector.broadcast %cst_53 : f32 to vector<128x1xf32>
      %68 = arith.maximumf %66, %67 : vector<128x1xf32>
      %c4_54 = arith.constant 4 : index
      %c0_55 = arith.constant 0 : index
      %c0_56 = arith.constant 0 : index
      %69 = vector.load %arg6[%c4_54, %c0_55, %c0_56] : memref<5x128x128xbf16, #tpu.memory_space<vmem>>, vector<1x128x128xbf16>
      %70 = vector.shape_cast %69 : vector<1x128x128xbf16> to vector<128x128xbf16>
      %71 = arith.truncf %68 : vector<128x1xf32> to vector<128x1xbf16>
      %cst_57 = arith.constant dense<0.000000e+00> : vector<128x1xf32>
      %72 = tpu.matmul %70, %71, %cst_57 {dimension_numbers = #tpu.dot_dimension_numbers<[1], [0], [0], [1], [0, 0, 1, 1], [], []>} : vector<128x128xbf16>, vector<128x1xbf16>, vector<128x1xf32> -> vector<128x1xf32>
      %c5 = arith.constant 5 : index
      %c0_58 = arith.constant 0 : index
      %c0_59 = arith.constant 0 : index
      %73 = vector.load %arg8[%c5, %c0_58, %c0_59] : memref<6x128x1xf32, #tpu.memory_space<vmem>>, vector<1x128x1xf32>
      %74 = vector.shape_cast %73 : vector<1x128x1xf32> to vector<128x1xf32>
      %75 = arith.addf %72, %74 : vector<128x1xf32>
      %76 = vector.extract_strided_slice %75 {offsets = [0, 0], sizes = [8, 1], strides = [1, 1]} : vector<128x1xf32> to vector<8x1xf32>
      %c0_60 = arith.constant 0 : index
      %c0_61 = arith.constant 0 : index
      %c0_62 = arith.constant 0 : index
      %77 = vector.load %arg9[%c0_60, %c0_61, %c0_62] : memref<1x8x1xf32, #tpu.memory_space<vmem>>, vector<1x8x1xf32>
      %78 = vector.shape_cast %77 : vector<1x8x1xf32> to vector<8x1xf32>
      %79 = vector.shape_cast %76 : vector<8x1xf32> to vector<1x8x1xf32>
      tpu.vector_store %arg9[%c0_60, %c0_61, %c0_62], %79 {strides = array<i32>} : memref<1x8x1xf32, #tpu.memory_space<vmem>>, vector<1x8x1xf32>,
    } else {
    }
    return
  }
  func.func @transform_0(%arg0: i32, %arg1: i32) -> (i32, i32, i32) {
    %c0_i32 = arith.constant 0 : i32
    %c0_i32_0 = arith.constant 0 : i32
    return %arg0, %c0_i32, %arg1 : i32, i32, i32
  }
  func.func @transform_1(%arg0: i32, %arg1: i32) -> (i32, i32, i32) {
    %c0_i32 = arith.constant 0 : i32
    %c0_i32_0 = arith.constant 0 : i32
    %c0_i32_1 = arith.constant 0 : i32
    return %arg0, %c0_i32, %c0_i32_0 : i32, i32, i32
  }
  func.func @transform_2(%arg0: i32, %arg1: i32) -> (i32, i32, i32) {
    %c0_i32 = arith.constant 0 : i32
    %c0_i32_0 = arith.constant 0 : i32
    %c0_i32_1 = arith.constant 0 : i32
    return %arg0, %c0_i32, %c0_i32_0 : i32, i32, i32
  }
  func.func @transform_3(%arg0: i32, %arg1: i32) -> (i32, i32) {
    %c0_i32 = arith.constant 0 : i32
    %c0_i32_0 = arith.constant 0 : i32
    %c0_i32_1 = arith.constant 0 : i32
    return %c0_i32, %c0_i32_0 : i32, i32
  }
  func.func @transform_4(%arg0: i32, %arg1: i32) -> (i32, i32, i32) {
    %c0_i32 = arith.constant 0 : i32
    %c0_i32_0 = arith.constant 0 : i32
    %c0_i32_1 = arith.constant 0 : i32
    %c0_i32_2 = arith.constant 0 : i32
    return %c0_i32, %c0_i32_0, %c0_i32_1 : i32, i32, i32
  }
  func.func @transform_5(%arg0: i32, %arg1: i32) -> (i32, i32) {
    %c0_i32 = arith.constant 0 : i32
    %c0_i32_0 = arith.constant 0 : i32
    %c0_i32_1 = arith.constant 0 : i32
    return %c0_i32, %c0_i32_0 : i32, i32
  }
  func.func @transform_6(%arg0: i32, %arg1: i32) -> (i32, i32, i32) {
    %c0_i32 = arith.constant 0 : i32
    %c0_i32_0 = arith.constant 0 : i32
    %c0_i32_1 = arith.constant 0 : i32
    %c0_i32_2 = arith.constant 0 : i32
    return %c0_i32, %c0_i32_0, %c0_i32_1 : i32, i32, i32
  }
  func.func @transform_7(%arg0: i32, %arg1: i32) -> (i32, i32, i32) {
    %c0_i32 = arith.constant 0 : i32
    %c0_i32_0 = arith.constant 0 : i32
    %c0_i32_1 = arith.constant 0 : i32
    return %arg0, %c0_i32, %c0_i32_0 : i32, i32, i32
  }
}

</mosaic_0001>

<llo_original>
// kernel: pointnet_forward.2
$region0: #{pointnet_forward.2}
  #allocation0 [shape = 'u32[]', space=smem, size = 0x4, offset = 0x4, fixed_abs, tag = 'smem constant byte address 0x4 - core index']
  #allocation1 [shape = 'u32[144,128]{1,0:T(1,128)}', space=vmem, size = 0x12000, scoped, tag = 'internal scratch']
  #allocation2 [shape = 'f32[128,1]{1,0:T(8,128)}', space=vmem, size = 0x10000, scoped, tag = 'scratch operand']
  %s0 = inlined_call_operand.vmem [shape: f32[2,6,16], index: 0, kind: input, shape index: {}]
  %s1 = inlined_call_operand.vmem [shape: bf16[128,8], index: 1, kind: input, shape index: {}]
  %s2 = inlined_call_operand.vmem [shape: bf16[4,128,128], index: 2, kind: input, shape index: {}]
  %s3 = inlined_call_operand.vmem [shape: f32[5,128,1], index: 3, kind: input, shape index: {}]
  %s4 = inlined_call_operand.vmem [shape: f32[2,8,1], index: 4, kind: output, shape index: {}]
  %s5 = sld [smem:[#allocation0]]
  $region57: #{pointnet_forward.2} parent=0
    _
  %s7 = ssub.s32 1, %s5
  %s8 = scalar_select 0, %s7, %s5
  loop: start=0, step=1, limit=4
  $region2: #{pointnet_forward.2} parent=0 // loop_pre_header
    _
  $region3: #{pointnet_forward.2} parent=0 // loop_header
    %s10 = sphi 0, %s14
    %p11 = scmp.ge.s32.totalorder %s10, 4
    %s17 = sphi 0, %s29
    %s18 = sphi 0, %s25
    %s19 = sphi 0, %s17
    %s20 = sphi 0, %s18
    %s21 = sphi 0, %s19
    %s22 = sphi 0, %s20
    %s34 = sphi 0, %s36
    %s37 = sphi 0, %s34
    %s38 = sphi 0, %s37
    %s54 = sphi 0, %s38
    %s58 = sphi 0, %s58
    %s60 = sphi 0, %s58
    %s61 = sphi 0, %s60
    %s75 = sphi 0, %s61
    %s79 = sphi 0, %s79
    %s81 = sphi 0, %s79
    %s82 = sphi 0, %s81
    %s96 = sphi 0, %s82
    %s100 = sphi 0, %s100
    %s102 = sphi 0, %s100
    %s103 = sphi 0, %s102
    %s117 = sphi 0, %s103
    %s123 = sphi 0, %s125
    %s126 = sphi 0, %s123
    %s127 = sphi 0, %s126
    %s143 = sphi 0, %s127
  $region4: #{pointnet_forward.2} parent=0 // loop_header_branch
    %13 = sbr.rel (%p11) target = $region8
  $region5: #{pointnet_forward.2} parent=0 // loop_body
    %s15 = ssub.s32 %s10, 1
    %s16 = ssub.s32 %s10, 2
    %s23 = sadd.s32 1, %s18
    %p24 = scmp.ge.s32.totalorder %s23, 1
    %s25 = scalar_select %p24, 0, %s23
    %s26 = sadd.s32 1, %s17
    %s27 = scalar_select %p24, %s26, %s17
    %p28 = scmp.ge.s32.totalorder %s27, 2
    %s29 = scalar_select %p28, 0, %s27
    %s30 = ssub.s32 %s17, %s29
    %s31 = ssub.s32 %s18, %s25
    %s32 = sor.u32 %s30, %s31
    %p33 = scmp.eq.s32.totalorder %s32, 0
    %s35 = sadd.s32 %s34, 1
    %s36 = scalar_select %p33, %s34, %s35
    %p39 = pneg %p33
    %p40 = scmp.eq.s32.totalorder %s10, 1
    %p41 = por %p39, %p40
    %p42 = scmp.ne.s32.totalorder %s34, %s37
    %p43 = scmp.eq.s32.totalorder %s10, 0
    %p44 = por %p42, %p43
    %p45 = scmp.ne.s32.totalorder %s34, %s37
    %p46 = scmp.eq.s32.totalorder %s15, 1
    %p47 = por %p45, %p46
    %p48 = scmp.ne.s32.totalorder %s37, %s38
    %p49 = scmp.eq.s32.totalorder %s15, 0
    %p50 = por %p48, %p49
    %p51 = scmp.ne.s32.totalorder %s37, %s38
    %p52 = scmp.eq.s32.totalorder %s16, 1
    %p53 = por %p51, %p52
    %p55 = scmp.ne.s32.totalorder %s38, %s54
    %p56 = scmp.eq.s32.totalorder %s16, 0
    %p57 = por %p55, %p56
    %s59 = sadd.s32 %s58, 1
    %p62 = scmp.eq.s32.totalorder %s10, 1
    %p63 = scmp.ne.s32.totalorder %s58, %s60
    %p64 = scmp.eq.s32.totalorder %s10, 0
    %p65 = por %p63, %p64
    %p66 = scmp.ne.s32.totalorder %s58, %s60
    %p67 = scmp.eq.s32.totalorder %s15, 1
    %p68 = por %p66, %p67
    %p69 = scmp.ne.s32.totalorder %s60, %s61
    %p70 = scmp.eq.s32.totalorder %s15, 0
    %p71 = por %p69, %p70
    %p72 = scmp.ne.s32.totalorder %s60, %s61
    %p73 = scmp.eq.s32.totalorder %s16, 1
    %p74 = por %p72, %p73
    %p76 = scmp.ne.s32.totalorder %s61, %s75
    %p77 = scmp.eq.s32.totalorder %s16, 0
    %p78 = por %p76, %p77
    %s80 = sadd.s32 %s79, 1
    %p83 = scmp.eq.s32.totalorder %s10, 1
    %p84 = scmp.ne.s32.totalorder %s79, %s81
    %p85 = scmp.eq.s32.totalorder %s10, 0
    %p86 = por %p84, %p85
    %p87 = scmp.ne.s32.totalorder %s79, %s81
    %p88 = scmp.eq.s32.totalorder %s15, 1
    %p89 = por %p87, %p88
    %p90 = scmp.ne.s32.totalorder %s81, %s82
    %p91 = scmp.eq.s32.totalorder %s15, 0
    %p92 = por %p90, %p91
    %p93 = scmp.ne.s32.totalorder %s81, %s82
    %p94 = scmp.eq.s32.totalorder %s16, 1
    %p95 = por %p93, %p94
    %p97 = scmp.ne.s32.totalorder %s82, %s96
    %p98 = scmp.eq.s32.totalorder %s16, 0
    %p99 = por %p97, %p98
    %s101 = sadd.s32 %s100, 1
    %p104 = scmp.eq.s32.totalorder %s10, 1
    %p105 = scmp.ne.s32.totalorder %s100, %s102
    %p106 = scmp.eq.s32.totalorder %s10, 0
    %p107 = por %p105, %p106
    %p108 = scmp.ne.s32.totalorder %s100, %s102
    %p109 = scmp.eq.s32.totalorder %s15, 1
    %p110 = por %p108, %p109
    %p111 = scmp.ne.s32.totalorder %s102, %s103
    %p112 = scmp.eq.s32.totalorder %s15, 0
    %p113 = por %p111, %p112
    %p114 = scmp.ne.s32.totalorder %s102, %s103
    %p115 = scmp.eq.s32.totalorder %s16, 1
    %p116 = por %p114, %p115
    %p118 = scmp.ne.s32.totalorder %s103, %s117
    %p119 = scmp.eq.s32.totalorder %s16, 0
    %p120 = por %p118, %p119
    %s121 = ssub.s32 %s17, %s29
    %p122 = scmp.eq.s32.totalorder %s121, 0
    %s124 = sadd.s32 %s123, 1
    %s125 = scalar_select %p122, %s123, %s124
    %p128 = pneg %p122
    %p129 = scmp.eq.s32.totalorder %s10, 1
    %p130 = por %p128, %p129
    %p131 = scmp.ne.s32.totalorder %s123, %s126
    %p132 = scmp.eq.s32.totalorder %s10, 0
    %p133 = por %p131, %p132
    %p134 = scmp.ne.s32.totalorder %s123, %s126
    %p135 = scmp.eq.s32.totalorder %s15, 1
    %p136 = por %p134, %p135
    %p137 = scmp.ne.s32.totalorder %s126, %s127
    %p138 = scmp.eq.s32.totalorder %s15, 0
    %p139 = por %p137, %p138
    %p140 = scmp.ne.s32.totalorder %s126, %s127
    %p141 = scmp.eq.s32.totalorder %s16, 1
    %p142 = por %p140, %p141
    %p144 = scmp.ne.s32.totalorder %s127, %s143
    %p145 = scmp.eq.s32.totalorder %s16, 0
    %p146 = por %p144, %p145
    %p147 = scmp.le.s32.totalorder 1, %s10
    %p148 = scmp.lt.s32.totalorder %s10, 3
    %p149 = pnand %p147, %p148
    %p150 = pneg %p149
    // Predicated region
    $region9: #{pointnet_forward.2} parent=5 // pred_check
      _
    $region10: #{pointnet_forward.2} parent=5 // pred_check_branch
      %152 = sbr.rel (%p149) target = $region12
    $region11: #{pointnet_forward.2} parent=5 // pred_region
      %s153 = ssub.s32 %s10, 1
      // Predicated region
      $region13: #{pointnet_forward.2} parent=11 // pred_check
        %p154 = pneg %p71
      $region14: #{pointnet_forward.2} parent=11 // pred_check_branch
        %156 = sbr.rel (%p154) target = $region16
      $region15: #{pointnet_forward.2} parent=11 // pred_region
        _
      $region16: #{pointnet_forward.2} parent=11 // pred_fallthru
        _
      // Predicated region
      $region17: #{pointnet_forward.2} parent=11 // pred_check
        %p157 = pneg %p92
      $region18: #{pointnet_forward.2} parent=11 // pred_check_branch
        %159 = sbr.rel (%p157) target = $region20
      $region19: #{pointnet_forward.2} parent=11 // pred_region
        _
      $region20: #{pointnet_forward.2} parent=11 // pred_fallthru
        _
      // Predicated region
      $region21: #{pointnet_forward.2} parent=11 // pred_check
        %p160 = pneg %p113
      $region22: #{pointnet_forward.2} parent=11 // pred_check_branch
        %162 = sbr.rel (%p160) target = $region24
      $region23: #{pointnet_forward.2} parent=11 // pred_region
        _
      $region24: #{pointnet_forward.2} parent=11 // pred_fallthru
        _
    $region12: #{pointnet_forward.2} parent=5 // pred_fallthru
      _
    %p163 = scmp.lt.s32.totalorder %s10, 2
    // Predicated region
    $region25: #{pointnet_forward.2} parent=5 // pred_check
      %p164 = pneg %p163
    $region26: #{pointnet_forward.2} parent=5 // pred_check_branch
      %166 = sbr.rel (%p164) target = $region28
    $region27: #{pointnet_forward.2} parent=5 // pred_region
      // Predicated region
      $region29: #{pointnet_forward.2} parent=27 // pred_check
        %p167 = pneg %p44
      $region30: #{pointnet_forward.2} parent=27 // pred_check_branch
        %169 = sbr.rel (%p167) target = $region32
      $region31: #{pointnet_forward.2} parent=27 // pred_region
        %p170 = scmp.lt.s32.totalorder %s17, 1
        %s171 = scalar_select %p170, %s17, 1
        %p172 = scmp.lt.s32.totalorder %s18, 0
        %s173 = scalar_select %p172, %s18, 0
        %s174 = sadd.s32 %s173, %s171
        %s175 = smul.addr %s174, 8
        %s176 = scalar_lea.vmem %s0, %s175
      $region32: #{pointnet_forward.2} parent=27 // pred_fallthru
        _
    $region28: #{pointnet_forward.2} parent=5 // pred_fallthru
      _
    %p177 = scmp.le.s32.totalorder 1, %s10
    %p178 = scmp.lt.s32.totalorder %s10, 3
    %p179 = pnand %p177, %p178
    %p180 = pneg %p179
    // Predicated region
    $region33: #{pointnet_forward.2} parent=5 // pred_check
      _
    $region34: #{pointnet_forward.2} parent=5 // pred_check_branch
      %182 = sbr.rel (%p179) target = $region36
    $region35: #{pointnet_forward.2} parent=5 // pred_region
      %s183 = ssub.s32 %s10, 1
      %p184 = scmp.lt.s32.totalorder %s19, 1
      %s185 = scalar_select %p184, %s19, 1
      %p186 = scmp.lt.s32.totalorder %s20, 0
      %s187 = scalar_select %p186, %s20, 0
      %s188 = sadd.s32 %s187, %s185
      %s189 = smul.addr %s188, 8
      %s190 = scalar_lea.vmem %s0, %s189
      %p191 = pneg %p50
      %p192 = pneg %p47
      %p193 = pneg %p71
      %p194 = pneg %p68
      %p195 = pneg %p92
      %p196 = pneg %p89
      %p197 = pneg %p113
      %p198 = pneg %p110
      %p199 = pneg %p139
      %p200 = pneg %p136
      %p201 = scmp.lt.s32.totalorder %s19, 1
      %s202 = scalar_select %p201, %s19, 1
      %s203 = smul.addr %s202, 8
      %s204 = scalar_lea.vmem %s4, %s203
      %p205 = scmp.lt.s32.totalorder %s19, 1
      %s206 = scalar_select %p205, %s19, 1
      %p207 = scmp.lt.s32.totalorder %s20, 0
      %s208 = scalar_select %p207, %s20, 0
      %s209 = sadd.s32 %s208, %s206
      %s210 = smul.addr %s209, 8
      %s211 = scalar_lea.vmem %s0, %s210
      %p212 = scmp.lt.s32.totalorder %s19, 1
      %s213 = scalar_select %p212, %s19, 1
      %s214 = smul.addr %s213, 8
      %s215 = scalar_lea.vmem %s4, %s214
      %p217 = scmp.eq.s32.totalorder %s20, 0
      // Predicated region
      $region37: #{pointnet_forward.2} parent=35 // pred_check
        %p218 = pneg %p217
      $region38: #{pointnet_forward.2} parent=35 // pred_check_branch
        %220 = sbr.rel (%p218) target = $region40
      $region39: #{pointnet_forward.2} parent=35 // pred_region
        %vm221 = vcmask 7168
        %222 = vst.msk [vmem:[#allocation2] sm:$0xff] %vm221, 0.0
        %223 = vst.msk [vmem:[#allocation2 + $0x8] sm:$0xff] %vm221, 0.0
        %224 = vst.msk [vmem:[#allocation2 + $0x10] sm:$0xff] %vm221, 0.0
        %225 = vst.msk [vmem:[#allocation2 + $0x18] sm:$0xff] %vm221, 0.0
        %226 = vst.msk [vmem:[#allocation2 + $0x20] sm:$0xff] %vm221, 0.0
        %227 = vst.msk [vmem:[#allocation2 + $0x28] sm:$0xff] %vm221, 0.0
        %228 = vst.msk [vmem:[#allocation2 + $0x30] sm:$0xff] %vm221, 0.0
        %229 = vst.msk [vmem:[#allocation2 + $0x38] sm:$0xff] %vm221, 0.0
        %230 = vst.msk [vmem:[#allocation2 + $0x40] sm:$0xff] %vm221, 0.0
        %231 = vst.msk [vmem:[#allocation2 + $0x48] sm:$0xff] %vm221, 0.0
        %232 = vst.msk [vmem:[#allocation2 + $0x50] sm:$0xff] %vm221, 0.0
        %233 = vst.msk [vmem:[#allocation2 + $0x58] sm:$0xff] %vm221, 0.0
        %234 = vst.msk [vmem:[#allocation2 + $0x60] sm:$0xff] %vm221, 0.0
        %235 = vst.msk [vmem:[#allocation2 + $0x68] sm:$0xff] %vm221, 0.0
        %236 = vst.msk [vmem:[#allocation2 + $0x70] sm:$0xff] %vm221, 0.0
        %237 = vst.msk [vmem:[#allocation2 + $0x78] sm:$0xff] %vm221, 0.0
      $region40: #{pointnet_forward.2} parent=35 // pred_fallthru
        _
      %v238 = vld [vmem:[%s1] sm:$0xf]
      %v239 = vld [vmem:[%s1 + $0x4] sm:$0xf]
      %v240 = vld [vmem:[%s1 + $0x8] sm:$0xf]
      %v241 = vld [vmem:[%s1 + $0xc] sm:$0xf]
      %v242 = vld [vmem:[%s1 + $0x10] sm:$0xf]
      %v243 = vld [vmem:[%s1 + $0x14] sm:$0xf]
      %v244 = vld [vmem:[%s1 + $0x18] sm:$0xf]
      %v245 = vld [vmem:[%s1 + $0x1c] sm:$0xf]
      %v246 = vld [vmem:[%s1 + $0x20] sm:$0xf]
      %v247 = vld [vmem:[%s1 + $0x24] sm:$0xf]
      %v248 = vld [vmem:[%s1 + $0x28] sm:$0xf]
      %v249 = vld [vmem:[%s1 + $0x2c] sm:$0xf]
      %v250 = vld [vmem:[%s1 + $0x30] sm:$0xf]
      %v251 = vld [vmem:[%s1 + $0x34] sm:$0xf]
      %v252 = vld [vmem:[%s1 + $0x38] sm:$0xf]
      %v253 = vld [vmem:[%s1 + $0x3c] sm:$0xf]
      %v254 = vld [vmem:[%s2] sm:$0xf]
      %v255 = vld [vmem:[%s2 + $0x4] sm:$0xf]
      %v256 = vld [vmem:[%s2 + $0x8] sm:$0xf]
      %v257 = vld [vmem:[%s2 + $0xc] sm:$0xf]
      %v258 = vld [vmem:[%s2 + $0x10] sm:$0xf]
      %v259 = vld [vmem:[%s2 + $0x14] sm:$0xf]
      %v260 = vld [vmem:[%s2 + $0x18] sm:$0xf]
      %v261 = vld [vmem:[%s2 + $0x1c] sm:$0xf]
      %v262 = vld [vmem:[%s2 + $0x20] sm:$0xf]
      %v263 = vld [vmem:[%s2 + $0x24] sm:$0xf]
      %v264 = vld [vmem:[%s2 + $0x28] sm:$0xf]
      %v265 = vld [vmem:[%s2 + $0x2c] sm:$0xf]
      %v266 = vld [vmem:[%s2 + $0x30] sm:$0xf]
      %v267 = vld [vmem:[%s2 + $0x34] sm:$0xf]
      %v268 = vld [vmem:[%s2 + $0x38] sm:$0xf]
      %v269 = vld [vmem:[%s2 + $0x3c] sm:$0xf]
      %v270 = vld [vmem:[%s3] sm:$0xff]
      %v271 = vld [vmem:[%s3 + $0x8] sm:$0xff]
      %v272 = vld [vmem:[%s3 + $0x10] sm:$0xff]
      %v273 = vld [vmem:[%s3 + $0x18] sm:$0xff]
      %v274 = vld [vmem:[%s3 + $0x20] sm:$0xff]
      %v275 = vld [vmem:[%s3 + $0x28] sm:$0xff]
      %v276 = vld [vmem:[%s3 + $0x30] sm:$0xff]
      %v277 = vld [vmem:[%s3 + $0x38] sm:$0xff]
      %v278 = vld [vmem:[%s3 + $0x40] sm:$0xff]
      %v279 = vld [vmem:[%s3 + $0x48] sm:$0xff]
      %v280 = vld [vmem:[%s3 + $0x50] sm:$0xff]
      %v281 = vld [vmem:[%s3 + $0x58] sm:$0xff]
      %v282 = vld [vmem:[%s3 + $0x60] sm:$0xff]
      %v283 = vld [vmem:[%s3 + $0x68] sm:$0xff]
      %v284 = vld [vmem:[%s3 + $0x70] sm:$0xff]
      %v285 = vld [vmem:[%s3 + $0x78] sm:$0xff]
      %s286 = scalar_lea.vmem %s3, 128
      %v287 = vld [vmem:[%s286] sm:$0xff]
      %v288 = vld [vmem:[%s286 + $0x8] sm:$0xff]
      %v289 = vld [vmem:[%s286 + $0x10] sm:$0xff]
      %v290 = vld [vmem:[%s286 + $0x18] sm:$0xff]
      %v291 = vld [vmem:[%s286 + $0x20] sm:$0xff]
      %v292 = vld [vmem:[%s286 + $0x28] sm:$0xff]
      %v293 = vld [vmem:[%s286 + $0x30] sm:$0xff]
      %v294 = vld [vmem:[%s286 + $0x38] sm:$0xff]
      %v295 = vld [vmem:[%s286 + $0x40] sm:$0xff]
      %v296 = vld [vmem:[%s286 + $0x48] sm:$0xff]
      %v297 = vld [vmem:[%s286 + $0x50] sm:$0xff]
      %v298 = vld [vmem:[%s286 + $0x58] sm:$0xff]
      %v299 = vld [vmem:[%s286 + $0x60] sm:$0xff]
      %v300 = vld [vmem:[%s286 + $0x68] sm:$0xff]
      %v301 = vld [vmem:[%s286 + $0x70] sm:$0xff]
      %v302 = vld [vmem:[%s286 + $0x78] sm:$0xff]
      %v303 = vld [vmem:[%s211] sm:$0x3f]
      %vm304 = vcmask 1045504
      %v305 = vsel %vm304, %v303, 0.0
      %v306 = vpack.c.bf16 %v305, %v305
      %308 = vset.pattern.permute.xlu0 0
      %309 = vperm.xlu0 %308, %v270
      %v310 = vpop.permute.xlu0 %309
      %313 = vset.pattern.permute.xlu0 0
      %314 = vperm.xlu0 %313, %v271
      %v315 = vpop.permute.xlu0 %314
      %318 = vset.pattern.permute.xlu0 0
      %319 = vperm.xlu0 %318, %v272
      %v320 = vpop.permute.xlu0 %319
      %323 = vset.pattern.permute.xlu0 0
      %324 = vperm.xlu0 %323, %v273
      %v325 = vpop.permute.xlu0 %324
      %328 = vset.pattern.permute.xlu0 0
      %329 = vperm.xlu0 %328, %v274
      %v330 = vpop.permute.xlu0 %329
      %333 = vset.pattern.permute.xlu0 0
      %334 = vperm.xlu0 %333, %v275
      %v335 = vpop.permute.xlu0 %334
      %338 = vset.pattern.permute.xlu0 0
      %339 = vperm.xlu0 %338, %v276
      %v340 = vpop.permute.xlu0 %339
      %343 = vset.pattern.permute.xlu0 0
      %344 = vperm.xlu0 %343, %v277
      %v345 = vpop.permute.xlu0 %344
      %348 = vset.pattern.permute.xlu0 0
      %349 = vperm.xlu0 %348, %v278
      %v350 = vpop.permute.xlu0 %349
      %353 = vset.pattern.permute.xlu0 0
      %354 = vperm.xlu0 %353, %v279
      %v355 = vpop.permute.xlu0 %354
      %358 = vset.pattern.permute.xlu0 0
      %359 = vperm.xlu0 %358, %v280
      %v360 = vpop.permute.xlu0 %359
      %363 = vset.pattern.permute.xlu0 0
      %364 = vperm.xlu0 %363, %v281
      %v365 = vpop.permute.xlu0 %364
      %368 = vset.pattern.permute.xlu0 0
      %369 = vperm.xlu0 %368, %v282
      %v370 = vpop.permute.xlu0 %369
      %373 = vset.pattern.permute.xlu0 0
      %374 = vperm.xlu0 %373, %v283
      %v375 = vpop.permute.xlu0 %374
      %378 = vset.pattern.permute.xlu0 0
      %379 = vperm.xlu0 %378, %v284
      %v380 = vpop.permute.xlu0 %379
      %383 = vset.pattern.permute.xlu0 0
      %384 = vperm.xlu0 %383, %v285
      %v385 = vpop.permute.xlu0 %384
      %v403 = vunpack.c.l.b16 %v238
      %v404 = vunpack.c.l.b16 %v239
      %v405 = vunpack.c.l.b16 %v240
      %v406 = vunpack.c.l.b16 %v241
      %v407 = vunpack.c.l.b16 %v242
      %v408 = vunpack.c.l.b16 %v243
      %v409 = vunpack.c.l.b16 %v244
      %v410 = vunpack.c.l.b16 %v245
      %v411 = vunpack.c.l.b16 %v246
      %v412 = vunpack.c.l.b16 %v247
      %v413 = vunpack.c.l.b16 %v248
      %v414 = vunpack.c.l.b16 %v249
      %v415 = vunpack.c.l.b16 %v250
      %v416 = vunpack.c.l.b16 %v251
      %v417 = vunpack.c.l.b16 %v252
      %v418 = vunpack.c.l.b16 %v253
      %v419 = vpack.c.b16 %v404, %v403
      %v420 = vpack.c.b16 %v406, %v405
      %v421 = vpack.c.b16 %v408, %v407
      %v422 = vpack.c.b16 %v410, %v409
      %v423 = vpack.c.b16 %v412, %v411
      %v424 = vpack.c.b16 %v414, %v413
      %v425 = vpack.c.b16 %v416, %v415
      %v426 = vpack.c.b16 %v418, %v417
      %vm427 = vcmask 64512
      %v429 = vsel %vm427, %v419, 0
      %v432 = vsel %vm427, %v420, 0
      %v435 = vsel %vm427, %v421, 0
      %v438 = vsel %vm427, %v422, 0
      %v441 = vsel %vm427, %v423, 0
      %v444 = vsel %vm427, %v424, 0
      %v447 = vsel %vm427, %v425, 0
      %v450 = vsel %vm427, %v426, 0
      %vm452 = vcmask 1043456
      %v454 = vsel %vm452, %v306, 0
      %456 = vmatprep.subr.bf16.mxu0 0
      %457 = vmatpush1.bf16.msra.mxu0 %v454
      %458 = vmatprep.subr.bf16.mxu0 0
      %459 = vmatpush1.bf16.msra.mxu0 0
      %460 = vmatprep.subr.bf16.mxu0 0
      %461 = vmatpush1.bf16.msra.mxu0 0
      %462 = vmatprep.subr.bf16.mxu0 0
      %463 = vmatpush1.bf16.msra.mxu0 0
      %464 = vmatprep.subr.bf16.mxu0 0
      %465 = vmatpush1.bf16.msra.mxu0 0
      %466 = vmatprep.subr.bf16.mxu0 0
      %467 = vmatpush1.bf16.msra.mxu0 0
      %468 = vmatprep.subr.bf16.mxu0 0
      %469 = vmatpush1.bf16.msra.mxu0 0
      %470 = vmatprep.subr.bf16.mxu0 0
      %471 = vmatpush1.bf16.msra.mxu0 0
      %472 = vmatprep.subr.bf16.mxu0 0
      %473 = vmatpush1.bf16.msra.mxu0 0
      %474 = vmatprep.subr.bf16.mxu0 0
      %475 = vmatpush1.bf16.msra.mxu0 0
      %476 = vmatprep.subr.bf16.mxu0 0
      %477 = vmatpush1.bf16.msra.mxu0 0
      %478 = vmatprep.subr.bf16.mxu0 0
      %479 = vmatpush1.bf16.msra.mxu0 0
      %480 = vmatprep.subr.bf16.mxu0 0
      %481 = vmatpush1.bf16.msra.mxu0 0
      %482 = vmatprep.subr.bf16.mxu0 0
      %483 = vmatpush1.bf16.msra.mxu0 0
      %484 = vmatprep.subr.bf16.mxu0 0
      %485 = vmatpush1.bf16.msra.mxu0 0
      %486 = vmatprep.subr.bf16.mxu0 0
      %487 = vmatpush1.bf16.msra.mxu0 0
      %488 = vmatprep.mubr.bf16.mxu0 0
      %489 = vmatmul.mubr.bf16.gmra.mrb[0].mxu0 %v429
      %v490 = vpop.f32.mrb[0].mxu0
      %v491 = vadd.f32 %v310, %v490
      %v492 = vpop.f32.mrb[0].mxu0
      %v493 = vpop.f32.mrb[0].mxu0
      %v494 = vadd.f32 %v315, %v493
      %v495 = vpop.f32.mrb[0].mxu0
      %496 = vmatprep.mubr.bf16.mxu0 0
      %497 = vmatmul.mubr.bf16.gmra.mrb[0].mxu0 %v432
      %v498 = vpop.f32.mrb[0].mxu0
      %v499 = vadd.f32 %v320, %v498
      %v500 = vpop.f32.mrb[0].mxu0
      %v501 = vpop.f32.mrb[0].mxu0
      %v502 = vadd.f32 %v325, %v501
      %v503 = vpop.f32.mrb[0].mxu0
      %504 = vmatprep.mubr.bf16.mxu0 0
      %505 = vmatmul.mubr.bf16.gmra.mrb[0].mxu0 %v435
      %v506 = vpop.f32.mrb[0].mxu0
      %v507 = vadd.f32 %v330, %v506
      %v508 = vpop.f32.mrb[0].mxu0
      %v509 = vpop.f32.mrb[0].mxu0
      %v510 = vadd.f32 %v335, %v509
      %v511 = vpop.f32.mrb[0].mxu0
      %512 = vmatprep.mubr.bf16.mxu0 0
      %513 = vmatmul.mubr.bf16.gmra.mrb[0].mxu0 %v438
      %v514 = vpop.f32.mrb[0].mxu0
      %v515 = vadd.f32 %v340, %v514
      %v516 = vpop.f32.mrb[0].mxu0
      %v517 = vpop.f32.mrb[0].mxu0
      %v518 = vadd.f32 %v345, %v517
      %v519 = vpop.f32.mrb[0].mxu0
      %520 = vmatprep.mubr.bf16.mxu0 0
      %521 = vmatmul.mubr.bf16.gmra.mrb[0].mxu0 %v441
      %v522 = vpop.f32.mrb[0].mxu0
      %v523 = vadd.f32 %v350, %v522
      %v524 = vpop.f32.mrb[0].mxu0
      %v525 = vpop.f32.mrb[0].mxu0
      %v526 = vadd.f32 %v355, %v525
      %v527 = vpop.f32.mrb[0].mxu0
      %528 = vmatprep.mubr.bf16.mxu0 0
      %529 = vmatmul.mubr.bf16.gmra.mrb[0].mxu0 %v444
      %v530 = vpop.f32.mrb[0].mxu0
      %v531 = vadd.f32 %v360, %v530
      %v532 = vpop.f32.mrb[0].mxu0
      %v533 = vpop.f32.mrb[0].mxu0
      %v534 = vadd.f32 %v365, %v533
      %v535 = vpop.f32.mrb[0].mxu0
      %536 = vmatprep.mubr.bf16.mxu0 0
      %537 = vmatmul.mubr.bf16.gmra.mrb[0].mxu0 %v447
      %v538 = vpop.f32.mrb[0].mxu0
      %v539 = vadd.f32 %v370, %v538
      %v540 = vpop.f32.mrb[0].mxu0
      %v541 = vpop.f32.mrb[0].mxu0
      %v542 = vadd.f32 %v375, %v541
      %v543 = vpop.f32.mrb[0].mxu0
      %544 = vmatprep.mubr.bf16.mxu0 0
      %545 = vmatmul.mubr.bf16.gmra.mrb[0].mxu0 %v450
      %v546 = vpop.f32.mrb[0].mxu0
      %v547 = vadd.f32 %v380, %v546
      %v548 = vpop.f32.mrb[0].mxu0
      %v549 = vpop.f32.mrb[0].mxu0
      %v550 = vadd.f32 %v385, %v549
      %v551 = vpop.f32.mrb[0].mxu0
      %552 = vdwg.mxu0
      %v553 = vmax.f32 %v491, 0.0
      %v554 = vmax.f32 %v494, 0.0
      %v555 = vmax.f32 %v499, 0.0
      %v556 = vmax.f32 %v502, 0.0
      %v557 = vmax.f32 %v507, 0.0
      %v558 = vmax.f32 %v510, 0.0
      %v559 = vmax.f32 %v515, 0.0
      %v560 = vmax.f32 %v518, 0.0
      %v561 = vmax.f32 %v523, 0.0
      %v562 = vmax.f32 %v526, 0.0
      %v563 = vmax.f32 %v531, 0.0
      %v564 = vmax.f32 %v534, 0.0
      %v565 = vmax.f32 %v539, 0.0
      %v566 = vmax.f32 %v542, 0.0
      %v567 = vmax.f32 %v547, 0.0
      %v568 = vmax.f32 %v550, 0.0
      %v569 = vpack.c.bf16 %v554, %v553
      %v570 = vpack.c.bf16 %v556, %v555
      %v571 = vpack.c.bf16 %v558, %v557
      %v572 = vpack.c.bf16 %v560, %v559
      %v573 = vpack.c.bf16 %v562, %v561
      %v574 = vpack.c.bf16 %v564, %v563
      %v575 = vpack.c.bf16 %v566, %v565
      %v576 = vpack.c.bf16 %v568, %v567
      %578 = vset.pattern.permute.xlu0 0
      %579 = vperm.xlu0 %578, %v287
      %v580 = vpop.permute.xlu0 %579
      %583 = vset.pattern.permute.xlu0 0
      %584 = vperm.xlu0 %583, %v288
      %v585 = vpop.permute.xlu0 %584
      %588 = vset.pattern.permute.xlu0 0
      %589 = vperm.xlu0 %588, %v289
      %v590 = vpop.permute.xlu0 %589
      %593 = vset.pattern.permute.xlu0 0
      %594 = vperm.xlu0 %593, %v290
      %v595 = vpop.permute.xlu0 %594
      %598 = vset.pattern.permute.xlu0 0
      %599 = vperm.xlu0 %598, %v291
      %v600 = vpop.permute.xlu0 %599
      %603 = vset.pattern.permute.xlu0 0
      %604 = vperm.xlu0 %603, %v292
      %v605 = vpop.permute.xlu0 %604
      %608 = vset.pattern.permute.xlu0 0
      %609 = vperm.xlu0 %608, %v293
      %v610 = vpop.permute.xlu0 %609
      %613 = vset.pattern.permute.xlu0 0
      %614 = vperm.xlu0 %613, %v294
      %v615 = vpop.permute.xlu0 %614
      %618 = vset.pattern.permute.xlu0 0
      %619 = vperm.xlu0 %618, %v295
      %v620 = vpop.permute.xlu0 %619
      %623 = vset.pattern.permute.xlu0 0
      %624 = vperm.xlu0 %623, %v296
      %v625 = vpop.permute.xlu0 %624
      %628 = vset.pattern.permute.xlu0 0
      %629 = vperm.xlu0 %628, %v297
      %v630 = vpop.permute.xlu0 %629
      %633 = vset.pattern.permute.xlu0 0
      %634 = vperm.xlu0 %633, %v298
      %v635 = vpop.permute.xlu0 %634
      %638 = vset.pattern.permute.xlu0 0
      %639 = vperm.xlu0 %638, %v299
      %v640 = vpop.permute.xlu0 %639
      %643 = vset.pattern.permute.xlu0 0
      %644 = vperm.xlu0 %643, %v300
      %v645 = vpop.permute.xlu0 %644
      %648 = vset.pattern.permute.xlu0 0
      %649 = vperm.xlu0 %648, %v301
      %v650 = vpop.permute.xlu0 %649
      %653 = vset.pattern.permute.xlu0 0
      %654 = vperm.xlu0 %653, %v302
      %v655 = vpop.permute.xlu0 %654
      %v673 = vunpack.c.l.b16 %v254
      %v674 = vunpack.c.l.b16 %v255
      %v675 = vunpack.c.l.b16 %v256
      %v676 = vunpack.c.l.b16 %v257
      %v677 = vunpack.c.l.b16 %v258
      %v678 = vunpack.c.l.b16 %v259
      %v679 = vunpack.c.l.b16 %v260
      %v680 = vunpack.c.l.b16 %v261
      %v681 = vunpack.c.l.b16 %v262
      %v682 = vunpack.c.l.b16 %v263
      %v683 = vunpack.c.l.b16 %v264
      %v684 = vunpack.c.l.b16 %v265
      %v685 = vunpack.c.l.b16 %v266
      %v686 = vunpack.c.l.b16 %v267
      %v687 = vunpack.c.l.b16 %v268
      %v688 = vunpack.c.l.b16 %v269
      %v689 = vpack.c.b16 %v674, %v673
      %v690 = vpack.c.b16 %v676, %v675
      %v691 = vpack.c.b16 %v678, %v677
      %v692 = vpack.c.b16 %v680, %v679
      %v693 = vpack.c.b16 %v682, %v681
      %v694 = vpack.c.b16 %v684, %v683
      %v695 = vpack.c.b16 %v686, %v685
      %v696 = vpack.c.b16 %v688, %v687
      %705 = vmatprep.subr.bf16.mxu0 0
      %706 = vmatpush1.bf16.msra.mxu0 %v569
      %707 = vmatprep.subr.bf16.mxu0 0
      %708 = vmatpush1.bf16.msra.mxu0 %v570
      %709 = vmatprep.subr.bf16.mxu0 0
      %710 = vmatpush1.bf16.msra.mxu0 %v571
      %711 = vmatprep.subr.bf16.mxu0 0
      %712 = vmatpush1.bf16.msra.mxu0 %v572
      %713 = vmatprep.subr.bf16.mxu0 0
      %714 = vmatpush1.bf16.msra.mxu0 %v573
      %715 = vmatprep.subr.bf16.mxu0 0
      %716 = vmatpush1.bf16.msra.mxu0 %v574
      %717 = vmatprep.subr.bf16.mxu0 0
      %718 = vmatpush1.bf16.msra.mxu0 %v575
      %719 = vmatprep.subr.bf16.mxu0 0
      %720 = vmatpush1.bf16.msra.mxu0 %v576
      %721 = vmatprep.subr.bf16.mxu0 0
      %722 = vmatpush1.bf16.msra.mxu0 0
      %723 = vmatprep.subr.bf16.mxu0 0
      %724 = vmatpush1.bf16.msra.mxu0 0
      %725 = vmatprep.subr.bf16.mxu0 0
      %726 = vmatpush1.bf16.msra.mxu0 0
      %727 = vmatprep.subr.bf16.mxu0 0
      %728 = vmatpush1.bf16.msra.mxu0 0
      %729 = vmatprep.subr.bf16.mxu0 0
      %730 = vmatpush1.bf16.msra.mxu0 0
      %731 = vmatprep.subr.bf16.mxu0 0
      %732 = vmatpush1.bf16.msra.mxu0 0
      %733 = vmatprep.subr.bf16.mxu0 0
      %734 = vmatpush1.bf16.msra.mxu0 0
      %735 = vmatprep.subr.bf16.mxu0 0
      %736 = vmatpush1.bf16.msra.mxu0 0
      %737 = vmatprep.mubr.bf16.mxu0 0
      %738 = vmatmul.mubr.bf16.gmra.mrb[0].mxu0 %v689
      %v739 = vpop.f32.mrb[0].mxu0
      %v740 = vadd.f32 %v580, %v739
      %v741 = vpop.f32.mrb[0].mxu0
      %v742 = vpop.f32.mrb[0].mxu0
      %v743 = vadd.f32 %v585, %v742
      %v744 = vpop.f32.mrb[0].mxu0
      %745 = vmatprep.mubr.bf16.mxu0 0
      %746 = vmatmul.mubr.bf16.gmra.mrb[0].mxu0 %v690
      %v747 = vpop.f32.mrb[0].mxu0
      %v748 = vadd.f32 %v590, %v747
      %v749 = vpop.f32.mrb[0].mxu0
      %v750 = vpop.f32.mrb[0].mxu0
      %v751 = vadd.f32 %v595, %v750
      %v752 = vpop.f32.mrb[0].mxu0
      %753 = vmatprep.mubr.bf16.mxu0 0
      %754 = vmatmul.mubr.bf16.gmra.mrb[0].mxu0 %v691
      %v755 = vpop.f32.mrb[0].mxu0
      %v756 = vadd.f32 %v600, %v755
      %v757 = vpop.f32.mrb[0].mxu0
      %v758 = vpop.f32.mrb[0].mxu0
      %v759 = vadd.f32 %v605, %v758
      %v760 = vpop.f32.mrb[0].mxu0
      %761 = vmatprep.mubr.bf16.mxu0 0
      %762 = vmatmul.mubr.bf16.gmra.mrb[0].mxu0 %v692
      %v763 = vpop.f32.mrb[0].mxu0
      %v764 = vadd.f32 %v610, %v763
      %v765 = vpop.f32.mrb[0].mxu0
      %v766 = vpop.f32.mrb[0].mxu0
      %v767 = vadd.f32 %v615, %v766
      %v768 = vpop.f32.mrb[0].mxu0
      %769 = vmatprep.mubr.bf16.mxu0 0
      %770 = vmatmul.mubr.bf16.gmra.mrb[0].mxu0 %v693
      %v771 = vpop.f32.mrb[0].mxu0
      %v772 = vadd.f32 %v620, %v771
      %v773 = vpop.f32.mrb[0].mxu0
      %v774 = vpop.f32.mrb[0].mxu0
      %v775 = vadd.f32 %v625, %v774
      %v776 = vpop.f32.mrb[0].mxu0
      %777 = vmatprep.mubr.bf16.mxu0 0
      %778 = vmatmul.mubr.bf16.gmra.mrb[0].mxu0 %v694
      %v779 = vpop.f32.mrb[0].mxu0
      %v780 = vadd.f32 %v630, %v779
      %v781 = vpop.f32.mrb[0].mxu0
      %v782 = vpop.f32.mrb[0].mxu0
      %v783 = vadd.f32 %v635, %v782
      %v784 = vpop.f32.mrb[0].mxu0
      %785 = vmatprep.mubr.bf16.mxu0 0
      %786 = vmatmul.mubr.bf16.gmra.mrb[0].mxu0 %v695
      %v787 = vpop.f32.mrb[0].mxu0
      %v788 = vadd.f32 %v640, %v787
      %v789 = vpop.f32.mrb[0].mxu0
      %v790 = vpop.f32.mrb[0].mxu0
      %v791 = vadd.f32 %v645, %v790
      %v792 = vpop.f32.mrb[0].mxu0
      %793 = vmatprep.mubr.bf16.mxu0 0
      %794 = vmatmul.mubr.bf16.gmra.mrb[0].mxu0 %v696
      %v795 = vpop.f32.mrb[0].mxu0
      %v796 = vadd.f32 %v650, %v795
      %v797 = vpop.f32.mrb[0].mxu0
      %v798 = vpop.f32.mrb[0].mxu0
      %v799 = vadd.f32 %v655, %v798
      %v800 = vpop.f32.mrb[0].mxu0
      %801 = vdwg.mxu0
      %v802 = vmax.f32 %v740, 0.0
      %v803 = vmax.f32 %v743, 0.0
      %v804 = vmax.f32 %v748, 0.0
      %v805 = vmax.f32 %v751, 0.0
      %v806 = vmax.f32 %v756, 0.0
      %v807 = vmax.f32 %v759, 0.0
      %v808 = vmax.f32 %v764, 0.0
      %v809 = vmax.f32 %v767, 0.0
      %v810 = vmax.f32 %v772, 0.0
      %v811 = vmax.f32 %v775, 0.0
      %v812 = vmax.f32 %v780, 0.0
      %v813 = vmax.f32 %v783, 0.0
      %v814 = vmax.f32 %v788, 0.0
      %v815 = vmax.f32 %v791, 0.0
      %v816 = vmax.f32 %v796, 0.0
      %v817 = vmax.f32 %v799, 0.0
      %vm818 = vcmask 130048
      %v819 = vsel %vm818, %v802, -inf
      %820 = vmax.xlane.f32.xlu0 %v819
      %v821 = vpop.xlane.xlu0 %820
      %v822 = vsel %vm818, %v803, -inf
      %823 = vmax.xlane.f32.xlu0 %v822
      %v824 = vpop.xlane.xlu0 %823
      %v825 = vsel %vm818, %v804, -inf
      %826 = vmax.xlane.f32.xlu0 %v825
      %v827 = vpop.xlane.xlu0 %826
      %v828 = vsel %vm818, %v805, -inf
      %829 = vmax.xlane.f32.xlu0 %v828
      %v830 = vpop.xlane.xlu0 %829
      %v831 = vsel %vm818, %v806, -inf
      %832 = vmax.xlane.f32.xlu0 %v831
      %v833 = vpop.xlane.xlu0 %832
      %v834 = vsel %vm818, %v807, -inf
      %835 = vmax.xlane.f32.xlu0 %v834
      %v836 = vpop.xlane.xlu0 %835
      %v837 = vsel %vm818, %v808, -inf
      %838 = vmax.xlane.f32.xlu0 %v837
      %v839 = vpop.xlane.xlu0 %838
      %v840 = vsel %vm818, %v809, -inf
      %841 = vmax.xlane.f32.xlu0 %v840
      %v842 = vpop.xlane.xlu0 %841
      %v843 = vsel %vm818, %v810, -inf
      %844 = vmax.xlane.f32.xlu0 %v843
      %v845 = vpop.xlane.xlu0 %844
      %v846 = vsel %vm818, %v811, -inf
      %847 = vmax.xlane.f32.xlu0 %v846
      %v848 = vpop.xlane.xlu0 %847
      %v849 = vsel %vm818, %v812, -inf
      %850 = vmax.xlane.f32.xlu0 %v849
      %v851 = vpop.xlane.xlu0 %850
      %v852 = vsel %vm818, %v813, -inf
      %853 = vmax.xlane.f32.xlu0 %v852
      %v854 = vpop.xlane.xlu0 %853
      %v855 = vsel %vm818, %v814, -inf
      %856 = vmax.xlane.f32.xlu0 %v855
      %v857 = vpop.xlane.xlu0 %856
      %v858 = vsel %vm818, %v815, -inf
      %859 = vmax.xlane.f32.xlu0 %v858
      %v860 = vpop.xlane.xlu0 %859
      %v861 = vsel %vm818, %v816, -inf
      %862 = vmax.xlane.f32.xlu0 %v861
      %v863 = vpop.xlane.xlu0 %862
      %v864 = vsel %vm818, %v817, -inf
      %865 = vmax.xlane.f32.xlu0 %v864
      %v866 = vpop.xlane.xlu0 %865
      %v867 = vld [vmem:[#allocation2] sm:$0xff]
      %v868 = vld [vmem:[#allocation2 + $0x8] sm:$0xff]
      %v869 = vld [vmem:[#allocation2 + $0x10] sm:$0xff]
      %v870 = vld [vmem:[#allocation2 + $0x18] sm:$0xff]
      %v871 = vld [vmem:[#allocation2 + $0x20] sm:$0xff]
      %v872 = vld [vmem:[#allocation2 + $0x28] sm:$0xff]
      %v873 = vld [vmem:[#allocation2 + $0x30] sm:$0xff]
      %v874 = vld [vmem:[#allocation2 + $0x38] sm:$0xff]
      %v875 = vld [vmem:[#allocation2 + $0x40] sm:$0xff]
      %v876 = vld [vmem:[#allocation2 + $0x48] sm:$0xff]
      %v877 = vld [vmem:[#allocation2 + $0x50] sm:$0xff]
      %v878 = vld [vmem:[#allocation2 + $0x58] sm:$0xff]
      %v879 = vld [vmem:[#allocation2 + $0x60] sm:$0xff]
      %v880 = vld [vmem:[#allocation2 + $0x68] sm:$0xff]
      %v881 = vld [vmem:[#allocation2 + $0x70] sm:$0xff]
      %v882 = vld [vmem:[#allocation2 + $0x78] sm:$0xff]
      %v883 = vmax.f32 %v867, %v821
      %v884 = vmax.f32 %v868, %v824
      %v885 = vmax.f32 %v869, %v827
      %v886 = vmax.f32 %v870, %v830
      %v887 = vmax.f32 %v871, %v833
      %v888 = vmax.f32 %v872, %v836
      %v889 = vmax.f32 %v873, %v839
      %v890 = vmax.f32 %v874, %v842
      %v891 = vmax.f32 %v875, %v845
      %v892 = vmax.f32 %v876, %v848
      %v893 = vmax.f32 %v877, %v851
      %v894 = vmax.f32 %v878, %v854
      %v895 = vmax.f32 %v879, %v857
      %v896 = vmax.f32 %v880, %v860
      %v897 = vmax.f32 %v881, %v863
      %v898 = vmax.f32 %v882, %v866
      %vm899 = vcmask 7168
      %900 = vst.msk [vmem:[#allocation2] sm:$0xff] %vm899, %v883
      %901 = vst.msk [vmem:[#allocation2 + $0x8] sm:$0xff] %vm899, %v884
      %902 = vst.msk [vmem:[#allocation2 + $0x10] sm:$0xff] %vm899, %v885
      %903 = vst.msk [vmem:[#allocation2 + $0x18] sm:$0xff] %vm899, %v886
      %904 = vst.msk [vmem:[#allocation2 + $0x20] sm:$0xff] %vm899, %v887
      %905 = vst.msk [vmem:[#allocation2 + $0x28] sm:$0xff] %vm899, %v888
      %906 = vst.msk [vmem:[#allocation2 + $0x30] sm:$0xff] %vm899, %v889
      %907 = vst.msk [vmem:[#allocation2 + $0x38] sm:$0xff] %vm899, %v890
      %908 = vst.msk [vmem:[#allocation2 + $0x40] sm:$0xff] %vm899, %v891
      %909 = vst.msk [vmem:[#allocation2 + $0x48] sm:$0xff] %vm899, %v892
      %910 = vst.msk [vmem:[#allocation2 + $0x50] sm:$0xff] %vm899, %v893
      %911 = vst.msk [vmem:[#allocation2 + $0x58] sm:$0xff] %vm899, %v894
      %912 = vst.msk [vmem:[#allocation2 + $0x60] sm:$0xff] %vm899, %v895
      %913 = vst.msk [vmem:[#allocation2 + $0x68] sm:$0xff] %vm899, %v896
      %914 = vst.msk [vmem:[#allocation2 + $0x70] sm:$0xff] %vm899, %v897
      %915 = vst.msk [vmem:[#allocation2 + $0x78] sm:$0xff] %vm899, %v898
      // Predicated region
      $region41: #{pointnet_forward.2} parent=35 // pred_check
        %p916 = pneg %p217
      $region42: #{pointnet_forward.2} parent=35 // pred_check_branch
        %918 = sbr.rel (%p916) target = $region44
      $region43: #{pointnet_forward.2} parent=35 // pred_region
        %v919 = vld [vmem:[#allocation2] sm:$0xff]
        %v920 = vld [vmem:[#allocation2 + $0x8] sm:$0xff]
        %v921 = vld [vmem:[#allocation2 + $0x10] sm:$0xff]
        %v922 = vld [vmem:[#allocation2 + $0x18] sm:$0xff]
        %v923 = vld [vmem:[#allocation2 + $0x20] sm:$0xff]
        %v924 = vld [vmem:[#allocation2 + $0x28] sm:$0xff]
        %v925 = vld [vmem:[#allocation2 + $0x30] sm:$0xff]
        %v926 = vld [vmem:[#allocation2 + $0x38] sm:$0xff]
        %v927 = vld [vmem:[#allocation2 + $0x40] sm:$0xff]
        %v928 = vld [vmem:[#allocation2 + $0x48] sm:$0xff]
        %v929 = vld [vmem:[#allocation2 + $0x50] sm:$0xff]
        %v930 = vld [vmem:[#allocation2 + $0x58] sm:$0xff]
        %v931 = vld [vmem:[#allocation2 + $0x60] sm:$0xff]
        %v932 = vld [vmem:[#allocation2 + $0x68] sm:$0xff]
        %v933 = vld [vmem:[#allocation2 + $0x70] sm:$0xff]
        %v934 = vld [vmem:[#allocation2 + $0x78] sm:$0xff]
        %v935 = vpack.c.bf16 %v920, %v919
        %v936 = vpack.c.bf16 %v922, %v921
        %v937 = vpack.c.bf16 %v924, %v923
        %v938 = vpack.c.bf16 %v926, %v925
        %v939 = vpack.c.bf16 %v928, %v927
        %v940 = vpack.c.bf16 %v930, %v929
        %v941 = vpack.c.bf16 %v932, %v931
        %v942 = vpack.c.bf16 %v934, %v933
        %s943 = scalar_lea.vmem %s2, 64
        %v944 = vld [vmem:[%s943] sm:$0xf]
        %v945 = vld [vmem:[%s943 + $0x4] sm:$0xf]
        %v946 = vld [vmem:[%s943 + $0x8] sm:$0xf]
        %v947 = vld [vmem:[%s943 + $0xc] sm:$0xf]
        %v948 = vld [vmem:[%s943 + $0x10] sm:$0xf]
        %v949 = vld [vmem:[%s943 + $0x14] sm:$0xf]
        %v950 = vld [vmem:[%s943 + $0x18] sm:$0xf]
        %v951 = vld [vmem:[%s943 + $0x1c] sm:$0xf]
        %v952 = vld [vmem:[%s943 + $0x20] sm:$0xf]
        %v953 = vld [vmem:[%s943 + $0x24] sm:$0xf]
        %v954 = vld [vmem:[%s943 + $0x28] sm:$0xf]
        %v955 = vld [vmem:[%s943 + $0x2c] sm:$0xf]
        %v956 = vld [vmem:[%s943 + $0x30] sm:$0xf]
        %v957 = vld [vmem:[%s943 + $0x34] sm:$0xf]
        %v958 = vld [vmem:[%s943 + $0x38] sm:$0xf]
        %v959 = vld [vmem:[%s943 + $0x3c] sm:$0xf]
        %s960 = scalar_lea.vmem %s3, 256
        %v961 = vld [vmem:[%s960] sm:$0xff]
        %v962 = vld [vmem:[%s960 + $0x8] sm:$0xff]
        %v963 = vld [vmem:[%s960 + $0x10] sm:$0xff]
        %v964 = vld [vmem:[%s960 + $0x18] sm:$0xff]
        %v965 = vld [vmem:[%s960 + $0x20] sm:$0xff]
        %v966 = vld [vmem:[%s960 + $0x28] sm:$0xff]
        %v967 = vld [vmem:[%s960 + $0x30] sm:$0xff]
        %v968 = vld [vmem:[%s960 + $0x38] sm:$0xff]
        %v969 = vld [vmem:[%s960 + $0x40] sm:$0xff]
        %v970 = vld [vmem:[%s960 + $0x48] sm:$0xff]
        %v971 = vld [vmem:[%s960 + $0x50] sm:$0xff]
        %v972 = vld [vmem:[%s960 + $0x58] sm:$0xff]
        %v973 = vld [vmem:[%s960 + $0x60] sm:$0xff]
        %v974 = vld [vmem:[%s960 + $0x68] sm:$0xff]
        %v975 = vld [vmem:[%s960 + $0x70] sm:$0xff]
        %v976 = vld [vmem:[%s960 + $0x78] sm:$0xff]
        %v993 = vunpack.c.l.b16 %v944
        %v994 = vunpack.c.l.b16 %v945
        %v995 = vunpack.c.l.b16 %v946
        %v996 = vunpack.c.l.b16 %v947
        %v997 = vunpack.c.l.b16 %v948
        %v998 = vunpack.c.l.b16 %v949
        %v999 = vunpack.c.l.b16 %v950
        %v1000 = vunpack.c.l.b16 %v951
        %v1001 = vunpack.c.l.b16 %v952
        %v1002 = vunpack.c.l.b16 %v953
        %v1003 = vunpack.c.l.b16 %v954
        %v1004 = vunpack.c.l.b16 %v955
        %v1005 = vunpack.c.l.b16 %v956
        %v1006 = vunpack.c.l.b16 %v957
        %v1007 = vunpack.c.l.b16 %v958
        %v1008 = vunpack.c.l.b16 %v959
        %v1009 = vpack.c.b16 %v994, %v993
        %v1010 = vpack.c.b16 %v996, %v995
        %v1011 = vpack.c.b16 %v998, %v997
        %v1012 = vpack.c.b16 %v1000, %v999
        %v1013 = vpack.c.b16 %v1002, %v1001
        %v1014 = vpack.c.b16 %v1004, %v1003
        %v1015 = vpack.c.b16 %v1006, %v1005
        %v1016 = vpack.c.b16 %v1008, %v1007
        %1025 = vmatprep.subr.bf16.mxu0 0
        %1026 = vmatpush1.bf16.msra.mxu0 %v935
        %1027 = vmatprep.subr.bf16.mxu0 0
        %1028 = vmatpush1.bf16.msra.mxu0 %v936
        %1029 = vmatprep.subr.bf16.mxu0 0
        %1030 = vmatpush1.bf16.msra.mxu0 %v937
        %1031 = vmatprep.subr.bf16.mxu0 0
        %1032 = vmatpush1.bf16.msra.mxu0 %v938
        %1033 = vmatprep.subr.bf16.mxu0 0
        %1034 = vmatpush1.bf16.msra.mxu0 %v939
        %1035 = vmatprep.subr.bf16.mxu0 0
        %1036 = vmatpush1.bf16.msra.mxu0 %v940
        %1037 = vmatprep.subr.bf16.mxu0 0
        %1038 = vmatpush1.bf16.msra.mxu0 %v941
        %1039 = vmatprep.subr.bf16.mxu0 0
        %1040 = vmatpush1.bf16.msra.mxu0 %v942
        %1041 = vmatprep.subr.bf16.mxu0 0
        %1042 = vmatpush1.bf16.msra.mxu0 0
        %1043 = vmatprep.subr.bf16.mxu0 0
        %1044 = vmatpush1.bf16.msra.mxu0 0
        %1045 = vmatprep.subr.bf16.mxu0 0
        %1046 = vmatpush1.bf16.msra.mxu0 0
        %1047 = vmatprep.subr.bf16.mxu0 0
        %1048 = vmatpush1.bf16.msra.mxu0 0
        %1049 = vmatprep.subr.bf16.mxu0 0
        %1050 = vmatpush1.bf16.msra.mxu0 0
        %1051 = vmatprep.subr.bf16.mxu0 0
        %1052 = vmatpush1.bf16.msra.mxu0 0
        %1053 = vmatprep.subr.bf16.mxu0 0
        %1054 = vmatpush1.bf16.msra.mxu0 0
        %1055 = vmatprep.subr.bf16.mxu0 0
        %1056 = vmatpush1.bf16.msra.mxu0 0
        %1057 = vmatprep.mubr.bf16.mxu0 0
        %1058 = vmatmul.mubr.bf16.gmra.mrb[0].mxu0 %v1009
        %v1059 = vpop.f32.mrb[0].mxu0
        %v1060 = vadd.f32 %v961, %v1059
        %v1061 = vpop.f32.mrb[0].mxu0
        %v1062 = vpop.f32.mrb[0].mxu0
        %v1063 = vadd.f32 %v962, %v1062
        %v1064 = vpop.f32.mrb[0].mxu0
        %1065 = vmatprep.mubr.bf16.mxu0 0
        %1066 = vmatmul.mubr.bf16.gmra.mrb[0].mxu0 %v1010
        %v1067 = vpop.f32.mrb[0].mxu0
        %v1068 = vadd.f32 %v963, %v1067
        %v1069 = vpop.f32.mrb[0].mxu0
        %v1070 = vpop.f32.mrb[0].mxu0
        %v1071 = vadd.f32 %v964, %v1070
        %v1072 = vpop.f32.mrb[0].mxu0
        %1073 = vmatprep.mubr.bf16.mxu0 0
        %1074 = vmatmul.mubr.bf16.gmra.mrb[0].mxu0 %v1011
        %v1075 = vpop.f32.mrb[0].mxu0
        %v1076 = vadd.f32 %v965, %v1075
        %v1077 = vpop.f32.mrb[0].mxu0
        %v1078 = vpop.f32.mrb[0].mxu0
        %v1079 = vadd.f32 %v966, %v1078
        %v1080 = vpop.f32.mrb[0].mxu0
        %1081 = vmatprep.mubr.bf16.mxu0 0
        %1082 = vmatmul.mubr.bf16.gmra.mrb[0].mxu0 %v1012
        %v1083 = vpop.f32.mrb[0].mxu0
        %v1084 = vadd.f32 %v967, %v1083
        %v1085 = vpop.f32.mrb[0].mxu0
        %v1086 = vpop.f32.mrb[0].mxu0
        %v1087 = vadd.f32 %v968, %v1086
        %v1088 = vpop.f32.mrb[0].mxu0
        %1089 = vmatprep.mubr.bf16.mxu0 0
        %1090 = vmatmul.mubr.bf16.gmra.mrb[0].mxu0 %v1013
        %v1091 = vpop.f32.mrb[0].mxu0
        %v1092 = vadd.f32 %v969, %v1091
        %v1093 = vpop.f32.mrb[0].mxu0
        %v1094 = vpop.f32.mrb[0].mxu0
        %v1095 = vadd.f32 %v970, %v1094
        %v1096 = vpop.f32.mrb[0].mxu0
        %1097 = vmatprep.mubr.bf16.mxu0 0
        %1098 = vmatmul.mubr.bf16.gmra.mrb[0].mxu0 %v1014
        %v1099 = vpop.f32.mrb[0].mxu0
        %v1100 = vadd.f32 %v971, %v1099
        %v1101 = vpop.f32.mrb[0].mxu0
        %v1102 = vpop.f32.mrb[0].mxu0
        %v1103 = vadd.f32 %v972, %v1102
        %v1104 = vpop.f32.mrb[0].mxu0
        %1105 = vmatprep.mubr.bf16.mxu0 0
        %1106 = vmatmul.mubr.bf16.gmra.mrb[0].mxu0 %v1015
        %v1107 = vpop.f32.mrb[0].mxu0
        %v1108 = vadd.f32 %v973, %v1107
        %v1109 = vpop.f32.mrb[0].mxu0
        %v1110 = vpop.f32.mrb[0].mxu0
        %v1111 = vadd.f32 %v974, %v1110
        %v1112 = vpop.f32.mrb[0].mxu0
        %1113 = vmatprep.mubr.bf16.mxu0 0
        %1114 = vmatmul.mubr.bf16.gmra.mrb[0].mxu0 %v1016
        %v1115 = vpop.f32.mrb[0].mxu0
        %v1116 = vadd.f32 %v975, %v1115
        %v1117 = vpop.f32.mrb[0].mxu0
        %v1118 = vpop.f32.mrb[0].mxu0
        %v1119 = vadd.f32 %v976, %v1118
        %v1120 = vpop.f32.mrb[0].mxu0
        %1121 = vdwg.mxu0
        %v1122 = vmax.f32 %v1060, 0.0
        %v1123 = vmax.f32 %v1063, 0.0
        %v1124 = vmax.f32 %v1068, 0.0
        %v1125 = vmax.f32 %v1071, 0.0
        %v1126 = vmax.f32 %v1076, 0.0
        %v1127 = vmax.f32 %v1079, 0.0
        %v1128 = vmax.f32 %v1084, 0.0
        %v1129 = vmax.f32 %v1087, 0.0
        %v1130 = vmax.f32 %v1092, 0.0
        %v1131 = vmax.f32 %v1095, 0.0
        %v1132 = vmax.f32 %v1100, 0.0
        %v1133 = vmax.f32 %v1103, 0.0
        %v1134 = vmax.f32 %v1108, 0.0
        %v1135 = vmax.f32 %v1111, 0.0
        %v1136 = vmax.f32 %v1116, 0.0
        %v1137 = vmax.f32 %v1119, 0.0
        %s1138 = scalar_lea.vmem %s2, 128
        %v1139 = vld [vmem:[%s1138] sm:$0xf]
        %v1140 = vld [vmem:[%s1138 + $0x4] sm:$0xf]
        %v1141 = vld [vmem:[%s1138 + $0x8] sm:$0xf]
        %v1142 = vld [vmem:[%s1138 + $0xc] sm:$0xf]
        %v1143 = vld [vmem:[%s1138 + $0x10] sm:$0xf]
        %v1144 = vld [vmem:[%s1138 + $0x14] sm:$0xf]
        %v1145 = vld [vmem:[%s1138 + $0x18] sm:$0xf]
        %v1146 = vld [vmem:[%s1138 + $0x1c] sm:$0xf]
        %v1147 = vld [vmem:[%s1138 + $0x20] sm:$0xf]
        %v1148 = vld [vmem:[%s1138 + $0x24] sm:$0xf]
        %v1149 = vld [vmem:[%s1138 + $0x28] sm:$0xf]
        %v1150 = vld [vmem:[%s1138 + $0x2c] sm:$0xf]
        %v1151 = vld [vmem:[%s1138 + $0x30] sm:$0xf]
        %v1152 = vld [vmem:[%s1138 + $0x34] sm:$0xf]
        %v1153 = vld [vmem:[%s1138 + $0x38] sm:$0xf]
        %v1154 = vld [vmem:[%s1138 + $0x3c] sm:$0xf]
        %v1155 = vpack.c.bf16 %v1123, %v1122
        %v1156 = vpack.c.bf16 %v1125, %v1124
        %v1157 = vpack.c.bf16 %v1127, %v1126
        %v1158 = vpack.c.bf16 %v1129, %v1128
        %v1159 = vpack.c.bf16 %v1131, %v1130
        %v1160 = vpack.c.bf16 %v1133, %v1132
        %v1161 = vpack.c.bf16 %v1135, %v1134
        %v1162 = vpack.c.bf16 %v1137, %v1136
        %s1163 = scalar_lea.vmem %s3, 384
        %v1164 = vld [vmem:[%s1163] sm:$0xff]
        %v1165 = vld [vmem:[%s1163 + $0x8] sm:$0xff]
        %v1166 = vld [vmem:[%s1163 + $0x10] sm:$0xff]
        %v1167 = vld [vmem:[%s1163 + $0x18] sm:$0xff]
        %v1168 = vld [vmem:[%s1163 + $0x20] sm:$0xff]
        %v1169 = vld [vmem:[%s1163 + $0x28] sm:$0xff]
        %v1170 = vld [vmem:[%s1163 + $0x30] sm:$0xff]
        %v1171 = vld [vmem:[%s1163 + $0x38] sm:$0xff]
        %v1172 = vld [vmem:[%s1163 + $0x40] sm:$0xff]
        %v1173 = vld [vmem:[%s1163 + $0x48] sm:$0xff]
        %v1174 = vld [vmem:[%s1163 + $0x50] sm:$0xff]
        %v1175 = vld [vmem:[%s1163 + $0x58] sm:$0xff]
        %v1176 = vld [vmem:[%s1163 + $0x60] sm:$0xff]
        %v1177 = vld [vmem:[%s1163 + $0x68] sm:$0xff]
        %v1178 = vld [vmem:[%s1163 + $0x70] sm:$0xff]
        %v1179 = vld [vmem:[%s1163 + $0x78] sm:$0xff]
        %v1196 = vunpack.c.l.b16 %v1139
        %v1197 = vunpack.c.l.b16 %v1140
        %v1198 = vunpack.c.l.b16 %v1141
        %v1199 = vunpack.c.l.b16 %v1142
        %v1200 = vunpack.c.l.b16 %v1143
        %v1201 = vunpack.c.l.b16 %v1144
        %v1202 = vunpack.c.l.b16 %v1145
        %v1203 = vunpack.c.l.b16 %v1146
        %v1204 = vunpack.c.l.b16 %v1147
        %v1205 = vunpack.c.l.b16 %v1148
        %v1206 = vunpack.c.l.b16 %v1149
        %v1207 = vunpack.c.l.b16 %v1150
        %v1208 = vunpack.c.l.b16 %v1151
        %v1209 = vunpack.c.l.b16 %v1152
        %v1210 = vunpack.c.l.b16 %v1153
        %v1211 = vunpack.c.l.b16 %v1154
        %v1212 = vpack.c.b16 %v1197, %v1196
        %v1213 = vpack.c.b16 %v1199, %v1198
        %v1214 = vpack.c.b16 %v1201, %v1200
        %v1215 = vpack.c.b16 %v1203, %v1202
        %v1216 = vpack.c.b16 %v1205, %v1204
        %v1217 = vpack.c.b16 %v1207, %v1206
        %v1218 = vpack.c.b16 %v1209, %v1208
        %v1219 = vpack.c.b16 %v1211, %v1210
        %1228 = vmatprep.subr.bf16.mxu0 0
        %1229 = vmatpush1.bf16.msra.mxu0 %v1155
        %1230 = vmatprep.subr.bf16.mxu0 0
        %1231 = vmatpush1.bf16.msra.mxu0 %v1156
        %1232 = vmatprep.subr.bf16.mxu0 0
        %1233 = vmatpush1.bf16.msra.mxu0 %v1157
        %1234 = vmatprep.subr.bf16.mxu0 0
        %1235 = vmatpush1.bf16.msra.mxu0 %v1158
        %1236 = vmatprep.subr.bf16.mxu0 0
        %1237 = vmatpush1.bf16.msra.mxu0 %v1159
        %1238 = vmatprep.subr.bf16.mxu0 0
        %1239 = vmatpush1.bf16.msra.mxu0 %v1160
        %1240 = vmatprep.subr.bf16.mxu0 0
        %1241 = vmatpush1.bf16.msra.mxu0 %v1161
        %1242 = vmatprep.subr.bf16.mxu0 0
        %1243 = vmatpush1.bf16.msra.mxu0 %v1162
        %1244 = vmatprep.subr.bf16.mxu0 0
        %1245 = vmatpush1.bf16.msra.mxu0 0
        %1246 = vmatprep.subr.bf16.mxu0 0
        %1247 = vmatpush1.bf16.msra.mxu0 0
        %1248 = vmatprep.subr.bf16.mxu0 0
        %1249 = vmatpush1.bf16.msra.mxu0 0
        %1250 = vmatprep.subr.bf16.mxu0 0
        %1251 = vmatpush1.bf16.msra.mxu0 0
        %1252 = vmatprep.subr.bf16.mxu0 0
        %1253 = vmatpush1.bf16.msra.mxu0 0
        %1254 = vmatprep.subr.bf16.mxu0 0
        %1255 = vmatpush1.bf16.msra.mxu0 0
        %1256 = vmatprep.subr.bf16.mxu0 0
        %1257 = vmatpush1.bf16.msra.mxu0 0
        %1258 = vmatprep.subr.bf16.mxu0 0
        %1259 = vmatpush1.bf16.msra.mxu0 0
        %1260 = vmatprep.mubr.bf16.mxu0 0
        %1261 = vmatmul.mubr.bf16.gmra.mrb[0].mxu0 %v1212
        %v1262 = vpop.f32.mrb[0].mxu0
        %v1263 = vadd.f32 %v1164, %v1262
        %v1264 = vpop.f32.mrb[0].mxu0
        %v1265 = vpop.f32.mrb[0].mxu0
        %v1266 = vadd.f32 %v1165, %v1265
        %v1267 = vpop.f32.mrb[0].mxu0
        %1268 = vmatprep.mubr.bf16.mxu0 0
        %1269 = vmatmul.mubr.bf16.gmra.mrb[0].mxu0 %v1213
        %v1270 = vpop.f32.mrb[0].mxu0
        %v1271 = vadd.f32 %v1166, %v1270
        %v1272 = vpop.f32.mrb[0].mxu0
        %v1273 = vpop.f32.mrb[0].mxu0
        %v1274 = vadd.f32 %v1167, %v1273
        %v1275 = vpop.f32.mrb[0].mxu0
        %1276 = vmatprep.mubr.bf16.mxu0 0
        %1277 = vmatmul.mubr.bf16.gmra.mrb[0].mxu0 %v1214
        %v1278 = vpop.f32.mrb[0].mxu0
        %v1279 = vadd.f32 %v1168, %v1278
        %v1280 = vpop.f32.mrb[0].mxu0
        %v1281 = vpop.f32.mrb[0].mxu0
        %v1282 = vadd.f32 %v1169, %v1281
        %v1283 = vpop.f32.mrb[0].mxu0
        %1284 = vmatprep.mubr.bf16.mxu0 0
        %1285 = vmatmul.mubr.bf16.gmra.mrb[0].mxu0 %v1215
        %v1286 = vpop.f32.mrb[0].mxu0
        %v1287 = vadd.f32 %v1170, %v1286
        %v1288 = vpop.f32.mrb[0].mxu0
        %v1289 = vpop.f32.mrb[0].mxu0
        %v1290 = vadd.f32 %v1171, %v1289
        %v1291 = vpop.f32.mrb[0].mxu0
        %1292 = vmatprep.mubr.bf16.mxu0 0
        %1293 = vmatmul.mubr.bf16.gmra.mrb[0].mxu0 %v1216
        %v1294 = vpop.f32.mrb[0].mxu0
        %v1295 = vadd.f32 %v1172, %v1294
        %v1296 = vpop.f32.mrb[0].mxu0
        %v1297 = vpop.f32.mrb[0].mxu0
        %v1298 = vadd.f32 %v1173, %v1297
        %v1299 = vpop.f32.mrb[0].mxu0
        %1300 = vmatprep.mubr.bf16.mxu0 0
        %1301 = vmatmul.mubr.bf16.gmra.mrb[0].mxu0 %v1217
        %v1302 = vpop.f32.mrb[0].mxu0
        %v1303 = vadd.f32 %v1174, %v1302
        %v1304 = vpop.f32.mrb[0].mxu0
        %v1305 = vpop.f32.mrb[0].mxu0
        %v1306 = vadd.f32 %v1175, %v1305
        %v1307 = vpop.f32.mrb[0].mxu0
        %1308 = vmatprep.mubr.bf16.mxu0 0
        %1309 = vmatmul.mubr.bf16.gmra.mrb[0].mxu0 %v1218
        %v1310 = vpop.f32.mrb[0].mxu0
        %v1311 = vadd.f32 %v1176, %v1310
        %v1312 = vpop.f32.mrb[0].mxu0
        %v1313 = vpop.f32.mrb[0].mxu0
        %v1314 = vadd.f32 %v1177, %v1313
        %v1315 = vpop.f32.mrb[0].mxu0
        %1316 = vmatprep.mubr.bf16.mxu0 0
        %1317 = vmatmul.mubr.bf16.gmra.mrb[0].mxu0 %v1219
        %v1318 = vpop.f32.mrb[0].mxu0
        %v1319 = vadd.f32 %v1178, %v1318
        %v1320 = vpop.f32.mrb[0].mxu0
        %v1321 = vpop.f32.mrb[0].mxu0
        %v1322 = vadd.f32 %v1179, %v1321
        %v1323 = vpop.f32.mrb[0].mxu0
        %1324 = vdwg.mxu0
        %v1325 = vmax.f32 %v1263, 0.0
        %v1326 = vmax.f32 %v1266, 0.0
        %v1327 = vmax.f32 %v1271, 0.0
        %v1328 = vmax.f32 %v1274, 0.0
        %v1329 = vmax.f32 %v1279, 0.0
        %v1330 = vmax.f32 %v1282, 0.0
        %v1331 = vmax.f32 %v1287, 0.0
        %v1332 = vmax.f32 %v1290, 0.0
        %v1333 = vmax.f32 %v1295, 0.0
        %v1334 = vmax.f32 %v1298, 0.0
        %v1335 = vmax.f32 %v1303, 0.0
        %v1336 = vmax.f32 %v1306, 0.0
        %v1337 = vmax.f32 %v1311, 0.0
        %v1338 = vmax.f32 %v1314, 0.0
        %v1339 = vmax.f32 %v1319, 0.0
        %v1340 = vmax.f32 %v1322, 0.0
        %s1341 = scalar_lea.vmem %s2, 192
        %v1342 = vld [vmem:[%s1341] sm:$0xf]
        %v1343 = vld [vmem:[%s1341 + $0x4] sm:$0xf]
        %v1344 = vld [vmem:[%s1341 + $0x8] sm:$0xf]
        %v1345 = vld [vmem:[%s1341 + $0xc] sm:$0xf]
        %v1346 = vld [vmem:[%s1341 + $0x10] sm:$0xf]
        %v1347 = vld [vmem:[%s1341 + $0x14] sm:$0xf]
        %v1348 = vld [vmem:[%s1341 + $0x18] sm:$0xf]
        %v1349 = vld [vmem:[%s1341 + $0x1c] sm:$0xf]
        %v1350 = vld [vmem:[%s1341 + $0x20] sm:$0xf]
        %v1351 = vld [vmem:[%s1341 + $0x24] sm:$0xf]
        %v1352 = vld [vmem:[%s1341 + $0x28] sm:$0xf]
        %v1353 = vld [vmem:[%s1341 + $0x2c] sm:$0xf]
        %v1354 = vld [vmem:[%s1341 + $0x30] sm:$0xf]
        %v1355 = vld [vmem:[%s1341 + $0x34] sm:$0xf]
        %v1356 = vld [vmem:[%s1341 + $0x38] sm:$0xf]
        %v1357 = vld [vmem:[%s1341 + $0x3c] sm:$0xf]
        %v1358 = vpack.c.bf16 %v1326, %v1325
        %v1359 = vpack.c.bf16 %v1328, %v1327
        %v1360 = vpack.c.bf16 %v1330, %v1329
        %v1361 = vpack.c.bf16 %v1332, %v1331
        %v1362 = vpack.c.bf16 %v1334, %v1333
        %v1363 = vpack.c.bf16 %v1336, %v1335
        %v1364 = vpack.c.bf16 %v1338, %v1337
        %v1365 = vpack.c.bf16 %v1340, %v1339
        %s1366 = scalar_lea.vmem %s3, 512
        %v1367 = vld [vmem:[%s1366] sm:$0xff]
        %v1384 = vunpack.c.l.b16 %v1342
        %v1385 = vunpack.c.l.b16 %v1343
        %v1386 = vunpack.c.l.b16 %v1344
        %v1387 = vunpack.c.l.b16 %v1345
        %v1388 = vunpack.c.l.b16 %v1346
        %v1389 = vunpack.c.l.b16 %v1347
        %v1390 = vunpack.c.l.b16 %v1348
        %v1391 = vunpack.c.l.b16 %v1349
        %v1392 = vunpack.c.l.b16 %v1350
        %v1393 = vunpack.c.l.b16 %v1351
        %v1394 = vunpack.c.l.b16 %v1352
        %v1395 = vunpack.c.l.b16 %v1353
        %v1396 = vunpack.c.l.b16 %v1354
        %v1397 = vunpack.c.l.b16 %v1355
        %v1398 = vunpack.c.l.b16 %v1356
        %v1399 = vunpack.c.l.b16 %v1357
        %v1400 = vpack.c.b16 %v1385, %v1384
        %v1401 = vpack.c.b16 %v1387, %v1386
        %v1402 = vpack.c.b16 %v1389, %v1388
        %v1403 = vpack.c.b16 %v1391, %v1390
        %v1404 = vpack.c.b16 %v1393, %v1392
        %v1405 = vpack.c.b16 %v1395, %v1394
        %v1406 = vpack.c.b16 %v1397, %v1396
        %v1407 = vpack.c.b16 %v1399, %v1398
        %1416 = vmatprep.subr.bf16.mxu0 0
        %1417 = vmatpush1.bf16.msra.mxu0 %v1358
        %1418 = vmatprep.subr.bf16.mxu0 0
        %1419 = vmatpush1.bf16.msra.mxu0 %v1359
        %1420 = vmatprep.subr.bf16.mxu0 0
        %1421 = vmatpush1.bf16.msra.mxu0 %v1360
        %1422 = vmatprep.subr.bf16.mxu0 0
        %1423 = vmatpush1.bf16.msra.mxu0 %v1361
        %1424 = vmatprep.subr.bf16.mxu0 0
        %1425 = vmatpush1.bf16.msra.mxu0 %v1362
        %1426 = vmatprep.subr.bf16.mxu0 0
        %1427 = vmatpush1.bf16.msra.mxu0 %v1363
        %1428 = vmatprep.subr.bf16.mxu0 0
        %1429 = vmatpush1.bf16.msra.mxu0 %v1364
        %1430 = vmatprep.subr.bf16.mxu0 0
        %1431 = vmatpush1.bf16.msra.mxu0 %v1365
        %1432 = vmatprep.subr.bf16.mxu0 0
        %1433 = vmatpush1.bf16.msra.mxu0 0
        %1434 = vmatprep.subr.bf16.mxu0 0
        %1435 = vmatpush1.bf16.msra.mxu0 0
        %1436 = vmatprep.subr.bf16.mxu0 0
        %1437 = vmatpush1.bf16.msra.mxu0 0
        %1438 = vmatprep.subr.bf16.mxu0 0
        %1439 = vmatpush1.bf16.msra.mxu0 0
        %1440 = vmatprep.subr.bf16.mxu0 0
        %1441 = vmatpush1.bf16.msra.mxu0 0
        %1442 = vmatprep.subr.bf16.mxu0 0
        %1443 = vmatpush1.bf16.msra.mxu0 0
        %1444 = vmatprep.subr.bf16.mxu0 0
        %1445 = vmatpush1.bf16.msra.mxu0 0
        %1446 = vmatprep.subr.bf16.mxu0 0
        %1447 = vmatpush1.bf16.msra.mxu0 0
        %1448 = vmatprep.mubr.bf16.mxu0 0
        %1449 = vmatmul.mubr.bf16.gmra.mrb[0].mxu0 %v1400
        %v1450 = vpop.f32.mrb[0].mxu0
        %v1451 = vadd.f32 %v1367, %v1450
        %v1452 = vpop.f32.mrb[0].mxu0
        %v1453 = vpop.f32.mrb[0].mxu0
        %v1454 = vpop.f32.mrb[0].mxu0
        %1455 = vmatprep.mubr.bf16.mxu0 0
        %1456 = vmatmul.mubr.bf16.gmra.mrb[0].mxu0 %v1401
        %v1457 = vpop.f32.mrb[0].mxu0
        %v1458 = vpop.f32.mrb[0].mxu0
        %v1459 = vpop.f32.mrb[0].mxu0
        %v1460 = vpop.f32.mrb[0].mxu0
        %1461 = vmatprep.mubr.bf16.mxu0 0
        %1462 = vmatmul.mubr.bf16.gmra.mrb[0].mxu0 %v1402
        %v1463 = vpop.f32.mrb[0].mxu0
        %v1464 = vpop.f32.mrb[0].mxu0
        %v1465 = vpop.f32.mrb[0].mxu0
        %v1466 = vpop.f32.mrb[0].mxu0
        %1467 = vmatprep.mubr.bf16.mxu0 0
        %1468 = vmatmul.mubr.bf16.gmra.mrb[0].mxu0 %v1403
        %v1469 = vpop.f32.mrb[0].mxu0
        %v1470 = vpop.f32.mrb[0].mxu0
        %v1471 = vpop.f32.mrb[0].mxu0
        %v1472 = vpop.f32.mrb[0].mxu0
        %1473 = vmatprep.mubr.bf16.mxu0 0
        %1474 = vmatmul.mubr.bf16.gmra.mrb[0].mxu0 %v1404
        %v1475 = vpop.f32.mrb[0].mxu0
        %v1476 = vpop.f32.mrb[0].mxu0
        %v1477 = vpop.f32.mrb[0].mxu0
        %v1478 = vpop.f32.mrb[0].mxu0
        %1479 = vmatprep.mubr.bf16.mxu0 0
        %1480 = vmatmul.mubr.bf16.gmra.mrb[0].mxu0 %v1405
        %v1481 = vpop.f32.mrb[0].mxu0
        %v1482 = vpop.f32.mrb[0].mxu0
        %v1483 = vpop.f32.mrb[0].mxu0
        %v1484 = vpop.f32.mrb[0].mxu0
        %1485 = vmatprep.mubr.bf16.mxu0 0
        %1486 = vmatmul.mubr.bf16.gmra.mrb[0].mxu0 %v1406
        %v1487 = vpop.f32.mrb[0].mxu0
        %v1488 = vpop.f32.mrb[0].mxu0
        %v1489 = vpop.f32.mrb[0].mxu0
        %v1490 = vpop.f32.mrb[0].mxu0
        %1491 = vmatprep.mubr.bf16.mxu0 0
        %1492 = vmatmul.mubr.bf16.gmra.mrb[0].mxu0 %v1407
        %v1493 = vpop.f32.mrb[0].mxu0
        %v1494 = vpop.f32.mrb[0].mxu0
        %v1495 = vpop.f32.mrb[0].mxu0
        %v1496 = vpop.f32.mrb[0].mxu0
        %1497 = vdwg.mxu0
        %1498 = vst.msk [vmem:[%s215] sm:$0xff] %vm899, %v1451
      $region44: #{pointnet_forward.2} parent=35 // pred_fallthru
        _
      %p1499 = scmp.lt.s32.totalorder %s19, 1
      %s1500 = scalar_select %p1499, %s19, 1
      %s1501 = smul.addr %s1500, 8
      %s1502 = scalar_lea.vmem %s4, %s1501
      // Predicated region
      $region45: #{pointnet_forward.2} parent=35 // pred_check
        %p1503 = pneg %p136
      $region46: #{pointnet_forward.2} parent=35 // pred_check_branch
        %1505 = sbr.rel (%p1503) target = $region48
      $region47: #{pointnet_forward.2} parent=35 // pred_region
        _
      $region48: #{pointnet_forward.2} parent=35 // pred_fallthru
        _
    $region36: #{pointnet_forward.2} parent=5 // pred_fallthru
      _
    %p1506 = scmp.le.s32.totalorder 2, %s10
    // Predicated region
    $region49: #{pointnet_forward.2} parent=5 // pred_check
      %p1507 = pneg %p1506
    $region50: #{pointnet_forward.2} parent=5 // pred_check_branch
      %1509 = sbr.rel (%p1507) target = $region52
    $region51: #{pointnet_forward.2} parent=5 // pred_region
      %s1510 = ssub.s32 %s10, 2
      // Predicated region
      $region53: #{pointnet_forward.2} parent=51 // pred_check
        %p1511 = pneg %p142
      $region54: #{pointnet_forward.2} parent=51 // pred_check_branch
        %1513 = sbr.rel (%p1511) target = $region56
      $region55: #{pointnet_forward.2} parent=51 // pred_region
        %p1514 = scmp.lt.s32.totalorder %s21, 1
        %s1515 = scalar_select %p1514, %s21, 1
        %s1516 = smul.addr %s1515, 8
        %s1517 = scalar_lea.vmem %s4, %s1516
      $region56: #{pointnet_forward.2} parent=51 // pred_fallthru
        _
    $region52: #{pointnet_forward.2} parent=5 // pred_fallthru
      _
  $region6: #{pointnet_forward.2} parent=0 // loop_footer
    %s14 = sadd.s32 1, %s10
  $region7: #{pointnet_forward.2} parent=0 // loop_footer_branch
    %9 = sbr.rel target = $region3
  $region8: #{pointnet_forward.2} parent=0 // loop_exit
    _

// kernel: pointnet_forward.3
$region0: #{pointnet_forward.3}
  #allocation0 [shape = 'u32[]', space=smem, size = 0x4, offset = 0x4, fixed_abs, tag = 'smem constant byte address 0x4 - core index']
  #allocation1 [shape = 'u32[144,128]{1,0:T(1,128)}', space=vmem, size = 0x12000, scoped, tag = 'internal scratch']
  #allocation2 [shape = 'f32[128,1]{1,0:T(8,128)}', space=vmem, size = 0x10000, scoped, tag = 'scratch operand']
  #allocation3 [shape = 'bf16[1,128,8]{2,1,0:T(16,128)(2,1)}', space=vmem, size = 0x8000, scoped, tag = 'scratch operand']
  %s0 = inlined_call_operand.vmem [shape: f32[2,6,16], index: 0, kind: input, shape index: {}]
  %s1 = inlined_call_operand.vmem [shape: f32[2,8,1], index: 1, kind: input, shape index: {}]
  %s2 = inlined_call_operand.vmem [shape: f32[2,8,1], index: 2, kind: input, shape index: {}]
  %s3 = inlined_call_operand.vmem [shape: f32[128,8], index: 3, kind: input, shape index: {}]
  %s4 = inlined_call_operand.vmem [shape: bf16[5,128,128], index: 4, kind: input, shape index: {}]
  %s5 = inlined_call_operand.vmem [shape: bf16[128,8], index: 5, kind: input, shape index: {}]
  %s6 = inlined_call_operand.vmem [shape: f32[6,128,1], index: 6, kind: input, shape index: {}]
  %s7 = inlined_call_operand.vmem [shape: f32[2,8,1], index: 7, kind: output, shape index: {}]
  %s8 = sld [smem:[#allocation0]]
  $region69: #{pointnet_forward.3} parent=0
    _
  %s10 = ssub.s32 1, %s8
  %s11 = scalar_select 0, %s10, %s8
  loop: start=0, step=1, limit=4
  $region2: #{pointnet_forward.3} parent=0 // loop_pre_header
    _
  $region3: #{pointnet_forward.3} parent=0 // loop_header
    %s13 = sphi 0, %s17
    %p14 = scmp.ge.s32.totalorder %s13, 4
    %s20 = sphi 0, %s32
    %s21 = sphi 0, %s28
    %s22 = sphi 0, %s20
    %s23 = sphi 0, %s21
    %s24 = sphi 0, %s22
    %s25 = sphi 0, %s23
    %s37 = sphi 0, %s39
    %s40 = sphi 0, %s37
    %s41 = sphi 0, %s40
    %s57 = sphi 0, %s41
    %s63 = sphi 0, %s65
    %s66 = sphi 0, %s63
    %s67 = sphi 0, %s66
    %s83 = sphi 0, %s67
    %s89 = sphi 0, %s91
    %s92 = sphi 0, %s89
    %s93 = sphi 0, %s92
    %s109 = sphi 0, %s93
    %s113 = sphi 0, %s113
    %s115 = sphi 0, %s113
    %s116 = sphi 0, %s115
    %s130 = sphi 0, %s116
    %s134 = sphi 0, %s134
    %s136 = sphi 0, %s134
    %s137 = sphi 0, %s136
    %s151 = sphi 0, %s137
    %s155 = sphi 0, %s155
    %s157 = sphi 0, %s155
    %s158 = sphi 0, %s157
    %s172 = sphi 0, %s158
    %s176 = sphi 0, %s176
    %s178 = sphi 0, %s176
    %s179 = sphi 0, %s178
    %s193 = sphi 0, %s179
    %s199 = sphi 0, %s201
    %s202 = sphi 0, %s199
    %s203 = sphi 0, %s202
    %s219 = sphi 0, %s203
  $region4: #{pointnet_forward.3} parent=0 // loop_header_branch
    %16 = sbr.rel (%p14) target = $region8
  $region5: #{pointnet_forward.3} parent=0 // loop_body
    %s18 = ssub.s32 %s13, 1
    %s19 = ssub.s32 %s13, 2
    %s26 = sadd.s32 1, %s21
    %p27 = scmp.ge.s32.totalorder %s26, 1
    %s28 = scalar_select %p27, 0, %s26
    %s29 = sadd.s32 1, %s20
    %s30 = scalar_select %p27, %s29, %s20
    %p31 = scmp.ge.s32.totalorder %s30, 2
    %s32 = scalar_select %p31, 0, %s30
    %s33 = ssub.s32 %s20, %s32
    %s34 = ssub.s32 %s21, %s28
    %s35 = sor.u32 %s33, %s34
    %p36 = scmp.eq.s32.totalorder %s35, 0
    %s38 = sadd.s32 %s37, 1
    %s39 = scalar_select %p36, %s37, %s38
    %p42 = pneg %p36
    %p43 = scmp.eq.s32.totalorder %s13, 1
    %p44 = por %p42, %p43
    %p45 = scmp.ne.s32.totalorder %s37, %s40
    %p46 = scmp.eq.s32.totalorder %s13, 0
    %p47 = por %p45, %p46
    %p48 = scmp.ne.s32.totalorder %s37, %s40
    %p49 = scmp.eq.s32.totalorder %s18, 1
    %p50 = por %p48, %p49
    %p51 = scmp.ne.s32.totalorder %s40, %s41
    %p52 = scmp.eq.s32.totalorder %s18, 0
    %p53 = por %p51, %p52
    %p54 = scmp.ne.s32.totalorder %s40, %s41
    %p55 = scmp.eq.s32.totalorder %s19, 1
    %p56 = por %p54, %p55
    %p58 = scmp.ne.s32.totalorder %s41, %s57
    %p59 = scmp.eq.s32.totalorder %s19, 0
    %p60 = por %p58, %p59
    %s61 = ssub.s32 %s20, %s32
    %p62 = scmp.eq.s32.totalorder %s61, 0
    %s64 = sadd.s32 %s63, 1
    %s65 = scalar_select %p62, %s63, %s64
    %p68 = pneg %p62
    %p69 = scmp.eq.s32.totalorder %s13, 1
    %p70 = por %p68, %p69
    %p71 = scmp.ne.s32.totalorder %s63, %s66
    %p72 = scmp.eq.s32.totalorder %s13, 0
    %p73 = por %p71, %p72
    %p74 = scmp.ne.s32.totalorder %s63, %s66
    %p75 = scmp.eq.s32.totalorder %s18, 1
    %p76 = por %p74, %p75
    %p77 = scmp.ne.s32.totalorder %s66, %s67
    %p78 = scmp.eq.s32.totalorder %s18, 0
    %p79 = por %p77, %p78
    %p80 = scmp.ne.s32.totalorder %s66, %s67
    %p81 = scmp.eq.s32.totalorder %s19, 1
    %p82 = por %p80, %p81
    %p84 = scmp.ne.s32.totalorder %s67, %s83
    %p85 = scmp.eq.s32.totalorder %s19, 0
    %p86 = por %p84, %p85
    %s87 = ssub.s32 %s20, %s32
    %p88 = scmp.eq.s32.totalorder %s87, 0
    %s90 = sadd.s32 %s89, 1
    %s91 = scalar_select %p88, %s89, %s90
    %p94 = pneg %p88
    %p95 = scmp.eq.s32.totalorder %s13, 1
    %p96 = por %p94, %p95
    %p97 = scmp.ne.s32.totalorder %s89, %s92
    %p98 = scmp.eq.s32.totalorder %s13, 0
    %p99 = por %p97, %p98
    %p100 = scmp.ne.s32.totalorder %s89, %s92
    %p101 = scmp.eq.s32.totalorder %s18, 1
    %p102 = por %p100, %p101
    %p103 = scmp.ne.s32.totalorder %s92, %s93
    %p104 = scmp.eq.s32.totalorder %s18, 0
    %p105 = por %p103, %p104
    %p106 = scmp.ne.s32.totalorder %s92, %s93
    %p107 = scmp.eq.s32.totalorder %s19, 1
    %p108 = por %p106, %p107
    %p110 = scmp.ne.s32.totalorder %s93, %s109
    %p111 = scmp.eq.s32.totalorder %s19, 0
    %p112 = por %p110, %p111
    %s114 = sadd.s32 %s113, 1
    %p117 = scmp.eq.s32.totalorder %s13, 1
    %p118 = scmp.ne.s32.totalorder %s113, %s115
    %p119 = scmp.eq.s32.totalorder %s13, 0
    %p120 = por %p118, %p119
    %p121 = scmp.ne.s32.totalorder %s113, %s115
    %p122 = scmp.eq.s32.totalorder %s18, 1
    %p123 = por %p121, %p122
    %p124 = scmp.ne.s32.totalorder %s115, %s116
    %p125 = scmp.eq.s32.totalorder %s18, 0
    %p126 = por %p124, %p125
    %p127 = scmp.ne.s32.totalorder %s115, %s116
    %p128 = scmp.eq.s32.totalorder %s19, 1
    %p129 = por %p127, %p128
    %p131 = scmp.ne.s32.totalorder %s116, %s130
    %p132 = scmp.eq.s32.totalorder %s19, 0
    %p133 = por %p131, %p132
    %s135 = sadd.s32 %s134, 1
    %p138 = scmp.eq.s32.totalorder %s13, 1
    %p139 = scmp.ne.s32.totalorder %s134, %s136
    %p140 = scmp.eq.s32.totalorder %s13, 0
    %p141 = por %p139, %p140
    %p142 = scmp.ne.s32.totalorder %s134, %s136
    %p143 = scmp.eq.s32.totalorder %s18, 1
    %p144 = por %p142, %p143
    %p145 = scmp.ne.s32.totalorder %s136, %s137
    %p146 = scmp.eq.s32.totalorder %s18, 0
    %p147 = por %p145, %p146
    %p148 = scmp.ne.s32.totalorder %s136, %s137
    %p149 = scmp.eq.s32.totalorder %s19, 1
    %p150 = por %p148, %p149
    %p152 = scmp.ne.s32.totalorder %s137, %s151
    %p153 = scmp.eq.s32.totalorder %s19, 0
    %p154 = por %p152, %p153
    %s156 = sadd.s32 %s155, 1
    %p159 = scmp.eq.s32.totalorder %s13, 1
    %p160 = scmp.ne.s32.totalorder %s155, %s157
    %p161 = scmp.eq.s32.totalorder %s13, 0
    %p162 = por %p160, %p161
    %p163 = scmp.ne.s32.totalorder %s155, %s157
    %p164 = scmp.eq.s32.totalorder %s18, 1
    %p165 = por %p163, %p164
    %p166 = scmp.ne.s32.totalorder %s157, %s158
    %p167 = scmp.eq.s32.totalorder %s18, 0
    %p168 = por %p166, %p167
    %p169 = scmp.ne.s32.totalorder %s157, %s158
    %p170 = scmp.eq.s32.totalorder %s19, 1
    %p171 = por %p169, %p170
    %p173 = scmp.ne.s32.totalorder %s158, %s172
    %p174 = scmp.eq.s32.totalorder %s19, 0
    %p175 = por %p173, %p174
    %s177 = sadd.s32 %s176, 1
    %p180 = scmp.eq.s32.totalorder %s13, 1
    %p181 = scmp.ne.s32.totalorder %s176, %s178
    %p182 = scmp.eq.s32.totalorder %s13, 0
    %p183 = por %p181, %p182
    %p184 = scmp.ne.s32.totalorder %s176, %s178
    %p185 = scmp.eq.s32.totalorder %s18, 1
    %p186 = por %p184, %p185
    %p187 = scmp.ne.s32.totalorder %s178, %s179
    %p188 = scmp.eq.s32.totalorder %s18, 0
    %p189 = por %p187, %p188
    %p190 = scmp.ne.s32.totalorder %s178, %s179
    %p191 = scmp.eq.s32.totalorder %s19, 1
    %p192 = por %p190, %p191
    %p194 = scmp.ne.s32.totalorder %s179, %s193
    %p195 = scmp.eq.s32.totalorder %s19, 0
    %p196 = por %p194, %p195
    %s197 = ssub.s32 %s20, %s32
    %p198 = scmp.eq.s32.totalorder %s197, 0
    %s200 = sadd.s32 %s199, 1
    %s201 = scalar_select %p198, %s199, %s200
    %p204 = pneg %p198
    %p205 = scmp.eq.s32.totalorder %s13, 1
    %p206 = por %p204, %p205
    %p207 = scmp.ne.s32.totalorder %s199, %s202
    %p208 = scmp.eq.s32.totalorder %s13, 0
    %p209 = por %p207, %p208
    %p210 = scmp.ne.s32.totalorder %s199, %s202
    %p211 = scmp.eq.s32.totalorder %s18, 1
    %p212 = por %p210, %p211
    %p213 = scmp.ne.s32.totalorder %s202, %s203
    %p214 = scmp.eq.s32.totalorder %s18, 0
    %p215 = por %p213, %p214
    %p216 = scmp.ne.s32.totalorder %s202, %s203
    %p217 = scmp.eq.s32.totalorder %s19, 1
    %p218 = por %p216, %p217
    %p220 = scmp.ne.s32.totalorder %s203, %s219
    %p221 = scmp.eq.s32.totalorder %s19, 0
    %p222 = por %p220, %p221
    %p223 = scmp.le.s32.totalorder 1, %s13
    %p224 = scmp.lt.s32.totalorder %s13, 3
    %p225 = pnand %p223, %p224
    %p226 = pneg %p225
    // Predicated region
    $region9: #{pointnet_forward.3} parent=5 // pred_check
      _
    $region10: #{pointnet_forward.3} parent=5 // pred_check_branch
      %228 = sbr.rel (%p225) target = $region12
    $region11: #{pointnet_forward.3} parent=5 // pred_region
      %s229 = ssub.s32 %s13, 1
      // Predicated region
      $region13: #{pointnet_forward.3} parent=11 // pred_check
        %p230 = pneg %p126
      $region14: #{pointnet_forward.3} parent=11 // pred_check_branch
        %232 = sbr.rel (%p230) target = $region16
      $region15: #{pointnet_forward.3} parent=11 // pred_region
        _
      $region16: #{pointnet_forward.3} parent=11 // pred_fallthru
        _
      // Predicated region
      $region17: #{pointnet_forward.3} parent=11 // pred_check
        %p233 = pneg %p147
      $region18: #{pointnet_forward.3} parent=11 // pred_check_branch
        %235 = sbr.rel (%p233) target = $region20
      $region19: #{pointnet_forward.3} parent=11 // pred_region
        _
      $region20: #{pointnet_forward.3} parent=11 // pred_fallthru
        _
      // Predicated region
      $region21: #{pointnet_forward.3} parent=11 // pred_check
        %p236 = pneg %p168
      $region22: #{pointnet_forward.3} parent=11 // pred_check_branch
        %238 = sbr.rel (%p236) target = $region24
      $region23: #{pointnet_forward.3} parent=11 // pred_region
        _
      $region24: #{pointnet_forward.3} parent=11 // pred_fallthru
        _
      // Predicated region
      $region25: #{pointnet_forward.3} parent=11 // pred_check
        %p239 = pneg %p189
      $region26: #{pointnet_forward.3} parent=11 // pred_check_branch
        %241 = sbr.rel (%p239) target = $region28
      $region27: #{pointnet_forward.3} parent=11 // pred_region
        _
      $region28: #{pointnet_forward.3} parent=11 // pred_fallthru
        _
    $region12: #{pointnet_forward.3} parent=5 // pred_fallthru
      _
    %p242 = scmp.lt.s32.totalorder %s13, 2
    // Predicated region
    $region29: #{pointnet_forward.3} parent=5 // pred_check
      %p243 = pneg %p242
    $region30: #{pointnet_forward.3} parent=5 // pred_check_branch
      %245 = sbr.rel (%p243) target = $region32
    $region31: #{pointnet_forward.3} parent=5 // pred_region
      // Predicated region
      $region33: #{pointnet_forward.3} parent=31 // pred_check
        %p246 = pneg %p47
      $region34: #{pointnet_forward.3} parent=31 // pred_check_branch
        %248 = sbr.rel (%p246) target = $region36
      $region35: #{pointnet_forward.3} parent=31 // pred_region
        %p249 = scmp.lt.s32.totalorder %s20, 1
        %s250 = scalar_select %p249, %s20, 1
        %p251 = scmp.lt.s32.totalorder %s21, 0
        %s252 = scalar_select %p251, %s21, 0
        %s253 = sadd.s32 %s252, %s250
        %s254 = smul.addr %s253, 8
        %s255 = scalar_lea.vmem %s0, %s254
      $region36: #{pointnet_forward.3} parent=31 // pred_fallthru
        _
      // Predicated region
      $region37: #{pointnet_forward.3} parent=31 // pred_check
        %p256 = pneg %p73
      $region38: #{pointnet_forward.3} parent=31 // pred_check_branch
        %258 = sbr.rel (%p256) target = $region40
      $region39: #{pointnet_forward.3} parent=31 // pred_region
        %p259 = scmp.lt.s32.totalorder %s20, 1
        %s260 = scalar_select %p259, %s20, 1
        %s261 = smul.addr %s260, 8
        %s262 = scalar_lea.vmem %s1, %s261
      $region40: #{pointnet_forward.3} parent=31 // pred_fallthru
        _
      // Predicated region
      $region41: #{pointnet_forward.3} parent=31 // pred_check
        %p263 = pneg %p99
      $region42: #{pointnet_forward.3} parent=31 // pred_check_branch
        %265 = sbr.rel (%p263) target = $region44
      $region43: #{pointnet_forward.3} parent=31 // pred_region
        %p266 = scmp.lt.s32.totalorder %s20, 1
        %s267 = scalar_select %p266, %s20, 1
        %s268 = smul.addr %s267, 8
        %s269 = scalar_lea.vmem %s2, %s268
      $region44: #{pointnet_forward.3} parent=31 // pred_fallthru
        _
    $region32: #{pointnet_forward.3} parent=5 // pred_fallthru
      _
    %p270 = scmp.le.s32.totalorder 1, %s13
    %p271 = scmp.lt.s32.totalorder %s13, 3
    %p272 = pnand %p270, %p271
    %p273 = pneg %p272
    // Predicated region
    $region45: #{pointnet_forward.3} parent=5 // pred_check
      _
    $region46: #{pointnet_forward.3} parent=5 // pred_check_branch
      %275 = sbr.rel (%p272) target = $region48
    $region47: #{pointnet_forward.3} parent=5 // pred_region
      %s276 = ssub.s32 %s13, 1
      %p277 = scmp.lt.s32.totalorder %s22, 1
      %s278 = scalar_select %p277, %s22, 1
      %p279 = scmp.lt.s32.totalorder %s23, 0
      %s280 = scalar_select %p279, %s23, 0
      %s281 = sadd.s32 %s280, %s278
      %s282 = smul.addr %s281, 8
      %s283 = scalar_lea.vmem %s0, %s282
      %p284 = pneg %p53
      %p285 = pneg %p50
      %p286 = scmp.lt.s32.totalorder %s22, 1
      %s287 = scalar_select %p286, %s22, 1
      %s288 = smul.addr %s287, 8
      %s289 = scalar_lea.vmem %s1, %s288
      %p290 = pneg %p79
      %p291 = pneg %p76
      %p292 = scmp.lt.s32.totalorder %s22, 1
      %s293 = scalar_select %p292, %s22, 1
      %s294 = smul.addr %s293, 8
      %s295 = scalar_lea.vmem %s2, %s294
      %p296 = pneg %p105
      %p297 = pneg %p102
      %p298 = pneg %p126
      %p299 = pneg %p123
      %p300 = pneg %p147
      %p301 = pneg %p144
      %p302 = pneg %p168
      %p303 = pneg %p165
      %p304 = pneg %p189
      %p305 = pneg %p186
      %p306 = pneg %p215
      %p307 = pneg %p212
      %p308 = scmp.lt.s32.totalorder %s22, 1
      %s309 = scalar_select %p308, %s22, 1
      %s310 = smul.addr %s309, 8
      %s311 = scalar_lea.vmem %s7, %s310
      %p312 = scmp.lt.s32.totalorder %s22, 1
      %s313 = scalar_select %p312, %s22, 1
      %p314 = scmp.lt.s32.totalorder %s23, 0
      %s315 = scalar_select %p314, %s23, 0
      %s316 = sadd.s32 %s315, %s313
      %s317 = smul.addr %s316, 8
      %s318 = scalar_lea.vmem %s0, %s317
      %p319 = scmp.lt.s32.totalorder %s22, 1
      %s320 = scalar_select %p319, %s22, 1
      %s321 = smul.addr %s320, 8
      %s322 = scalar_lea.vmem %s1, %s321
      %p323 = scmp.lt.s32.totalorder %s22, 1
      %s324 = scalar_select %p323, %s22, 1
      %s325 = smul.addr %s324, 8
      %s326 = scalar_lea.vmem %s2, %s325
      %p327 = scmp.lt.s32.totalorder %s22, 1
      %s328 = scalar_select %p327, %s22, 1
      %s329 = smul.addr %s328, 8
      %s330 = scalar_lea.vmem %s7, %s329
      %p332 = scmp.eq.s32.totalorder %s23, 0
      // Predicated region
      $region49: #{pointnet_forward.3} parent=47 // pred_check
        %p333 = pneg %p332
      $region50: #{pointnet_forward.3} parent=47 // pred_check_branch
        %335 = sbr.rel (%p333) target = $region52
      $region51: #{pointnet_forward.3} parent=47 // pred_region
        %vm336 = vcmask 7168
        %337 = vst.msk [vmem:[#allocation2] sm:$0xff] %vm336, 0.0
        %338 = vst.msk [vmem:[#allocation2 + $0x8] sm:$0xff] %vm336, 0.0
        %339 = vst.msk [vmem:[#allocation2 + $0x10] sm:$0xff] %vm336, 0.0
        %340 = vst.msk [vmem:[#allocation2 + $0x18] sm:$0xff] %vm336, 0.0
        %341 = vst.msk [vmem:[#allocation2 + $0x20] sm:$0xff] %vm336, 0.0
        %342 = vst.msk [vmem:[#allocation2 + $0x28] sm:$0xff] %vm336, 0.0
        %343 = vst.msk [vmem:[#allocation2 + $0x30] sm:$0xff] %vm336, 0.0
        %344 = vst.msk [vmem:[#allocation2 + $0x38] sm:$0xff] %vm336, 0.0
        %345 = vst.msk [vmem:[#allocation2 + $0x40] sm:$0xff] %vm336, 0.0
        %346 = vst.msk [vmem:[#allocation2 + $0x48] sm:$0xff] %vm336, 0.0
        %347 = vst.msk [vmem:[#allocation2 + $0x50] sm:$0xff] %vm336, 0.0
        %348 = vst.msk [vmem:[#allocation2 + $0x58] sm:$0xff] %vm336, 0.0
        %349 = vst.msk [vmem:[#allocation2 + $0x60] sm:$0xff] %vm336, 0.0
        %350 = vst.msk [vmem:[#allocation2 + $0x68] sm:$0xff] %vm336, 0.0
        %351 = vst.msk [vmem:[#allocation2 + $0x70] sm:$0xff] %vm336, 0.0
        %352 = vst.msk [vmem:[#allocation2 + $0x78] sm:$0xff] %vm336, 0.0
        %v353 = vld [vmem:[%s3] sm:$0xff]
        %v354 = vld [vmem:[%s3 + $0x8] sm:$0xff]
        %v355 = vld [vmem:[%s3 + $0x10] sm:$0xff]
        %v356 = vld [vmem:[%s3 + $0x18] sm:$0xff]
        %v357 = vld [vmem:[%s3 + $0x20] sm:$0xff]
        %v358 = vld [vmem:[%s3 + $0x28] sm:$0xff]
        %v359 = vld [vmem:[%s3 + $0x30] sm:$0xff]
        %v360 = vld [vmem:[%s3 + $0x38] sm:$0xff]
        %v361 = vld [vmem:[%s3 + $0x40] sm:$0xff]
        %v362 = vld [vmem:[%s3 + $0x48] sm:$0xff]
        %v363 = vld [vmem:[%s3 + $0x50] sm:$0xff]
        %v364 = vld [vmem:[%s3 + $0x58] sm:$0xff]
        %v365 = vld [vmem:[%s3 + $0x60] sm:$0xff]
        %v366 = vld [vmem:[%s3 + $0x68] sm:$0xff]
        %v367 = vld [vmem:[%s3 + $0x70] sm:$0xff]
        %v368 = vld [vmem:[%s3 + $0x78] sm:$0xff]
        %v369 = vld [vmem:[%s322] sm:$0xff]
        %v370 = vadd.f32 %v369, 1.0
        %v371 = vlaneseq
        %v372 = vshrl.u32 %v371, 7
        %v373 = vsub.s32 0, %v372
        %v374 = vrot.slane %v370, %v373
        %v375 = vmul.f32 %v353, %v374
        %v376 = vmul.f32 %v354, %v374
        %v377 = vmul.f32 %v355, %v374
        %v378 = vmul.f32 %v356, %v374
        %v379 = vmul.f32 %v357, %v374
        %v380 = vmul.f32 %v358, %v374
        %v381 = vmul.f32 %v359, %v374
        %v382 = vmul.f32 %v360, %v374
        %v383 = vmul.f32 %v361, %v374
        %v384 = vmul.f32 %v362, %v374
        %v385 = vmul.f32 %v363, %v374
        %v386 = vmul.f32 %v364, %v374
        %v387 = vmul.f32 %v365, %v374
        %v388 = vmul.f32 %v366, %v374
        %v389 = vmul.f32 %v367, %v374
        %v390 = vmul.f32 %v368, %v374
        %v391 = vlaneseq
        %v392 = vshrl.u32 %v391, 7
        %v393 = vsub.s32 2, %v392
        %v394 = vrot.slane %v369, %v393
        %396 = vrot.lane.b32.xlu0 %v394, 1
        %v397 = vpop.permute.xlu0 %396
        %v399 = vmul.f32 %v353, %v397
        %v400 = vmul.f32 %v354, %v397
        %v401 = vmul.f32 %v355, %v397
        %v402 = vmul.f32 %v356, %v397
        %v403 = vmul.f32 %v357, %v397
        %v404 = vmul.f32 %v358, %v397
        %v405 = vmul.f32 %v359, %v397
        %v406 = vmul.f32 %v360, %v397
        %v407 = vmul.f32 %v361, %v397
        %v408 = vmul.f32 %v362, %v397
        %v409 = vmul.f32 %v363, %v397
        %v410 = vmul.f32 %v364, %v397
        %v411 = vmul.f32 %v365, %v397
        %v412 = vmul.f32 %v366, %v397
        %v413 = vmul.f32 %v367, %v397
        %v414 = vmul.f32 %v368, %v397
        %431 = vrot.lane.b32.xlu0 %v399, 127
        %v432 = vpop.permute.xlu0 %431
        %433 = vrot.lane.b32.xlu0 %v400, 127
        %v434 = vpop.permute.xlu0 %433
        %435 = vrot.lane.b32.xlu0 %v401, 127
        %v436 = vpop.permute.xlu0 %435
        %437 = vrot.lane.b32.xlu0 %v402, 127
        %v438 = vpop.permute.xlu0 %437
        %439 = vrot.lane.b32.xlu0 %v403, 127
        %v440 = vpop.permute.xlu0 %439
        %441 = vrot.lane.b32.xlu0 %v404, 127
        %v442 = vpop.permute.xlu0 %441
        %443 = vrot.lane.b32.xlu0 %v405, 127
        %v444 = vpop.permute.xlu0 %443
        %445 = vrot.lane.b32.xlu0 %v406, 127
        %v446 = vpop.permute.xlu0 %445
        %447 = vrot.lane.b32.xlu0 %v407, 127
        %v448 = vpop.permute.xlu0 %447
        %449 = vrot.lane.b32.xlu0 %v408, 127
        %v450 = vpop.permute.xlu0 %449
        %451 = vrot.lane.b32.xlu0 %v409, 127
        %v452 = vpop.permute.xlu0 %451
        %453 = vrot.lane.b32.xlu0 %v410, 127
        %v454 = vpop.permute.xlu0 %453
        %455 = vrot.lane.b32.xlu0 %v411, 127
        %v456 = vpop.permute.xlu0 %455
        %457 = vrot.lane.b32.xlu0 %v412, 127
        %v458 = vpop.permute.xlu0 %457
        %459 = vrot.lane.b32.xlu0 %v413, 127
        %v460 = vpop.permute.xlu0 %459
        %461 = vrot.lane.b32.xlu0 %v414, 127
        %v462 = vpop.permute.xlu0 %461
        %v479 = vadd.f32 %v375, %v432
        %v480 = vadd.f32 %v376, %v434
        %v481 = vadd.f32 %v377, %v436
        %v482 = vadd.f32 %v378, %v438
        %v483 = vadd.f32 %v379, %v440
        %v484 = vadd.f32 %v380, %v442
        %v485 = vadd.f32 %v381, %v444
        %v486 = vadd.f32 %v382, %v446
        %v487 = vadd.f32 %v383, %v448
        %v488 = vadd.f32 %v384, %v450
        %v489 = vadd.f32 %v385, %v452
        %v490 = vadd.f32 %v386, %v454
        %v491 = vadd.f32 %v387, %v456
        %v492 = vadd.f32 %v388, %v458
        %v493 = vadd.f32 %v389, %v460
        %v494 = vadd.f32 %v390, %v462
        %v495 = vpack.c.bf16 %v480, %v479
        %v496 = vpack.c.bf16 %v482, %v481
        %v497 = vpack.c.bf16 %v484, %v483
        %v498 = vpack.c.bf16 %v486, %v485
        %v499 = vpack.c.bf16 %v488, %v487
        %v500 = vpack.c.bf16 %v490, %v489
        %v501 = vpack.c.bf16 %v492, %v491
        %v502 = vpack.c.bf16 %v494, %v493
        %503 = vst.msk [vmem:[#allocation3] sm:$0xff] %vm336, %v495
        %504 = vst.msk [vmem:[#allocation3 + $0x8] sm:$0xff] %vm336, %v496
        %505 = vst.msk [vmem:[#allocation3 + $0x10] sm:$0xff] %vm336, %v497
        %506 = vst.msk [vmem:[#allocation3 + $0x18] sm:$0xff] %vm336, %v498
        %507 = vst.msk [vmem:[#allocation3 + $0x20] sm:$0xff] %vm336, %v499
        %508 = vst.msk [vmem:[#allocation3 + $0x28] sm:$0xff] %vm336, %v500
        %509 = vst.msk [vmem:[#allocation3 + $0x30] sm:$0xff] %vm336, %v501
        %510 = vst.msk [vmem:[#allocation3 + $0x38] sm:$0xff] %vm336, %v502
        %v511 = vlaneseq
        %v512 = vshrl.u32 %v511, 7
        %v513 = vsub.s32 1, %v512
        %v514 = vrot.slane %v369, %v513
        %v515 = vmul.f32 %v353, %v514
        %v516 = vmul.f32 %v354, %v514
        %v517 = vmul.f32 %v355, %v514
        %v518 = vmul.f32 %v356, %v514
        %v519 = vmul.f32 %v357, %v514
        %v520 = vmul.f32 %v358, %v514
        %v521 = vmul.f32 %v359, %v514
        %v522 = vmul.f32 %v360, %v514
        %v523 = vmul.f32 %v361, %v514
        %v524 = vmul.f32 %v362, %v514
        %v525 = vmul.f32 %v363, %v514
        %v526 = vmul.f32 %v364, %v514
        %v527 = vmul.f32 %v365, %v514
        %v528 = vmul.f32 %v366, %v514
        %v529 = vmul.f32 %v367, %v514
        %v530 = vmul.f32 %v368, %v514
        %v531 = vlaneseq
        %v532 = vshrl.u32 %v531, 7
        %v533 = vsub.s32 3, %v532
        %v534 = vrot.slane %v370, %v533
        %536 = vrot.lane.b32.xlu0 %v534, 1
        %v537 = vpop.permute.xlu0 %536
        %v539 = vmul.f32 %v353, %v537
        %v540 = vmul.f32 %v354, %v537
        %v541 = vmul.f32 %v355, %v537
        %v542 = vmul.f32 %v356, %v537
        %v543 = vmul.f32 %v357, %v537
        %v544 = vmul.f32 %v358, %v537
        %v545 = vmul.f32 %v359, %v537
        %v546 = vmul.f32 %v360, %v537
        %v547 = vmul.f32 %v361, %v537
        %v548 = vmul.f32 %v362, %v537
        %v549 = vmul.f32 %v363, %v537
        %v550 = vmul.f32 %v364, %v537
        %v551 = vmul.f32 %v365, %v537
        %v552 = vmul.f32 %v366, %v537
        %v553 = vmul.f32 %v367, %v537
        %v554 = vmul.f32 %v368, %v537
        %571 = vrot.lane.b32.xlu0 %v539, 127
        %v572 = vpop.permute.xlu0 %571
        %573 = vrot.lane.b32.xlu0 %v540, 127
        %v574 = vpop.permute.xlu0 %573
        %575 = vrot.lane.b32.xlu0 %v541, 127
        %v576 = vpop.permute.xlu0 %575
        %577 = vrot.lane.b32.xlu0 %v542, 127
        %v578 = vpop.permute.xlu0 %577
        %579 = vrot.lane.b32.xlu0 %v543, 127
        %v580 = vpop.permute.xlu0 %579
        %581 = vrot.lane.b32.xlu0 %v544, 127
        %v582 = vpop.permute.xlu0 %581
        %583 = vrot.lane.b32.xlu0 %v545, 127
        %v584 = vpop.permute.xlu0 %583
        %585 = vrot.lane.b32.xlu0 %v546, 127
        %v586 = vpop.permute.xlu0 %585
        %587 = vrot.lane.b32.xlu0 %v547, 127
        %v588 = vpop.permute.xlu0 %587
        %589 = vrot.lane.b32.xlu0 %v548, 127
        %v590 = vpop.permute.xlu0 %589
        %591 = vrot.lane.b32.xlu0 %v549, 127
        %v592 = vpop.permute.xlu0 %591
        %593 = vrot.lane.b32.xlu0 %v550, 127
        %v594 = vpop.permute.xlu0 %593
        %595 = vrot.lane.b32.xlu0 %v551, 127
        %v596 = vpop.permute.xlu0 %595
        %597 = vrot.lane.b32.xlu0 %v552, 127
        %v598 = vpop.permute.xlu0 %597
        %599 = vrot.lane.b32.xlu0 %v553, 127
        %v600 = vpop.permute.xlu0 %599
        %601 = vrot.lane.b32.xlu0 %v554, 127
        %v602 = vpop.permute.xlu0 %601
        %v619 = vadd.f32 %v515, %v572
        %v620 = vadd.f32 %v516, %v574
        %v621 = vadd.f32 %v517, %v576
        %v622 = vadd.f32 %v518, %v578
        %v623 = vadd.f32 %v519, %v580
        %v624 = vadd.f32 %v520, %v582
        %v625 = vadd.f32 %v521, %v584
        %v626 = vadd.f32 %v522, %v586
        %v627 = vadd.f32 %v523, %v588
        %v628 = vadd.f32 %v524, %v590
        %v629 = vadd.f32 %v525, %v592
        %v630 = vadd.f32 %v526, %v594
        %v631 = vadd.f32 %v527, %v596
        %v632 = vadd.f32 %v528, %v598
        %v633 = vadd.f32 %v529, %v600
        %v634 = vadd.f32 %v530, %v602
        %v635 = vpack.c.bf16 %v620, %v619
        %v636 = vpack.c.bf16 %v622, %v621
        %v637 = vpack.c.bf16 %v624, %v623
        %v638 = vpack.c.bf16 %v626, %v625
        %v639 = vpack.c.bf16 %v628, %v627
        %v640 = vpack.c.bf16 %v630, %v629
        %v641 = vpack.c.bf16 %v632, %v631
        %v642 = vpack.c.bf16 %v634, %v633
        %651 = vrot.lane.b32.xlu0 %v635, 1
        %v652 = vpop.permute.xlu0 %651
        %653 = vrot.lane.b32.xlu0 %v636, 1
        %v654 = vpop.permute.xlu0 %653
        %655 = vrot.lane.b32.xlu0 %v637, 1
        %v656 = vpop.permute.xlu0 %655
        %657 = vrot.lane.b32.xlu0 %v638, 1
        %v658 = vpop.permute.xlu0 %657
        %659 = vrot.lane.b32.xlu0 %v639, 1
        %v660 = vpop.permute.xlu0 %659
        %661 = vrot.lane.b32.xlu0 %v640, 1
        %v662 = vpop.permute.xlu0 %661
        %663 = vrot.lane.b32.xlu0 %v641, 1
        %v664 = vpop.permute.xlu0 %663
        %665 = vrot.lane.b32.xlu0 %v642, 1
        %v666 = vpop.permute.xlu0 %665
        %vm675 = vcmask 15368
        %676 = vst.msk [vmem:[#allocation3] sm:$0xff] %vm675, %v652
        %677 = vst.msk [vmem:[#allocation3 + $0x8] sm:$0xff] %vm675, %v654
        %678 = vst.msk [vmem:[#allocation3 + $0x10] sm:$0xff] %vm675, %v656
        %679 = vst.msk [vmem:[#allocation3 + $0x18] sm:$0xff] %vm675, %v658
        %680 = vst.msk [vmem:[#allocation3 + $0x20] sm:$0xff] %vm675, %v660
        %681 = vst.msk [vmem:[#allocation3 + $0x28] sm:$0xff] %vm675, %v662
        %682 = vst.msk [vmem:[#allocation3 + $0x30] sm:$0xff] %vm675, %v664
        %683 = vst.msk [vmem:[#allocation3 + $0x38] sm:$0xff] %vm675, %v666
        %v684 = vpack.c.bf16 %v354, %v353
        %v685 = vpack.c.bf16 %v356, %v355
        %v686 = vpack.c.bf16 %v358, %v357
        %v687 = vpack.c.bf16 %v360, %v359
        %v688 = vpack.c.bf16 %v362, %v361
        %v689 = vpack.c.bf16 %v364, %v363
        %v690 = vpack.c.bf16 %v366, %v365
        %v691 = vpack.c.bf16 %v368, %v367
        %vm692 = vcmask 64528
        %693 = vst.msk [vmem:[#allocation3] sm:$0xff] %vm692, %v684
        %694 = vst.msk [vmem:[#allocation3 + $0x8] sm:$0xff] %vm692, %v685
        %695 = vst.msk [vmem:[#allocation3 + $0x10] sm:$0xff] %vm692, %v686
        %696 = vst.msk [vmem:[#allocation3 + $0x18] sm:$0xff] %vm692, %v687
        %697 = vst.msk [vmem:[#allocation3 + $0x20] sm:$0xff] %vm692, %v688
        %698 = vst.msk [vmem:[#allocation3 + $0x28] sm:$0xff] %vm692, %v689
        %699 = vst.msk [vmem:[#allocation3 + $0x30] sm:$0xff] %vm692, %v690
        %700 = vst.msk [vmem:[#allocation3 + $0x38] sm:$0xff] %vm692, %v691
      $region52: #{pointnet_forward.3} parent=47 // pred_fallthru
        _
      %v701 = vld [vmem:[%s4] sm:$0xf]
      %v702 = vld [vmem:[%s4 + $0x4] sm:$0xf]
      %v703 = vld [vmem:[%s4 + $0x8] sm:$0xf]
      %v704 = vld [vmem:[%s4 + $0xc] sm:$0xf]
      %v705 = vld [vmem:[%s4 + $0x10] sm:$0xf]
      %v706 = vld [vmem:[%s4 + $0x14] sm:$0xf]
      %v707 = vld [vmem:[%s4 + $0x18] sm:$0xf]
      %v708 = vld [vmem:[%s4 + $0x1c] sm:$0xf]
      %v709 = vld [vmem:[%s4 + $0x20] sm:$0xf]
      %v710 = vld [vmem:[%s4 + $0x24] sm:$0xf]
      %v711 = vld [vmem:[%s4 + $0x28] sm:$0xf]
      %v712 = vld [vmem:[%s4 + $0x2c] sm:$0xf]
      %v713 = vld [vmem:[%s4 + $0x30] sm:$0xf]
      %v714 = vld [vmem:[%s4 + $0x34] sm:$0xf]
      %v715 = vld [vmem:[%s4 + $0x38] sm:$0xf]
      %v716 = vld [vmem:[%s4 + $0x3c] sm:$0xf]
      %v717 = vld [vmem:[%s6] sm:$0xff]
      %v718 = vld [vmem:[%s6 + $0x8] sm:$0xff]
      %v719 = vld [vmem:[%s6 + $0x10] sm:$0xff]
      %v720 = vld [vmem:[%s6 + $0x18] sm:$0xff]
      %v721 = vld [vmem:[%s6 + $0x20] sm:$0xff]
      %v722 = vld [vmem:[%s6 + $0x28] sm:$0xff]
      %v723 = vld [vmem:[%s6 + $0x30] sm:$0xff]
      %v724 = vld [vmem:[%s6 + $0x38] sm:$0xff]
      %v725 = vld [vmem:[%s6 + $0x40] sm:$0xff]
      %v726 = vld [vmem:[%s6 + $0x48] sm:$0xff]
      %v727 = vld [vmem:[%s6 + $0x50] sm:$0xff]
      %v728 = vld [vmem:[%s6 + $0x58] sm:$0xff]
      %v729 = vld [vmem:[%s6 + $0x60] sm:$0xff]
      %v730 = vld [vmem:[%s6 + $0x68] sm:$0xff]
      %v731 = vld [vmem:[%s6 + $0x70] sm:$0xff]
      %v732 = vld [vmem:[%s6 + $0x78] sm:$0xff]
      %s733 = scalar_lea.vmem %s6, 128
      %v734 = vld [vmem:[%s733] sm:$0xff]
      %v735 = vld [vmem:[%s733 + $0x8] sm:$0xff]
      %v736 = vld [vmem:[%s733 + $0x10] sm:$0xff]
      %v737 = vld [vmem:[%s733 + $0x18] sm:$0xff]
      %v738 = vld [vmem:[%s733 + $0x20] sm:$0xff]
      %v739 = vld [vmem:[%s733 + $0x28] sm:$0xff]
      %v740 = vld [vmem:[%s733 + $0x30] sm:$0xff]
      %v741 = vld [vmem:[%s733 + $0x38] sm:$0xff]
      %v742 = vld [vmem:[%s733 + $0x40] sm:$0xff]
      %v743 = vld [vmem:[%s733 + $0x48] sm:$0xff]
      %v744 = vld [vmem:[%s733 + $0x50] sm:$0xff]
      %v745 = vld [vmem:[%s733 + $0x58] sm:$0xff]
      %v746 = vld [vmem:[%s733 + $0x60] sm:$0xff]
      %v747 = vld [vmem:[%s733 + $0x68] sm:$0xff]
      %v748 = vld [vmem:[%s733 + $0x70] sm:$0xff]
      %v749 = vld [vmem:[%s733 + $0x78] sm:$0xff]
      %v750 = vld [vmem:[%s318] sm:$0x3f]
      %vm751 = vcmask 1045504
      %v752 = vsel %vm751, %v750, 0.0
      %v753 = vpack.c.bf16 %v752, %v752
      %v754 = vld [vmem:[#allocation3] sm:$0xff]
      %v755 = vld [vmem:[#allocation3 + $0x8] sm:$0xff]
      %v756 = vld [vmem:[#allocation3 + $0x10] sm:$0xff]
      %v757 = vld [vmem:[#allocation3 + $0x18] sm:$0xff]
      %v758 = vld [vmem:[#allocation3 + $0x20] sm:$0xff]
      %v759 = vld [vmem:[#allocation3 + $0x28] sm:$0xff]
      %v760 = vld [vmem:[#allocation3 + $0x30] sm:$0xff]
      %v761 = vld [vmem:[#allocation3 + $0x38] sm:$0xff]
      %763 = vset.pattern.permute.xlu0 0
      %764 = vperm.xlu0 %763, %v717
      %v765 = vpop.permute.xlu0 %764
      %768 = vset.pattern.permute.xlu0 0
      %769 = vperm.xlu0 %768, %v718
      %v770 = vpop.permute.xlu0 %769
      %773 = vset.pattern.permute.xlu0 0
      %774 = vperm.xlu0 %773, %v719
      %v775 = vpop.permute.xlu0 %774
      %778 = vset.pattern.permute.xlu0 0
      %779 = vperm.xlu0 %778, %v720
      %v780 = vpop.permute.xlu0 %779
      %783 = vset.pattern.permute.xlu0 0
      %784 = vperm.xlu0 %783, %v721
      %v785 = vpop.permute.xlu0 %784
      %788 = vset.pattern.permute.xlu0 0
      %789 = vperm.xlu0 %788, %v722
      %v790 = vpop.permute.xlu0 %789
      %793 = vset.pattern.permute.xlu0 0
      %794 = vperm.xlu0 %793, %v723
      %v795 = vpop.permute.xlu0 %794
      %798 = vset.pattern.permute.xlu0 0
      %799 = vperm.xlu0 %798, %v724
      %v800 = vpop.permute.xlu0 %799
      %803 = vset.pattern.permute.xlu0 0
      %804 = vperm.xlu0 %803, %v725
      %v805 = vpop.permute.xlu0 %804
      %808 = vset.pattern.permute.xlu0 0
      %809 = vperm.xlu0 %808, %v726
      %v810 = vpop.permute.xlu0 %809
      %813 = vset.pattern.permute.xlu0 0
      %814 = vperm.xlu0 %813, %v727
      %v815 = vpop.permute.xlu0 %814
      %818 = vset.pattern.permute.xlu0 0
      %819 = vperm.xlu0 %818, %v728
      %v820 = vpop.permute.xlu0 %819
      %823 = vset.pattern.permute.xlu0 0
      %824 = vperm.xlu0 %823, %v729
      %v825 = vpop.permute.xlu0 %824
      %828 = vset.pattern.permute.xlu0 0
      %829 = vperm.xlu0 %828, %v730
      %v830 = vpop.permute.xlu0 %829
      %833 = vset.pattern.permute.xlu0 0
      %834 = vperm.xlu0 %833, %v731
      %v835 = vpop.permute.xlu0 %834
      %838 = vset.pattern.permute.xlu0 0
      %839 = vperm.xlu0 %838, %v732
      %v840 = vpop.permute.xlu0 %839
      %vm842 = vcmask 64512
      %v844 = vsel %vm842, %v754, 0
      %v847 = vsel %vm842, %v755, 0
      %v850 = vsel %vm842, %v756, 0
      %v853 = vsel %vm842, %v757, 0
      %v856 = vsel %vm842, %v758, 0
      %v859 = vsel %vm842, %v759, 0
      %v862 = vsel %vm842, %v760, 0
      %v865 = vsel %vm842, %v761, 0
      %vm867 = vcmask 1043456
      %v869 = vsel %vm867, %v753, 0
      %871 = vmatprep.subr.bf16.mxu0 0
      %872 = vmatpush1.bf16.msra.mxu0 %v869
      %873 = vmatprep.subr.bf16.mxu0 0
      %874 = vmatpush1.bf16.msra.mxu0 0
      %875 = vmatprep.subr.bf16.mxu0 0
      %876 = vmatpush1.bf16.msra.mxu0 0
      %877 = vmatprep.subr.bf16.mxu0 0
      %878 = vmatpush1.bf16.msra.mxu0 0
      %879 = vmatprep.subr.bf16.mxu0 0
      %880 = vmatpush1.bf16.msra.mxu0 0
      %881 = vmatprep.subr.bf16.mxu0 0
      %882 = vmatpush1.bf16.msra.mxu0 0
      %883 = vmatprep.subr.bf16.mxu0 0
      %884 = vmatpush1.bf16.msra.mxu0 0
      %885 = vmatprep.subr.bf16.mxu0 0
      %886 = vmatpush1.bf16.msra.mxu0 0
      %887 = vmatprep.subr.bf16.mxu0 0
      %888 = vmatpush1.bf16.msra.mxu0 0
      %889 = vmatprep.subr.bf16.mxu0 0
      %890 = vmatpush1.bf16.msra.mxu0 0
      %891 = vmatprep.subr.bf16.mxu0 0
      %892 = vmatpush1.bf16.msra.mxu0 0
      %893 = vmatprep.subr.bf16.mxu0 0
      %894 = vmatpush1.bf16.msra.mxu0 0
      %895 = vmatprep.subr.bf16.mxu0 0
      %896 = vmatpush1.bf16.msra.mxu0 0
      %897 = vmatprep.subr.bf16.mxu0 0
      %898 = vmatpush1.bf16.msra.mxu0 0
      %899 = vmatprep.subr.bf16.mxu0 0
      %900 = vmatpush1.bf16.msra.mxu0 0
      %901 = vmatprep.subr.bf16.mxu0 0
      %902 = vmatpush1.bf16.msra.mxu0 0
      %903 = vmatprep.mubr.bf16.mxu0 0
      %904 = vmatmul.mubr.bf16.gmra.mrb[0].mxu0 %v844
      %v905 = vpop.f32.mrb[0].mxu0
      %v906 = vadd.f32 %v765, %v905
      %v907 = vpop.f32.mrb[0].mxu0
      %v908 = vpop.f32.mrb[0].mxu0
      %v909 = vadd.f32 %v770, %v908
      %v910 = vpop.f32.mrb[0].mxu0
      %911 = vmatprep.mubr.bf16.mxu0 0
      %912 = vmatmul.mubr.bf16.gmra.mrb[0].mxu0 %v847
      %v913 = vpop.f32.mrb[0].mxu0
      %v914 = vadd.f32 %v775, %v913
      %v915 = vpop.f32.mrb[0].mxu0
      %v916 = vpop.f32.mrb[0].mxu0
      %v917 = vadd.f32 %v780, %v916
      %v918 = vpop.f32.mrb[0].mxu0
      %919 = vmatprep.mubr.bf16.mxu0 0
      %920 = vmatmul.mubr.bf16.gmra.mrb[0].mxu0 %v850
      %v921 = vpop.f32.mrb[0].mxu0
      %v922 = vadd.f32 %v785, %v921
      %v923 = vpop.f32.mrb[0].mxu0
      %v924 = vpop.f32.mrb[0].mxu0
      %v925 = vadd.f32 %v790, %v924
      %v926 = vpop.f32.mrb[0].mxu0
      %927 = vmatprep.mubr.bf16.mxu0 0
      %928 = vmatmul.mubr.bf16.gmra.mrb[0].mxu0 %v853
      %v929 = vpop.f32.mrb[0].mxu0
      %v930 = vadd.f32 %v795, %v929
      %v931 = vpop.f32.mrb[0].mxu0
      %v932 = vpop.f32.mrb[0].mxu0
      %v933 = vadd.f32 %v800, %v932
      %v934 = vpop.f32.mrb[0].mxu0
      %935 = vmatprep.mubr.bf16.mxu0 0
      %936 = vmatmul.mubr.bf16.gmra.mrb[0].mxu0 %v856
      %v937 = vpop.f32.mrb[0].mxu0
      %v938 = vadd.f32 %v805, %v937
      %v939 = vpop.f32.mrb[0].mxu0
      %v940 = vpop.f32.mrb[0].mxu0
      %v941 = vadd.f32 %v810, %v940
      %v942 = vpop.f32.mrb[0].mxu0
      %943 = vmatprep.mubr.bf16.mxu0 0
      %944 = vmatmul.mubr.bf16.gmra.mrb[0].mxu0 %v859
      %v945 = vpop.f32.mrb[0].mxu0
      %v946 = vadd.f32 %v815, %v945
      %v947 = vpop.f32.mrb[0].mxu0
      %v948 = vpop.f32.mrb[0].mxu0
      %v949 = vadd.f32 %v820, %v948
      %v950 = vpop.f32.mrb[0].mxu0
      %951 = vmatprep.mubr.bf16.mxu0 0
      %952 = vmatmul.mubr.bf16.gmra.mrb[0].mxu0 %v862
      %v953 = vpop.f32.mrb[0].mxu0
      %v954 = vadd.f32 %v825, %v953
      %v955 = vpop.f32.mrb[0].mxu0
      %v956 = vpop.f32.mrb[0].mxu0
      %v957 = vadd.f32 %v830, %v956
      %v958 = vpop.f32.mrb[0].mxu0
      %959 = vmatprep.mubr.bf16.mxu0 0
      %960 = vmatmul.mubr.bf16.gmra.mrb[0].mxu0 %v865
      %v961 = vpop.f32.mrb[0].mxu0
      %v962 = vadd.f32 %v835, %v961
      %v963 = vpop.f32.mrb[0].mxu0
      %v964 = vpop.f32.mrb[0].mxu0
      %v965 = vadd.f32 %v840, %v964
      %v966 = vpop.f32.mrb[0].mxu0
      %967 = vdwg.mxu0
      %v968 = vmax.f32 %v906, 0.0
      %v969 = vmax.f32 %v909, 0.0
      %v970 = vmax.f32 %v914, 0.0
      %v971 = vmax.f32 %v917, 0.0
      %v972 = vmax.f32 %v922, 0.0
      %v973 = vmax.f32 %v925, 0.0
      %v974 = vmax.f32 %v930, 0.0
      %v975 = vmax.f32 %v933, 0.0
      %v976 = vmax.f32 %v938, 0.0
      %v977 = vmax.f32 %v941, 0.0
      %v978 = vmax.f32 %v946, 0.0
      %v979 = vmax.f32 %v949, 0.0
      %v980 = vmax.f32 %v954, 0.0
      %v981 = vmax.f32 %v957, 0.0
      %v982 = vmax.f32 %v962, 0.0
      %v983 = vmax.f32 %v965, 0.0
      %v984 = vpack.c.bf16 %v969, %v968
      %v985 = vpack.c.bf16 %v971, %v970
      %v986 = vpack.c.bf16 %v973, %v972
      %v987 = vpack.c.bf16 %v975, %v974
      %v988 = vpack.c.bf16 %v977, %v976
      %v989 = vpack.c.bf16 %v979, %v978
      %v990 = vpack.c.bf16 %v981, %v980
      %v991 = vpack.c.bf16 %v983, %v982
      %993 = vset.pattern.permute.xlu0 0
      %994 = vperm.xlu0 %993, %v734
      %v995 = vpop.permute.xlu0 %994
      %998 = vset.pattern.permute.xlu0 0
      %999 = vperm.xlu0 %998, %v735
      %v1000 = vpop.permute.xlu0 %999
      %1003 = vset.pattern.permute.xlu0 0
      %1004 = vperm.xlu0 %1003, %v736
      %v1005 = vpop.permute.xlu0 %1004
      %1008 = vset.pattern.permute.xlu0 0
      %1009 = vperm.xlu0 %1008, %v737
      %v1010 = vpop.permute.xlu0 %1009
      %1013 = vset.pattern.permute.xlu0 0
      %1014 = vperm.xlu0 %1013, %v738
      %v1015 = vpop.permute.xlu0 %1014
      %1018 = vset.pattern.permute.xlu0 0
      %1019 = vperm.xlu0 %1018, %v739
      %v1020 = vpop.permute.xlu0 %1019
      %1023 = vset.pattern.permute.xlu0 0
      %1024 = vperm.xlu0 %1023, %v740
      %v1025 = vpop.permute.xlu0 %1024
      %1028 = vset.pattern.permute.xlu0 0
      %1029 = vperm.xlu0 %1028, %v741
      %v1030 = vpop.permute.xlu0 %1029
      %1033 = vset.pattern.permute.xlu0 0
      %1034 = vperm.xlu0 %1033, %v742
      %v1035 = vpop.permute.xlu0 %1034
      %1038 = vset.pattern.permute.xlu0 0
      %1039 = vperm.xlu0 %1038, %v743
      %v1040 = vpop.permute.xlu0 %1039
      %1043 = vset.pattern.permute.xlu0 0
      %1044 = vperm.xlu0 %1043, %v744
      %v1045 = vpop.permute.xlu0 %1044
      %1048 = vset.pattern.permute.xlu0 0
      %1049 = vperm.xlu0 %1048, %v745
      %v1050 = vpop.permute.xlu0 %1049
      %1053 = vset.pattern.permute.xlu0 0
      %1054 = vperm.xlu0 %1053, %v746
      %v1055 = vpop.permute.xlu0 %1054
      %1058 = vset.pattern.permute.xlu0 0
      %1059 = vperm.xlu0 %1058, %v747
      %v1060 = vpop.permute.xlu0 %1059
      %1063 = vset.pattern.permute.xlu0 0
      %1064 = vperm.xlu0 %1063, %v748
      %v1065 = vpop.permute.xlu0 %1064
      %1068 = vset.pattern.permute.xlu0 0
      %1069 = vperm.xlu0 %1068, %v749
      %v1070 = vpop.permute.xlu0 %1069
      %v1088 = vunpack.c.l.b16 %v701
      %v1089 = vunpack.c.l.b16 %v702
      %v1090 = vunpack.c.l.b16 %v703
      %v1091 = vunpack.c.l.b16 %v704
      %v1092 = vunpack.c.l.b16 %v705
      %v1093 = vunpack.c.l.b16 %v706
      %v1094 = vunpack.c.l.b16 %v707
      %v1095 = vunpack.c.l.b16 %v708
      %v1096 = vunpack.c.l.b16 %v709
      %v1097 = vunpack.c.l.b16 %v710
      %v1098 = vunpack.c.l.b16 %v711
      %v1099 = vunpack.c.l.b16 %v712
      %v1100 = vunpack.c.l.b16 %v713
      %v1101 = vunpack.c.l.b16 %v714
      %v1102 = vunpack.c.l.b16 %v715
      %v1103 = vunpack.c.l.b16 %v716
      %v1104 = vpack.c.b16 %v1089, %v1088
      %v1105 = vpack.c.b16 %v1091, %v1090
      %v1106 = vpack.c.b16 %v1093, %v1092
      %v1107 = vpack.c.b16 %v1095, %v1094
      %v1108 = vpack.c.b16 %v1097, %v1096
      %v1109 = vpack.c.b16 %v1099, %v1098
      %v1110 = vpack.c.b16 %v1101, %v1100
      %v1111 = vpack.c.b16 %v1103, %v1102
      %1120 = vmatprep.subr.bf16.mxu0 0
      %1121 = vmatpush1.bf16.msra.mxu0 %v984
      %1122 = vmatprep.subr.bf16.mxu0 0
      %1123 = vmatpush1.bf16.msra.mxu0 %v985
      %1124 = vmatprep.subr.bf16.mxu0 0
      %1125 = vmatpush1.bf16.msra.mxu0 %v986
      %1126 = vmatprep.subr.bf16.mxu0 0
      %1127 = vmatpush1.bf16.msra.mxu0 %v987
      %1128 = vmatprep.subr.bf16.mxu0 0
      %1129 = vmatpush1.bf16.msra.mxu0 %v988
      %1130 = vmatprep.subr.bf16.mxu0 0
      %1131 = vmatpush1.bf16.msra.mxu0 %v989
      %1132 = vmatprep.subr.bf16.mxu0 0
      %1133 = vmatpush1.bf16.msra.mxu0 %v990
      %1134 = vmatprep.subr.bf16.mxu0 0
      %1135 = vmatpush1.bf16.msra.mxu0 %v991
      %1136 = vmatprep.subr.bf16.mxu0 0
      %1137 = vmatpush1.bf16.msra.mxu0 0
      %1138 = vmatprep.subr.bf16.mxu0 0
      %1139 = vmatpush1.bf16.msra.mxu0 0
      %1140 = vmatprep.subr.bf16.mxu0 0
      %1141 = vmatpush1.bf16.msra.mxu0 0
      %1142 = vmatprep.subr.bf16.mxu0 0
      %1143 = vmatpush1.bf16.msra.mxu0 0
      %1144 = vmatprep.subr.bf16.mxu0 0
      %1145 = vmatpush1.bf16.msra.mxu0 0
      %1146 = vmatprep.subr.bf16.mxu0 0
      %1147 = vmatpush1.bf16.msra.mxu0 0
      %1148 = vmatprep.subr.bf16.mxu0 0
      %1149 = vmatpush1.bf16.msra.mxu0 0
      %1150 = vmatprep.subr.bf16.mxu0 0
      %1151 = vmatpush1.bf16.msra.mxu0 0
      %1152 = vmatprep.mubr.bf16.mxu0 0
      %1153 = vmatmul.mubr.bf16.gmra.mrb[0].mxu0 %v1104
      %v1154 = vpop.f32.mrb[0].mxu0
      %v1155 = vadd.f32 %v995, %v1154
      %v1156 = vpop.f32.mrb[0].mxu0
      %v1157 = vpop.f32.mrb[0].mxu0
      %v1158 = vadd.f32 %v1000, %v1157
      %v1159 = vpop.f32.mrb[0].mxu0
      %1160 = vmatprep.mubr.bf16.mxu0 0
      %1161 = vmatmul.mubr.bf16.gmra.mrb[0].mxu0 %v1105
      %v1162 = vpop.f32.mrb[0].mxu0
      %v1163 = vadd.f32 %v1005, %v1162
      %v1164 = vpop.f32.mrb[0].mxu0
      %v1165 = vpop.f32.mrb[0].mxu0
      %v1166 = vadd.f32 %v1010, %v1165
      %v1167 = vpop.f32.mrb[0].mxu0
      %1168 = vmatprep.mubr.bf16.mxu0 0
      %1169 = vmatmul.mubr.bf16.gmra.mrb[0].mxu0 %v1106
      %v1170 = vpop.f32.mrb[0].mxu0
      %v1171 = vadd.f32 %v1015, %v1170
      %v1172 = vpop.f32.mrb[0].mxu0
      %v1173 = vpop.f32.mrb[0].mxu0
      %v1174 = vadd.f32 %v1020, %v1173
      %v1175 = vpop.f32.mrb[0].mxu0
      %1176 = vmatprep.mubr.bf16.mxu0 0
      %1177 = vmatmul.mubr.bf16.gmra.mrb[0].mxu0 %v1107
      %v1178 = vpop.f32.mrb[0].mxu0
      %v1179 = vadd.f32 %v1025, %v1178
      %v1180 = vpop.f32.mrb[0].mxu0
      %v1181 = vpop.f32.mrb[0].mxu0
      %v1182 = vadd.f32 %v1030, %v1181
      %v1183 = vpop.f32.mrb[0].mxu0
      %1184 = vmatprep.mubr.bf16.mxu0 0
      %1185 = vmatmul.mubr.bf16.gmra.mrb[0].mxu0 %v1108
      %v1186 = vpop.f32.mrb[0].mxu0
      %v1187 = vadd.f32 %v1035, %v1186
      %v1188 = vpop.f32.mrb[0].mxu0
      %v1189 = vpop.f32.mrb[0].mxu0
      %v1190 = vadd.f32 %v1040, %v1189
      %v1191 = vpop.f32.mrb[0].mxu0
      %1192 = vmatprep.mubr.bf16.mxu0 0
      %1193 = vmatmul.mubr.bf16.gmra.mrb[0].mxu0 %v1109
      %v1194 = vpop.f32.mrb[0].mxu0
      %v1195 = vadd.f32 %v1045, %v1194
      %v1196 = vpop.f32.mrb[0].mxu0
      %v1197 = vpop.f32.mrb[0].mxu0
      %v1198 = vadd.f32 %v1050, %v1197
      %v1199 = vpop.f32.mrb[0].mxu0
      %1200 = vmatprep.mubr.bf16.mxu0 0
      %1201 = vmatmul.mubr.bf16.gmra.mrb[0].mxu0 %v1110
      %v1202 = vpop.f32.mrb[0].mxu0
      %v1203 = vadd.f32 %v1055, %v1202
      %v1204 = vpop.f32.mrb[0].mxu0
      %v1205 = vpop.f32.mrb[0].mxu0
      %v1206 = vadd.f32 %v1060, %v1205
      %v1207 = vpop.f32.mrb[0].mxu0
      %1208 = vmatprep.mubr.bf16.mxu0 0
      %1209 = vmatmul.mubr.bf16.gmra.mrb[0].mxu0 %v1111
      %v1210 = vpop.f32.mrb[0].mxu0
      %v1211 = vadd.f32 %v1065, %v1210
      %v1212 = vpop.f32.mrb[0].mxu0
      %v1213 = vpop.f32.mrb[0].mxu0
      %v1214 = vadd.f32 %v1070, %v1213
      %v1215 = vpop.f32.mrb[0].mxu0
      %1216 = vdwg.mxu0
      %v1217 = vmax.f32 %v1155, 0.0
      %v1218 = vmax.f32 %v1158, 0.0
      %v1219 = vmax.f32 %v1163, 0.0
      %v1220 = vmax.f32 %v1166, 0.0
      %v1221 = vmax.f32 %v1171, 0.0
      %v1222 = vmax.f32 %v1174, 0.0
      %v1223 = vmax.f32 %v1179, 0.0
      %v1224 = vmax.f32 %v1182, 0.0
      %v1225 = vmax.f32 %v1187, 0.0
      %v1226 = vmax.f32 %v1190, 0.0
      %v1227 = vmax.f32 %v1195, 0.0
      %v1228 = vmax.f32 %v1198, 0.0
      %v1229 = vmax.f32 %v1203, 0.0
      %v1230 = vmax.f32 %v1206, 0.0
      %v1231 = vmax.f32 %v1211, 0.0
      %v1232 = vmax.f32 %v1214, 0.0
      %v1233 = vld [vmem:[#allocation2] sm:$0xff]
      %v1234 = vld [vmem:[#allocation2 + $0x8] sm:$0xff]
      %v1235 = vld [vmem:[#allocation2 + $0x10] sm:$0xff]
      %v1236 = vld [vmem:[#allocation2 + $0x18] sm:$0xff]
      %v1237 = vld [vmem:[#allocation2 + $0x20] sm:$0xff]
      %v1238 = vld [vmem:[#allocation2 + $0x28] sm:$0xff]
      %v1239 = vld [vmem:[#allocation2 + $0x30] sm:$0xff]
      %v1240 = vld [vmem:[#allocation2 + $0x38] sm:$0xff]
      %v1241 = vld [vmem:[#allocation2 + $0x40] sm:$0xff]
      %v1242 = vld [vmem:[#allocation2 + $0x48] sm:$0xff]
      %v1243 = vld [vmem:[#allocation2 + $0x50] sm:$0xff]
      %v1244 = vld [vmem:[#allocation2 + $0x58] sm:$0xff]
      %v1245 = vld [vmem:[#allocation2 + $0x60] sm:$0xff]
      %v1246 = vld [vmem:[#allocation2 + $0x68] sm:$0xff]
      %v1247 = vld [vmem:[#allocation2 + $0x70] sm:$0xff]
      %v1248 = vld [vmem:[#allocation2 + $0x78] sm:$0xff]
      %vm1249 = vcmask 130048
      %v1250 = vsel %vm1249, %v1217, -inf
      %1251 = vmax.xlane.f32.xlu0 %v1250
      %v1252 = vpop.xlane.xlu0 %1251
      %v1253 = vsel %vm1249, %v1218, -inf
      %1254 = vmax.xlane.f32.xlu0 %v1253
      %v1255 = vpop.xlane.xlu0 %1254
      %v1256 = vsel %vm1249, %v1219, -inf
      %1257 = vmax.xlane.f32.xlu0 %v1256
      %v1258 = vpop.xlane.xlu0 %1257
      %v1259 = vsel %vm1249, %v1220, -inf
      %1260 = vmax.xlane.f32.xlu0 %v1259
      %v1261 = vpop.xlane.xlu0 %1260
      %v1262 = vsel %vm1249, %v1221, -inf
      %1263 = vmax.xlane.f32.xlu0 %v1262
      %v1264 = vpop.xlane.xlu0 %1263
      %v1265 = vsel %vm1249, %v1222, -inf
      %1266 = vmax.xlane.f32.xlu0 %v1265
      %v1267 = vpop.xlane.xlu0 %1266
      %v1268 = vsel %vm1249, %v1223, -inf
      %1269 = vmax.xlane.f32.xlu0 %v1268
      %v1270 = vpop.xlane.xlu0 %1269
      %v1271 = vsel %vm1249, %v1224, -inf
      %1272 = vmax.xlane.f32.xlu0 %v1271
      %v1273 = vpop.xlane.xlu0 %1272
      %v1274 = vsel %vm1249, %v1225, -inf
      %1275 = vmax.xlane.f32.xlu0 %v1274
      %v1276 = vpop.xlane.xlu0 %1275
      %v1277 = vsel %vm1249, %v1226, -inf
      %1278 = vmax.xlane.f32.xlu0 %v1277
      %v1279 = vpop.xlane.xlu0 %1278
      %v1280 = vsel %vm1249, %v1227, -inf
      %1281 = vmax.xlane.f32.xlu0 %v1280
      %v1282 = vpop.xlane.xlu0 %1281
      %v1283 = vsel %vm1249, %v1228, -inf
      %1284 = vmax.xlane.f32.xlu0 %v1283
      %v1285 = vpop.xlane.xlu0 %1284
      %v1286 = vsel %vm1249, %v1229, -inf
      %1287 = vmax.xlane.f32.xlu0 %v1286
      %v1288 = vpop.xlane.xlu0 %1287
      %v1289 = vsel %vm1249, %v1230, -inf
      %1290 = vmax.xlane.f32.xlu0 %v1289
      %v1291 = vpop.xlane.xlu0 %1290
      %v1292 = vsel %vm1249, %v1231, -inf
      %1293 = vmax.xlane.f32.xlu0 %v1292
      %v1294 = vpop.xlane.xlu0 %1293
      %v1295 = vsel %vm1249, %v1232, -inf
      %1296 = vmax.xlane.f32.xlu0 %v1295
      %v1297 = vpop.xlane.xlu0 %1296
      %v1298 = vmax.f32 %v1233, %v1252
      %v1299 = vmax.f32 %v1234, %v1255
      %v1300 = vmax.f32 %v1235, %v1258
      %v1301 = vmax.f32 %v1236, %v1261
      %v1302 = vmax.f32 %v1237, %v1264
      %v1303 = vmax.f32 %v1238, %v1267
      %v1304 = vmax.f32 %v1239, %v1270
      %v1305 = vmax.f32 %v1240, %v1273
      %v1306 = vmax.f32 %v1241, %v1276
      %v1307 = vmax.f32 %v1242, %v1279
      %v1308 = vmax.f32 %v1243, %v1282
      %v1309 = vmax.f32 %v1244, %v1285
      %v1310 = vmax.f32 %v1245, %v1288
      %v1311 = vmax.f32 %v1246, %v1291
      %v1312 = vmax.f32 %v1247, %v1294
      %v1313 = vmax.f32 %v1248, %v1297
      %vm1314 = vcmask 7168
      %1315 = vst.msk [vmem:[#allocation2] sm:$0xff] %vm1314, %v1298
      %1316 = vst.msk [vmem:[#allocation2 + $0x8] sm:$0xff] %vm1314, %v1299
      %1317 = vst.msk [vmem:[#allocation2 + $0x10] sm:$0xff] %vm1314, %v1300
      %1318 = vst.msk [vmem:[#allocation2 + $0x18] sm:$0xff] %vm1314, %v1301
      %1319 = vst.msk [vmem:[#allocation2 + $0x20] sm:$0xff] %vm1314, %v1302
      %1320 = vst.msk [vmem:[#allocation2 + $0x28] sm:$0xff] %vm1314, %v1303
      %1321 = vst.msk [vmem:[#allocation2 + $0x30] sm:$0xff] %vm1314, %v1304
      %1322 = vst.msk [vmem:[#allocation2 + $0x38] sm:$0xff] %vm1314, %v1305
      %1323 = vst.msk [vmem:[#allocation2 + $0x40] sm:$0xff] %vm1314, %v1306
      %1324 = vst.msk [vmem:[#allocation2 + $0x48] sm:$0xff] %vm1314, %v1307
      %1325 = vst.msk [vmem:[#allocation2 + $0x50] sm:$0xff] %vm1314, %v1308
      %1326 = vst.msk [vmem:[#allocation2 + $0x58] sm:$0xff] %vm1314, %v1309
      %1327 = vst.msk [vmem:[#allocation2 + $0x60] sm:$0xff] %vm1314, %v1310
      %1328 = vst.msk [vmem:[#allocation2 + $0x68] sm:$0xff] %vm1314, %v1311
      %1329 = vst.msk [vmem:[#allocation2 + $0x70] sm:$0xff] %vm1314, %v1312
      %1330 = vst.msk [vmem:[#allocation2 + $0x78] sm:$0xff] %vm1314, %v1313
      // Predicated region
      $region53: #{pointnet_forward.3} parent=47 // pred_check
        %p1331 = pneg %p332
      $region54: #{pointnet_forward.3} parent=47 // pred_check_branch
        %1333 = sbr.rel (%p1331) target = $region56
      $region55: #{pointnet_forward.3} parent=47 // pred_region
        %v1334 = vld [vmem:[#allocation2] sm:$0xff]
        %v1335 = vld [vmem:[#allocation2 + $0x8] sm:$0xff]
        %v1336 = vld [vmem:[#allocation2 + $0x10] sm:$0xff]
        %v1337 = vld [vmem:[#allocation2 + $0x18] sm:$0xff]
        %v1338 = vld [vmem:[#allocation2 + $0x20] sm:$0xff]
        %v1339 = vld [vmem:[#allocation2 + $0x28] sm:$0xff]
        %v1340 = vld [vmem:[#allocation2 + $0x30] sm:$0xff]
        %v1341 = vld [vmem:[#allocation2 + $0x38] sm:$0xff]
        %v1342 = vld [vmem:[#allocation2 + $0x40] sm:$0xff]
        %v1343 = vld [vmem:[#allocation2 + $0x48] sm:$0xff]
        %v1344 = vld [vmem:[#allocation2 + $0x50] sm:$0xff]
        %v1345 = vld [vmem:[#allocation2 + $0x58] sm:$0xff]
        %v1346 = vld [vmem:[#allocation2 + $0x60] sm:$0xff]
        %v1347 = vld [vmem:[#allocation2 + $0x68] sm:$0xff]
        %v1348 = vld [vmem:[#allocation2 + $0x70] sm:$0xff]
        %v1349 = vld [vmem:[#allocation2 + $0x78] sm:$0xff]
        %v1350 = vpack.c.bf16 %v1335, %v1334
        %v1351 = vpack.c.bf16 %v1337, %v1336
        %v1352 = vpack.c.bf16 %v1339, %v1338
        %v1353 = vpack.c.bf16 %v1341, %v1340
        %v1354 = vpack.c.bf16 %v1343, %v1342
        %v1355 = vpack.c.bf16 %v1345, %v1344
        %v1356 = vpack.c.bf16 %v1347, %v1346
        %v1357 = vpack.c.bf16 %v1349, %v1348
        %v1358 = vld [vmem:[%s326] sm:$0xff]
        %v1359 = vpack.c.bf16 %v1358, %v1358
        %s1360 = scalar_lea.vmem %s4, 64
        %v1361 = vld [vmem:[%s1360] sm:$0xf]
        %v1362 = vld [vmem:[%s1360 + $0x4] sm:$0xf]
        %v1363 = vld [vmem:[%s1360 + $0x8] sm:$0xf]
        %v1364 = vld [vmem:[%s1360 + $0xc] sm:$0xf]
        %v1365 = vld [vmem:[%s1360 + $0x10] sm:$0xf]
        %v1366 = vld [vmem:[%s1360 + $0x14] sm:$0xf]
        %v1367 = vld [vmem:[%s1360 + $0x18] sm:$0xf]
        %v1368 = vld [vmem:[%s1360 + $0x1c] sm:$0xf]
        %v1369 = vld [vmem:[%s1360 + $0x20] sm:$0xf]
        %v1370 = vld [vmem:[%s1360 + $0x24] sm:$0xf]
        %v1371 = vld [vmem:[%s1360 + $0x28] sm:$0xf]
        %v1372 = vld [vmem:[%s1360 + $0x2c] sm:$0xf]
        %v1373 = vld [vmem:[%s1360 + $0x30] sm:$0xf]
        %v1374 = vld [vmem:[%s1360 + $0x34] sm:$0xf]
        %v1375 = vld [vmem:[%s1360 + $0x38] sm:$0xf]
        %v1376 = vld [vmem:[%s1360 + $0x3c] sm:$0xf]
        %v1377 = vld [vmem:[%s5] sm:$0xf]
        %v1378 = vld [vmem:[%s5 + $0x4] sm:$0xf]
        %v1379 = vld [vmem:[%s5 + $0x8] sm:$0xf]
        %v1380 = vld [vmem:[%s5 + $0xc] sm:$0xf]
        %v1381 = vld [vmem:[%s5 + $0x10] sm:$0xf]
        %v1382 = vld [vmem:[%s5 + $0x14] sm:$0xf]
        %v1383 = vld [vmem:[%s5 + $0x18] sm:$0xf]
        %v1384 = vld [vmem:[%s5 + $0x1c] sm:$0xf]
        %v1385 = vld [vmem:[%s5 + $0x20] sm:$0xf]
        %v1386 = vld [vmem:[%s5 + $0x24] sm:$0xf]
        %v1387 = vld [vmem:[%s5 + $0x28] sm:$0xf]
        %v1388 = vld [vmem:[%s5 + $0x2c] sm:$0xf]
        %v1389 = vld [vmem:[%s5 + $0x30] sm:$0xf]
        %v1390 = vld [vmem:[%s5 + $0x34] sm:$0xf]
        %v1391 = vld [vmem:[%s5 + $0x38] sm:$0xf]
        %v1392 = vld [vmem:[%s5 + $0x3c] sm:$0xf]
        %v1409 = vunpack.c.l.b16 %v1377
        %v1410 = vunpack.c.l.b16 %v1378
        %v1411 = vunpack.c.l.b16 %v1379
        %v1412 = vunpack.c.l.b16 %v1380
        %v1413 = vunpack.c.l.b16 %v1381
        %v1414 = vunpack.c.l.b16 %v1382
        %v1415 = vunpack.c.l.b16 %v1383
        %v1416 = vunpack.c.l.b16 %v1384
        %v1417 = vunpack.c.l.b16 %v1385
        %v1418 = vunpack.c.l.b16 %v1386
        %v1419 = vunpack.c.l.b16 %v1387
        %v1420 = vunpack.c.l.b16 %v1388
        %v1421 = vunpack.c.l.b16 %v1389
        %v1422 = vunpack.c.l.b16 %v1390
        %v1423 = vunpack.c.l.b16 %v1391
        %v1424 = vunpack.c.l.b16 %v1392
        %v1425 = vpack.c.b16 %v1410, %v1409
        %v1426 = vpack.c.b16 %v1412, %v1411
        %v1427 = vpack.c.b16 %v1414, %v1413
        %v1428 = vpack.c.b16 %v1416, %v1415
        %v1429 = vpack.c.b16 %v1418, %v1417
        %v1430 = vpack.c.b16 %v1420, %v1419
        %v1431 = vpack.c.b16 %v1422, %v1421
        %v1432 = vpack.c.b16 %v1424, %v1423
        %v1434 = vsel %vm842, %v1425, 0
        %v1437 = vsel %vm842, %v1426, 0
        %v1440 = vsel %vm842, %v1427, 0
        %v1443 = vsel %vm842, %v1428, 0
        %v1446 = vsel %vm842, %v1429, 0
        %v1449 = vsel %vm842, %v1430, 0
        %v1452 = vsel %vm842, %v1431, 0
        %v1455 = vsel %vm842, %v1432, 0
        %v1458 = vsel %vm867, %v1359, 0
        %1460 = vmatprep.subr.bf16.mxu0 0
        %1461 = vmatpush1.bf16.msra.mxu0 %v1458
        %1462 = vmatprep.subr.bf16.mxu0 0
        %1463 = vmatpush1.bf16.msra.mxu0 0
        %1464 = vmatprep.subr.bf16.mxu0 0
        %1465 = vmatpush1.bf16.msra.mxu0 0
        %1466 = vmatprep.subr.bf16.mxu0 0
        %1467 = vmatpush1.bf16.msra.mxu0 0
        %1468 = vmatprep.subr.bf16.mxu0 0
        %1469 = vmatpush1.bf16.msra.mxu0 0
        %1470 = vmatprep.subr.bf16.mxu0 0
        %1471 = vmatpush1.bf16.msra.mxu0 0
        %1472 = vmatprep.subr.bf16.mxu0 0
        %1473 = vmatpush1.bf16.msra.mxu0 0
        %1474 = vmatprep.subr.bf16.mxu0 0
        %1475 = vmatpush1.bf16.msra.mxu0 0
        %1476 = vmatprep.subr.bf16.mxu0 0
        %1477 = vmatpush1.bf16.msra.mxu0 0
        %1478 = vmatprep.subr.bf16.mxu0 0
        %1479 = vmatpush1.bf16.msra.mxu0 0
        %1480 = vmatprep.subr.bf16.mxu0 0
        %1481 = vmatpush1.bf16.msra.mxu0 0
        %1482 = vmatprep.subr.bf16.mxu0 0
        %1483 = vmatpush1.bf16.msra.mxu0 0
        %1484 = vmatprep.subr.bf16.mxu0 0
        %1485 = vmatpush1.bf16.msra.mxu0 0
        %1486 = vmatprep.subr.bf16.mxu0 0
        %1487 = vmatpush1.bf16.msra.mxu0 0
        %1488 = vmatprep.subr.bf16.mxu0 0
        %1489 = vmatpush1.bf16.msra.mxu0 0
        %1490 = vmatprep.subr.bf16.mxu0 0
        %1491 = vmatpush1.bf16.msra.mxu0 0
        %1492 = vmatprep.mubr.bf16.mxu0 0
        %1493 = vmatmul.mubr.bf16.gmra.mrb[0].mxu0 %v1434
        %v1494 = vpop.f32.mrb[0].mxu0
        %v1495 = vadd.f32 0.0, %v1494
        %v1496 = vpop.f32.mrb[0].mxu0
        %v1497 = vpop.f32.mrb[0].mxu0
        %v1498 = vadd.f32 0.0, %v1497
        %v1499 = vpop.f32.mrb[0].mxu0
        %1500 = vmatprep.mubr.bf16.mxu0 0
        %1501 = vmatmul.mubr.bf16.gmra.mrb[0].mxu0 %v1437
        %v1502 = vpop.f32.mrb[0].mxu0
        %v1503 = vadd.f32 0.0, %v1502
        %v1504 = vpop.f32.mrb[0].mxu0
        %v1505 = vpop.f32.mrb[0].mxu0
        %v1506 = vadd.f32 0.0, %v1505
        %v1507 = vpop.f32.mrb[0].mxu0
        %1508 = vmatprep.mubr.bf16.mxu0 0
        %1509 = vmatmul.mubr.bf16.gmra.mrb[0].mxu0 %v1440
        %v1510 = vpop.f32.mrb[0].mxu0
        %v1511 = vadd.f32 0.0, %v1510
        %v1512 = vpop.f32.mrb[0].mxu0
        %v1513 = vpop.f32.mrb[0].mxu0
        %v1514 = vadd.f32 0.0, %v1513
        %v1515 = vpop.f32.mrb[0].mxu0
        %1516 = vmatprep.mubr.bf16.mxu0 0
        %1517 = vmatmul.mubr.bf16.gmra.mrb[0].mxu0 %v1443
        %v1518 = vpop.f32.mrb[0].mxu0
        %v1519 = vadd.f32 0.0, %v1518
        %v1520 = vpop.f32.mrb[0].mxu0
        %v1521 = vpop.f32.mrb[0].mxu0
        %v1522 = vadd.f32 0.0, %v1521
        %v1523 = vpop.f32.mrb[0].mxu0
        %1524 = vmatprep.mubr.bf16.mxu0 0
        %1525 = vmatmul.mubr.bf16.gmra.mrb[0].mxu0 %v1446
        %v1526 = vpop.f32.mrb[0].mxu0
        %v1527 = vadd.f32 0.0, %v1526
        %v1528 = vpop.f32.mrb[0].mxu0
        %v1529 = vpop.f32.mrb[0].mxu0
        %v1530 = vadd.f32 0.0, %v1529
        %v1531 = vpop.f32.mrb[0].mxu0
        %1532 = vmatprep.mubr.bf16.mxu0 0
        %1533 = vmatmul.mubr.bf16.gmra.mrb[0].mxu0 %v1449
        %v1534 = vpop.f32.mrb[0].mxu0
        %v1535 = vadd.f32 0.0, %v1534
        %v1536 = vpop.f32.mrb[0].mxu0
        %v1537 = vpop.f32.mrb[0].mxu0
        %v1538 = vadd.f32 0.0, %v1537
        %v1539 = vpop.f32.mrb[0].mxu0
        %1540 = vmatprep.mubr.bf16.mxu0 0
        %1541 = vmatmul.mubr.bf16.gmra.mrb[0].mxu0 %v1452
        %v1542 = vpop.f32.mrb[0].mxu0
        %v1543 = vadd.f32 0.0, %v1542
        %v1544 = vpop.f32.mrb[0].mxu0
        %v1545 = vpop.f32.mrb[0].mxu0
        %v1546 = vadd.f32 0.0, %v1545
        %v1547 = vpop.f32.mrb[0].mxu0
        %1548 = vmatprep.mubr.bf16.mxu0 0
        %1549 = vmatmul.mubr.bf16.gmra.mrb[0].mxu0 %v1455
        %v1550 = vpop.f32.mrb[0].mxu0
        %v1551 = vadd.f32 0.0, %v1550
        %v1552 = vpop.f32.mrb[0].mxu0
        %v1553 = vpop.f32.mrb[0].mxu0
        %v1554 = vadd.f32 0.0, %v1553
        %v1555 = vpop.f32.mrb[0].mxu0
        %1556 = vdwg.mxu0
        %v1573 = vunpack.c.l.b16 %v1361
        %v1574 = vunpack.c.l.b16 %v1362
        %v1575 = vunpack.c.l.b16 %v1363
        %v1576 = vunpack.c.l.b16 %v1364
        %v1577 = vunpack.c.l.b16 %v1365
        %v1578 = vunpack.c.l.b16 %v1366
        %v1579 = vunpack.c.l.b16 %v1367
        %v1580 = vunpack.c.l.b16 %v1368
        %v1581 = vunpack.c.l.b16 %v1369
        %v1582 = vunpack.c.l.b16 %v1370
        %v1583 = vunpack.c.l.b16 %v1371
        %v1584 = vunpack.c.l.b16 %v1372
        %v1585 = vunpack.c.l.b16 %v1373
        %v1586 = vunpack.c.l.b16 %v1374
        %v1587 = vunpack.c.l.b16 %v1375
        %v1588 = vunpack.c.l.b16 %v1376
        %v1589 = vpack.c.b16 %v1574, %v1573
        %v1590 = vpack.c.b16 %v1576, %v1575
        %v1591 = vpack.c.b16 %v1578, %v1577
        %v1592 = vpack.c.b16 %v1580, %v1579
        %v1593 = vpack.c.b16 %v1582, %v1581
        %v1594 = vpack.c.b16 %v1584, %v1583
        %v1595 = vpack.c.b16 %v1586, %v1585
        %v1596 = vpack.c.b16 %v1588, %v1587
        %1605 = vmatprep.subr.bf16.mxu0 0
        %1606 = vmatpush1.bf16.msra.mxu0 %v1350
        %1607 = vmatprep.subr.bf16.mxu0 0
        %1608 = vmatpush1.bf16.msra.mxu0 %v1351
        %1609 = vmatprep.subr.bf16.mxu0 0
        %1610 = vmatpush1.bf16.msra.mxu0 %v1352
        %1611 = vmatprep.subr.bf16.mxu0 0
        %1612 = vmatpush1.bf16.msra.mxu0 %v1353
        %1613 = vmatprep.subr.bf16.mxu0 0
        %1614 = vmatpush1.bf16.msra.mxu0 %v1354
        %1615 = vmatprep.subr.bf16.mxu0 0
        %1616 = vmatpush1.bf16.msra.mxu0 %v1355
        %1617 = vmatprep.subr.bf16.mxu0 0
        %1618 = vmatpush1.bf16.msra.mxu0 %v1356
        %1619 = vmatprep.subr.bf16.mxu0 0
        %1620 = vmatpush1.bf16.msra.mxu0 %v1357
        %1621 = vmatprep.subr.bf16.mxu0 0
        %1622 = vmatpush1.bf16.msra.mxu0 0
        %1623 = vmatprep.subr.bf16.mxu0 0
        %1624 = vmatpush1.bf16.msra.mxu0 0
        %1625 = vmatprep.subr.bf16.mxu0 0
        %1626 = vmatpush1.bf16.msra.mxu0 0
        %1627 = vmatprep.subr.bf16.mxu0 0
        %1628 = vmatpush1.bf16.msra.mxu0 0
        %1629 = vmatprep.subr.bf16.mxu0 0
        %1630 = vmatpush1.bf16.msra.mxu0 0
        %1631 = vmatprep.subr.bf16.mxu0 0
        %1632 = vmatpush1.bf16.msra.mxu0 0
        %1633 = vmatprep.subr.bf16.mxu0 0
        %1634 = vmatpush1.bf16.msra.mxu0 0
        %1635 = vmatprep.subr.bf16.mxu0 0
        %1636 = vmatpush1.bf16.msra.mxu0 0
        %1637 = vmatprep.mubr.bf16.mxu0 0
        %1638 = vmatmul.mubr.bf16.gmra.mrb[0].mxu0 %v1589
        %v1639 = vpop.f32.mrb[0].mxu0
        %v1640 = vadd.f32 %v1495, %v1639
        %v1641 = vpop.f32.mrb[0].mxu0
        %v1642 = vpop.f32.mrb[0].mxu0
        %v1643 = vadd.f32 %v1498, %v1642
        %v1644 = vpop.f32.mrb[0].mxu0
        %1645 = vmatprep.mubr.bf16.mxu0 0
        %1646 = vmatmul.mubr.bf16.gmra.mrb[0].mxu0 %v1590
        %v1647 = vpop.f32.mrb[0].mxu0
        %v1648 = vadd.f32 %v1503, %v1647
        %v1649 = vpop.f32.mrb[0].mxu0
        %v1650 = vpop.f32.mrb[0].mxu0
        %v1651 = vadd.f32 %v1506, %v1650
        %v1652 = vpop.f32.mrb[0].mxu0
        %1653 = vmatprep.mubr.bf16.mxu0 0
        %1654 = vmatmul.mubr.bf16.gmra.mrb[0].mxu0 %v1591
        %v1655 = vpop.f32.mrb[0].mxu0
        %v1656 = vadd.f32 %v1511, %v1655
        %v1657 = vpop.f32.mrb[0].mxu0
        %v1658 = vpop.f32.mrb[0].mxu0
        %v1659 = vadd.f32 %v1514, %v1658
        %v1660 = vpop.f32.mrb[0].mxu0
        %1661 = vmatprep.mubr.bf16.mxu0 0
        %1662 = vmatmul.mubr.bf16.gmra.mrb[0].mxu0 %v1592
        %v1663 = vpop.f32.mrb[0].mxu0
        %v1664 = vadd.f32 %v1519, %v1663
        %v1665 = vpop.f32.mrb[0].mxu0
        %v1666 = vpop.f32.mrb[0].mxu0
        %v1667 = vadd.f32 %v1522, %v1666
        %v1668 = vpop.f32.mrb[0].mxu0
        %1669 = vmatprep.mubr.bf16.mxu0 0
        %1670 = vmatmul.mubr.bf16.gmra.mrb[0].mxu0 %v1593
        %v1671 = vpop.f32.mrb[0].mxu0
        %v1672 = vadd.f32 %v1527, %v1671
        %v1673 = vpop.f32.mrb[0].mxu0
        %v1674 = vpop.f32.mrb[0].mxu0
        %v1675 = vadd.f32 %v1530, %v1674
        %v1676 = vpop.f32.mrb[0].mxu0
        %1677 = vmatprep.mubr.bf16.mxu0 0
        %1678 = vmatmul.mubr.bf16.gmra.mrb[0].mxu0 %v1594
        %v1679 = vpop.f32.mrb[0].mxu0
        %v1680 = vadd.f32 %v1535, %v1679
        %v1681 = vpop.f32.mrb[0].mxu0
        %v1682 = vpop.f32.mrb[0].mxu0
        %v1683 = vadd.f32 %v1538, %v1682
        %v1684 = vpop.f32.mrb[0].mxu0
        %1685 = vmatprep.mubr.bf16.mxu0 0
        %1686 = vmatmul.mubr.bf16.gmra.mrb[0].mxu0 %v1595
        %v1687 = vpop.f32.mrb[0].mxu0
        %v1688 = vadd.f32 %v1543, %v1687
        %v1689 = vpop.f32.mrb[0].mxu0
        %v1690 = vpop.f32.mrb[0].mxu0
        %v1691 = vadd.f32 %v1546, %v1690
        %v1692 = vpop.f32.mrb[0].mxu0
        %1693 = vmatprep.mubr.bf16.mxu0 0
        %1694 = vmatmul.mubr.bf16.gmra.mrb[0].mxu0 %v1596
        %v1695 = vpop.f32.mrb[0].mxu0
        %v1696 = vadd.f32 %v1551, %v1695
        %v1697 = vpop.f32.mrb[0].mxu0
        %v1698 = vpop.f32.mrb[0].mxu0
        %v1699 = vadd.f32 %v1554, %v1698
        %v1700 = vpop.f32.mrb[0].mxu0
        %1701 = vdwg.mxu0
        %s1702 = scalar_lea.vmem %s6, 256
        %v1703 = vld [vmem:[%s1702] sm:$0xff]
        %v1704 = vld [vmem:[%s1702 + $0x8] sm:$0xff]
        %v1705 = vld [vmem:[%s1702 + $0x10] sm:$0xff]
        %v1706 = vld [vmem:[%s1702 + $0x18] sm:$0xff]
        %v1707 = vld [vmem:[%s1702 + $0x20] sm:$0xff]
        %v1708 = vld [vmem:[%s1702 + $0x28] sm:$0xff]
        %v1709 = vld [vmem:[%s1702 + $0x30] sm:$0xff]
        %v1710 = vld [vmem:[%s1702 + $0x38] sm:$0xff]
        %v1711 = vld [vmem:[%s1702 + $0x40] sm:$0xff]
        %v1712 = vld [vmem:[%s1702 + $0x48] sm:$0xff]
        %v1713 = vld [vmem:[%s1702 + $0x50] sm:$0xff]
        %v1714 = vld [vmem:[%s1702 + $0x58] sm:$0xff]
        %v1715 = vld [vmem:[%s1702 + $0x60] sm:$0xff]
        %v1716 = vld [vmem:[%s1702 + $0x68] sm:$0xff]
        %v1717 = vld [vmem:[%s1702 + $0x70] sm:$0xff]
        %v1718 = vld [vmem:[%s1702 + $0x78] sm:$0xff]
        %v1719 = vadd.f32 %v1640, %v1703
        %v1720 = vadd.f32 %v1643, %v1704
        %v1721 = vadd.f32 %v1648, %v1705
        %v1722 = vadd.f32 %v1651, %v1706
        %v1723 = vadd.f32 %v1656, %v1707
        %v1724 = vadd.f32 %v1659, %v1708
        %v1725 = vadd.f32 %v1664, %v1709
        %v1726 = vadd.f32 %v1667, %v1710
        %v1727 = vadd.f32 %v1672, %v1711
        %v1728 = vadd.f32 %v1675, %v1712
        %v1729 = vadd.f32 %v1680, %v1713
        %v1730 = vadd.f32 %v1683, %v1714
        %v1731 = vadd.f32 %v1688, %v1715
        %v1732 = vadd.f32 %v1691, %v1716
        %v1733 = vadd.f32 %v1696, %v1717
        %v1734 = vadd.f32 %v1699, %v1718
        %v1735 = vmax.f32 %v1719, 0.0
        %v1736 = vmax.f32 %v1720, 0.0
        %v1737 = vmax.f32 %v1721, 0.0
        %v1738 = vmax.f32 %v1722, 0.0
        %v1739 = vmax.f32 %v1723, 0.0
        %v1740 = vmax.f32 %v1724, 0.0
        %v1741 = vmax.f32 %v1725, 0.0
        %v1742 = vmax.f32 %v1726, 0.0
        %v1743 = vmax.f32 %v1727, 0.0
        %v1744 = vmax.f32 %v1728, 0.0
        %v1745 = vmax.f32 %v1729, 0.0
        %v1746 = vmax.f32 %v1730, 0.0
        %v1747 = vmax.f32 %v1731, 0.0
        %v1748 = vmax.f32 %v1732, 0.0
        %v1749 = vmax.f32 %v1733, 0.0
        %v1750 = vmax.f32 %v1734, 0.0
        %s1751 = scalar_lea.vmem %s4, 128
        %v1752 = vld [vmem:[%s1751] sm:$0xf]
        %v1753 = vld [vmem:[%s1751 + $0x4] sm:$0xf]
        %v1754 = vld [vmem:[%s1751 + $0x8] sm:$0xf]
        %v1755 = vld [vmem:[%s1751 + $0xc] sm:$0xf]
        %v1756 = vld [vmem:[%s1751 + $0x10] sm:$0xf]
        %v1757 = vld [vmem:[%s1751 + $0x14] sm:$0xf]
        %v1758 = vld [vmem:[%s1751 + $0x18] sm:$0xf]
        %v1759 = vld [vmem:[%s1751 + $0x1c] sm:$0xf]
        %v1760 = vld [vmem:[%s1751 + $0x20] sm:$0xf]
        %v1761 = vld [vmem:[%s1751 + $0x24] sm:$0xf]
        %v1762 = vld [vmem:[%s1751 + $0x28] sm:$0xf]
        %v1763 = vld [vmem:[%s1751 + $0x2c] sm:$0xf]
        %v1764 = vld [vmem:[%s1751 + $0x30] sm:$0xf]
        %v1765 = vld [vmem:[%s1751 + $0x34] sm:$0xf]
        %v1766 = vld [vmem:[%s1751 + $0x38] sm:$0xf]
        %v1767 = vld [vmem:[%s1751 + $0x3c] sm:$0xf]
        %v1768 = vpack.c.bf16 %v1736, %v1735
        %v1769 = vpack.c.bf16 %v1738, %v1737
        %v1770 = vpack.c.bf16 %v1740, %v1739
        %v1771 = vpack.c.bf16 %v1742, %v1741
        %v1772 = vpack.c.bf16 %v1744, %v1743
        %v1773 = vpack.c.bf16 %v1746, %v1745
        %v1774 = vpack.c.bf16 %v1748, %v1747
        %v1775 = vpack.c.bf16 %v1750, %v1749
        %s1776 = scalar_lea.vmem %s6, 384
        %v1777 = vld [vmem:[%s1776] sm:$0xff]
        %v1778 = vld [vmem:[%s1776 + $0x8] sm:$0xff]
        %v1779 = vld [vmem:[%s1776 + $0x10] sm:$0xff]
        %v1780 = vld [vmem:[%s1776 + $0x18] sm:$0xff]
        %v1781 = vld [vmem:[%s1776 + $0x20] sm:$0xff]
        %v1782 = vld [vmem:[%s1776 + $0x28] sm:$0xff]
        %v1783 = vld [vmem:[%s1776 + $0x30] sm:$0xff]
        %v1784 = vld [vmem:[%s1776 + $0x38] sm:$0xff]
        %v1785 = vld [vmem:[%s1776 + $0x40] sm:$0xff]
        %v1786 = vld [vmem:[%s1776 + $0x48] sm:$0xff]
        %v1787 = vld [vmem:[%s1776 + $0x50] sm:$0xff]
        %v1788 = vld [vmem:[%s1776 + $0x58] sm:$0xff]
        %v1789 = vld [vmem:[%s1776 + $0x60] sm:$0xff]
        %v1790 = vld [vmem:[%s1776 + $0x68] sm:$0xff]
        %v1791 = vld [vmem:[%s1776 + $0x70] sm:$0xff]
        %v1792 = vld [vmem:[%s1776 + $0x78] sm:$0xff]
        %v1809 = vunpack.c.l.b16 %v1752
        %v1810 = vunpack.c.l.b16 %v1753
        %v1811 = vunpack.c.l.b16 %v1754
        %v1812 = vunpack.c.l.b16 %v1755
        %v1813 = vunpack.c.l.b16 %v1756
        %v1814 = vunpack.c.l.b16 %v1757
        %v1815 = vunpack.c.l.b16 %v1758
        %v1816 = vunpack.c.l.b16 %v1759
        %v1817 = vunpack.c.l.b16 %v1760
        %v1818 = vunpack.c.l.b16 %v1761
        %v1819 = vunpack.c.l.b16 %v1762
        %v1820 = vunpack.c.l.b16 %v1763
        %v1821 = vunpack.c.l.b16 %v1764
        %v1822 = vunpack.c.l.b16 %v1765
        %v1823 = vunpack.c.l.b16 %v1766
        %v1824 = vunpack.c.l.b16 %v1767
        %v1825 = vpack.c.b16 %v1810, %v1809
        %v1826 = vpack.c.b16 %v1812, %v1811
        %v1827 = vpack.c.b16 %v1814, %v1813
        %v1828 = vpack.c.b16 %v1816, %v1815
        %v1829 = vpack.c.b16 %v1818, %v1817
        %v1830 = vpack.c.b16 %v1820, %v1819
        %v1831 = vpack.c.b16 %v1822, %v1821
        %v1832 = vpack.c.b16 %v1824, %v1823
        %1841 = vmatprep.subr.bf16.mxu0 0
        %1842 = vmatpush1.bf16.msra.mxu0 %v1768
        %1843 = vmatprep.subr.bf16.mxu0 0
        %1844 = vmatpush1.bf16.msra.mxu0 %v1769
        %1845 = vmatprep.subr.bf16.mxu0 0
        %1846 = vmatpush1.bf16.msra.mxu0 %v1770
        %1847 = vmatprep.subr.bf16.mxu0 0
        %1848 = vmatpush1.bf16.msra.mxu0 %v1771
        %1849 = vmatprep.subr.bf16.mxu0 0
        %1850 = vmatpush1.bf16.msra.mxu0 %v1772
        %1851 = vmatprep.subr.bf16.mxu0 0
        %1852 = vmatpush1.bf16.msra.mxu0 %v1773
        %1853 = vmatprep.subr.bf16.mxu0 0
        %1854 = vmatpush1.bf16.msra.mxu0 %v1774
        %1855 = vmatprep.subr.bf16.mxu0 0
        %1856 = vmatpush1.bf16.msra.mxu0 %v1775
        %1857 = vmatprep.subr.bf16.mxu0 0
        %1858 = vmatpush1.bf16.msra.mxu0 0
        %1859 = vmatprep.subr.bf16.mxu0 0
        %1860 = vmatpush1.bf16.msra.mxu0 0
        %1861 = vmatprep.subr.bf16.mxu0 0
        %1862 = vmatpush1.bf16.msra.mxu0 0
        %1863 = vmatprep.subr.bf16.mxu0 0
        %1864 = vmatpush1.bf16.msra.mxu0 0
        %1865 = vmatprep.subr.bf16.mxu0 0
        %1866 = vmatpush1.bf16.msra.mxu0 0
        %1867 = vmatprep.subr.bf16.mxu0 0
        %1868 = vmatpush1.bf16.msra.mxu0 0
        %1869 = vmatprep.subr.bf16.mxu0 0
        %1870 = vmatpush1.bf16.msra.mxu0 0
        %1871 = vmatprep.subr.bf16.mxu0 0
        %1872 = vmatpush1.bf16.msra.mxu0 0
        %1873 = vmatprep.mubr.bf16.mxu0 0
        %1874 = vmatmul.mubr.bf16.gmra.mrb[0].mxu0 %v1825
        %v1875 = vpop.f32.mrb[0].mxu0
        %v1876 = vadd.f32 %v1777, %v1875
        %v1877 = vpop.f32.mrb[0].mxu0
        %v1878 = vpop.f32.mrb[0].mxu0
        %v1879 = vadd.f32 %v1778, %v1878
        %v1880 = vpop.f32.mrb[0].mxu0
        %1881 = vmatprep.mubr.bf16.mxu0 0
        %1882 = vmatmul.mubr.bf16.gmra.mrb[0].mxu0 %v1826
        %v1883 = vpop.f32.mrb[0].mxu0
        %v1884 = vadd.f32 %v1779, %v1883
        %v1885 = vpop.f32.mrb[0].mxu0
        %v1886 = vpop.f32.mrb[0].mxu0
        %v1887 = vadd.f32 %v1780, %v1886
        %v1888 = vpop.f32.mrb[0].mxu0
        %1889 = vmatprep.mubr.bf16.mxu0 0
        %1890 = vmatmul.mubr.bf16.gmra.mrb[0].mxu0 %v1827
        %v1891 = vpop.f32.mrb[0].mxu0
        %v1892 = vadd.f32 %v1781, %v1891
        %v1893 = vpop.f32.mrb[0].mxu0
        %v1894 = vpop.f32.mrb[0].mxu0
        %v1895 = vadd.f32 %v1782, %v1894
        %v1896 = vpop.f32.mrb[0].mxu0
        %1897 = vmatprep.mubr.bf16.mxu0 0
        %1898 = vmatmul.mubr.bf16.gmra.mrb[0].mxu0 %v1828
        %v1899 = vpop.f32.mrb[0].mxu0
        %v1900 = vadd.f32 %v1783, %v1899
        %v1901 = vpop.f32.mrb[0].mxu0
        %v1902 = vpop.f32.mrb[0].mxu0
        %v1903 = vadd.f32 %v1784, %v1902
        %v1904 = vpop.f32.mrb[0].mxu0
        %1905 = vmatprep.mubr.bf16.mxu0 0
        %1906 = vmatmul.mubr.bf16.gmra.mrb[0].mxu0 %v1829
        %v1907 = vpop.f32.mrb[0].mxu0
        %v1908 = vadd.f32 %v1785, %v1907
        %v1909 = vpop.f32.mrb[0].mxu0
        %v1910 = vpop.f32.mrb[0].mxu0
        %v1911 = vadd.f32 %v1786, %v1910
        %v1912 = vpop.f32.mrb[0].mxu0
        %1913 = vmatprep.mubr.bf16.mxu0 0
        %1914 = vmatmul.mubr.bf16.gmra.mrb[0].mxu0 %v1830
        %v1915 = vpop.f32.mrb[0].mxu0
        %v1916 = vadd.f32 %v1787, %v1915
        %v1917 = vpop.f32.mrb[0].mxu0
        %v1918 = vpop.f32.mrb[0].mxu0
        %v1919 = vadd.f32 %v1788, %v1918
        %v1920 = vpop.f32.mrb[0].mxu0
        %1921 = vmatprep.mubr.bf16.mxu0 0
        %1922 = vmatmul.mubr.bf16.gmra.mrb[0].mxu0 %v1831
        %v1923 = vpop.f32.mrb[0].mxu0
        %v1924 = vadd.f32 %v1789, %v1923
        %v1925 = vpop.f32.mrb[0].mxu0
        %v1926 = vpop.f32.mrb[0].mxu0
        %v1927 = vadd.f32 %v1790, %v1926
        %v1928 = vpop.f32.mrb[0].mxu0
        %1929 = vmatprep.mubr.bf16.mxu0 0
        %1930 = vmatmul.mubr.bf16.gmra.mrb[0].mxu0 %v1832
        %v1931 = vpop.f32.mrb[0].mxu0
        %v1932 = vadd.f32 %v1791, %v1931
        %v1933 = vpop.f32.mrb[0].mxu0
        %v1934 = vpop.f32.mrb[0].mxu0
        %v1935 = vadd.f32 %v1792, %v1934
        %v1936 = vpop.f32.mrb[0].mxu0
        %1937 = vdwg.mxu0
        %v1938 = vmax.f32 %v1876, 0.0
        %v1939 = vmax.f32 %v1879, 0.0
        %v1940 = vmax.f32 %v1884, 0.0
        %v1941 = vmax.f32 %v1887, 0.0
        %v1942 = vmax.f32 %v1892, 0.0
        %v1943 = vmax.f32 %v1895, 0.0
        %v1944 = vmax.f32 %v1900, 0.0
        %v1945 = vmax.f32 %v1903, 0.0
        %v1946 = vmax.f32 %v1908, 0.0
        %v1947 = vmax.f32 %v1911, 0.0
        %v1948 = vmax.f32 %v1916, 0.0
        %v1949 = vmax.f32 %v1919, 0.0
        %v1950 = vmax.f32 %v1924, 0.0
        %v1951 = vmax.f32 %v1927, 0.0
        %v1952 = vmax.f32 %v1932, 0.0
        %v1953 = vmax.f32 %v1935, 0.0
        %s1954 = scalar_lea.vmem %s4, 192
        %v1955 = vld [vmem:[%s1954] sm:$0xf]
        %v1956 = vld [vmem:[%s1954 + $0x4] sm:$0xf]
        %v1957 = vld [vmem:[%s1954 + $0x8] sm:$0xf]
        %v1958 = vld [vmem:[%s1954 + $0xc] sm:$0xf]
        %v1959 = vld [vmem:[%s1954 + $0x10] sm:$0xf]
        %v1960 = vld [vmem:[%s1954 + $0x14] sm:$0xf]
        %v1961 = vld [vmem:[%s1954 + $0x18] sm:$0xf]
        %v1962 = vld [vmem:[%s1954 + $0x1c] sm:$0xf]
        %v1963 = vld [vmem:[%s1954 + $0x20] sm:$0xf]
        %v1964 = vld [vmem:[%s1954 + $0x24] sm:$0xf]
        %v1965 = vld [vmem:[%s1954 + $0x28] sm:$0xf]
        %v1966 = vld [vmem:[%s1954 + $0x2c] sm:$0xf]
        %v1967 = vld [vmem:[%s1954 + $0x30] sm:$0xf]
        %v1968 = vld [vmem:[%s1954 + $0x34] sm:$0xf]
        %v1969 = vld [vmem:[%s1954 + $0x38] sm:$0xf]
        %v1970 = vld [vmem:[%s1954 + $0x3c] sm:$0xf]
        %v1971 = vpack.c.bf16 %v1939, %v1938
        %v1972 = vpack.c.bf16 %v1941, %v1940
        %v1973 = vpack.c.bf16 %v1943, %v1942
        %v1974 = vpack.c.bf16 %v1945, %v1944
        %v1975 = vpack.c.bf16 %v1947, %v1946
        %v1976 = vpack.c.bf16 %v1949, %v1948
        %v1977 = vpack.c.bf16 %v1951, %v1950
        %v1978 = vpack.c.bf16 %v1953, %v1952
        %s1979 = scalar_lea.vmem %s6, 512
        %v1980 = vld [vmem:[%s1979] sm:$0xff]
        %v1981 = vld [vmem:[%s1979 + $0x8] sm:$0xff]
        %v1982 = vld [vmem:[%s1979 + $0x10] sm:$0xff]
        %v1983 = vld [vmem:[%s1979 + $0x18] sm:$0xff]
        %v1984 = vld [vmem:[%s1979 + $0x20] sm:$0xff]
        %v1985 = vld [vmem:[%s1979 + $0x28] sm:$0xff]
        %v1986 = vld [vmem:[%s1979 + $0x30] sm:$0xff]
        %v1987 = vld [vmem:[%s1979 + $0x38] sm:$0xff]
        %v1988 = vld [vmem:[%s1979 + $0x40] sm:$0xff]
        %v1989 = vld [vmem:[%s1979 + $0x48] sm:$0xff]
        %v1990 = vld [vmem:[%s1979 + $0x50] sm:$0xff]
        %v1991 = vld [vmem:[%s1979 + $0x58] sm:$0xff]
        %v1992 = vld [vmem:[%s1979 + $0x60] sm:$0xff]
        %v1993 = vld [vmem:[%s1979 + $0x68] sm:$0xff]
        %v1994 = vld [vmem:[%s1979 + $0x70] sm:$0xff]
        %v1995 = vld [vmem:[%s1979 + $0x78] sm:$0xff]
        %v2012 = vunpack.c.l.b16 %v1955
        %v2013 = vunpack.c.l.b16 %v1956
        %v2014 = vunpack.c.l.b16 %v1957
        %v2015 = vunpack.c.l.b16 %v1958
        %v2016 = vunpack.c.l.b16 %v1959
        %v2017 = vunpack.c.l.b16 %v1960
        %v2018 = vunpack.c.l.b16 %v1961
        %v2019 = vunpack.c.l.b16 %v1962
        %v2020 = vunpack.c.l.b16 %v1963
        %v2021 = vunpack.c.l.b16 %v1964
        %v2022 = vunpack.c.l.b16 %v1965
        %v2023 = vunpack.c.l.b16 %v1966
        %v2024 = vunpack.c.l.b16 %v1967
        %v2025 = vunpack.c.l.b16 %v1968
        %v2026 = vunpack.c.l.b16 %v1969
        %v2027 = vunpack.c.l.b16 %v1970
        %v2028 = vpack.c.b16 %v2013, %v2012
        %v2029 = vpack.c.b16 %v2015, %v2014
        %v2030 = vpack.c.b16 %v2017, %v2016
        %v2031 = vpack.c.b16 %v2019, %v2018
        %v2032 = vpack.c.b16 %v2021, %v2020
        %v2033 = vpack.c.b16 %v2023, %v2022
        %v2034 = vpack.c.b16 %v2025, %v2024
        %v2035 = vpack.c.b16 %v2027, %v2026
        %2044 = vmatprep.subr.bf16.mxu0 0
        %2045 = vmatpush1.bf16.msra.mxu0 %v1971
        %2046 = vmatprep.subr.bf16.mxu0 0
        %2047 = vmatpush1.bf16.msra.mxu0 %v1972
        %2048 = vmatprep.subr.bf16.mxu0 0
        %2049 = vmatpush1.bf16.msra.mxu0 %v1973
        %2050 = vmatprep.subr.bf16.mxu0 0
        %2051 = vmatpush1.bf16.msra.mxu0 %v1974
        %2052 = vmatprep.subr.bf16.mxu0 0
        %2053 = vmatpush1.bf16.msra.mxu0 %v1975
        %2054 = vmatprep.subr.bf16.mxu0 0
        %2055 = vmatpush1.bf16.msra.mxu0 %v1976
        %2056 = vmatprep.subr.bf16.mxu0 0
        %2057 = vmatpush1.bf16.msra.mxu0 %v1977
        %2058 = vmatprep.subr.bf16.mxu0 0
        %2059 = vmatpush1.bf16.msra.mxu0 %v1978
        %2060 = vmatprep.subr.bf16.mxu0 0
        %2061 = vmatpush1.bf16.msra.mxu0 0
        %2062 = vmatprep.subr.bf16.mxu0 0
        %2063 = vmatpush1.bf16.msra.mxu0 0
        %2064 = vmatprep.subr.bf16.mxu0 0
        %2065 = vmatpush1.bf16.msra.mxu0 0
        %2066 = vmatprep.subr.bf16.mxu0 0
        %2067 = vmatpush1.bf16.msra.mxu0 0
        %2068 = vmatprep.subr.bf16.mxu0 0
        %2069 = vmatpush1.bf16.msra.mxu0 0
        %2070 = vmatprep.subr.bf16.mxu0 0
        %2071 = vmatpush1.bf16.msra.mxu0 0
        %2072 = vmatprep.subr.bf16.mxu0 0
        %2073 = vmatpush1.bf16.msra.mxu0 0
        %2074 = vmatprep.subr.bf16.mxu0 0
        %2075 = vmatpush1.bf16.msra.mxu0 0
        %2076 = vmatprep.mubr.bf16.mxu0 0
        %2077 = vmatmul.mubr.bf16.gmra.mrb[0].mxu0 %v2028
        %v2078 = vpop.f32.mrb[0].mxu0
        %v2079 = vadd.f32 %v1980, %v2078
        %v2080 = vpop.f32.mrb[0].mxu0
        %v2081 = vpop.f32.mrb[0].mxu0
        %v2082 = vadd.f32 %v1981, %v2081
        %v2083 = vpop.f32.mrb[0].mxu0
        %2084 = vmatprep.mubr.bf16.mxu0 0
        %2085 = vmatmul.mubr.bf16.gmra.mrb[0].mxu0 %v2029
        %v2086 = vpop.f32.mrb[0].mxu0
        %v2087 = vadd.f32 %v1982, %v2086
        %v2088 = vpop.f32.mrb[0].mxu0
        %v2089 = vpop.f32.mrb[0].mxu0
        %v2090 = vadd.f32 %v1983, %v2089
        %v2091 = vpop.f32.mrb[0].mxu0
        %2092 = vmatprep.mubr.bf16.mxu0 0
        %2093 = vmatmul.mubr.bf16.gmra.mrb[0].mxu0 %v2030
        %v2094 = vpop.f32.mrb[0].mxu0
        %v2095 = vadd.f32 %v1984, %v2094
        %v2096 = vpop.f32.mrb[0].mxu0
        %v2097 = vpop.f32.mrb[0].mxu0
        %v2098 = vadd.f32 %v1985, %v2097
        %v2099 = vpop.f32.mrb[0].mxu0
        %2100 = vmatprep.mubr.bf16.mxu0 0
        %2101 = vmatmul.mubr.bf16.gmra.mrb[0].mxu0 %v2031
        %v2102 = vpop.f32.mrb[0].mxu0
        %v2103 = vadd.f32 %v1986, %v2102
        %v2104 = vpop.f32.mrb[0].mxu0
        %v2105 = vpop.f32.mrb[0].mxu0
        %v2106 = vadd.f32 %v1987, %v2105
        %v2107 = vpop.f32.mrb[0].mxu0
        %2108 = vmatprep.mubr.bf16.mxu0 0
        %2109 = vmatmul.mubr.bf16.gmra.mrb[0].mxu0 %v2032
        %v2110 = vpop.f32.mrb[0].mxu0
        %v2111 = vadd.f32 %v1988, %v2110
        %v2112 = vpop.f32.mrb[0].mxu0
        %v2113 = vpop.f32.mrb[0].mxu0
        %v2114 = vadd.f32 %v1989, %v2113
        %v2115 = vpop.f32.mrb[0].mxu0
        %2116 = vmatprep.mubr.bf16.mxu0 0
        %2117 = vmatmul.mubr.bf16.gmra.mrb[0].mxu0 %v2033
        %v2118 = vpop.f32.mrb[0].mxu0
        %v2119 = vadd.f32 %v1990, %v2118
        %v2120 = vpop.f32.mrb[0].mxu0
        %v2121 = vpop.f32.mrb[0].mxu0
        %v2122 = vadd.f32 %v1991, %v2121
        %v2123 = vpop.f32.mrb[0].mxu0
        %2124 = vmatprep.mubr.bf16.mxu0 0
        %2125 = vmatmul.mubr.bf16.gmra.mrb[0].mxu0 %v2034
        %v2126 = vpop.f32.mrb[0].mxu0
        %v2127 = vadd.f32 %v1992, %v2126
        %v2128 = vpop.f32.mrb[0].mxu0
        %v2129 = vpop.f32.mrb[0].mxu0
        %v2130 = vadd.f32 %v1993, %v2129
        %v2131 = vpop.f32.mrb[0].mxu0
        %2132 = vmatprep.mubr.bf16.mxu0 0
        %2133 = vmatmul.mubr.bf16.gmra.mrb[0].mxu0 %v2035
        %v2134 = vpop.f32.mrb[0].mxu0
        %v2135 = vadd.f32 %v1994, %v2134
        %v2136 = vpop.f32.mrb[0].mxu0
        %v2137 = vpop.f32.mrb[0].mxu0
        %v2138 = vadd.f32 %v1995, %v2137
        %v2139 = vpop.f32.mrb[0].mxu0
        %2140 = vdwg.mxu0
        %v2141 = vmax.f32 %v2079, 0.0
        %v2142 = vmax.f32 %v2082, 0.0
        %v2143 = vmax.f32 %v2087, 0.0
        %v2144 = vmax.f32 %v2090, 0.0
        %v2145 = vmax.f32 %v2095, 0.0
        %v2146 = vmax.f32 %v2098, 0.0
        %v2147 = vmax.f32 %v2103, 0.0
        %v2148 = vmax.f32 %v2106, 0.0
        %v2149 = vmax.f32 %v2111, 0.0
        %v2150 = vmax.f32 %v2114, 0.0
        %v2151 = vmax.f32 %v2119, 0.0
        %v2152 = vmax.f32 %v2122, 0.0
        %v2153 = vmax.f32 %v2127, 0.0
        %v2154 = vmax.f32 %v2130, 0.0
        %v2155 = vmax.f32 %v2135, 0.0
        %v2156 = vmax.f32 %v2138, 0.0
        %s2157 = scalar_lea.vmem %s4, 256
        %v2158 = vld [vmem:[%s2157] sm:$0xf]
        %v2159 = vld [vmem:[%s2157 + $0x4] sm:$0xf]
        %v2160 = vld [vmem:[%s2157 + $0x8] sm:$0xf]
        %v2161 = vld [vmem:[%s2157 + $0xc] sm:$0xf]
        %v2162 = vld [vmem:[%s2157 + $0x10] sm:$0xf]
        %v2163 = vld [vmem:[%s2157 + $0x14] sm:$0xf]
        %v2164 = vld [vmem:[%s2157 + $0x18] sm:$0xf]
        %v2165 = vld [vmem:[%s2157 + $0x1c] sm:$0xf]
        %v2166 = vld [vmem:[%s2157 + $0x20] sm:$0xf]
        %v2167 = vld [vmem:[%s2157 + $0x24] sm:$0xf]
        %v2168 = vld [vmem:[%s2157 + $0x28] sm:$0xf]
        %v2169 = vld [vmem:[%s2157 + $0x2c] sm:$0xf]
        %v2170 = vld [vmem:[%s2157 + $0x30] sm:$0xf]
        %v2171 = vld [vmem:[%s2157 + $0x34] sm:$0xf]
        %v2172 = vld [vmem:[%s2157 + $0x38] sm:$0xf]
        %v2173 = vld [vmem:[%s2157 + $0x3c] sm:$0xf]
        %v2174 = vpack.c.bf16 %v2142, %v2141
        %v2175 = vpack.c.bf16 %v2144, %v2143
        %v2176 = vpack.c.bf16 %v2146, %v2145
        %v2177 = vpack.c.bf16 %v2148, %v2147
        %v2178 = vpack.c.bf16 %v2150, %v2149
        %v2179 = vpack.c.bf16 %v2152, %v2151
        %v2180 = vpack.c.bf16 %v2154, %v2153
        %v2181 = vpack.c.bf16 %v2156, %v2155
        %s2182 = scalar_lea.vmem %s6, 640
        %v2183 = vld [vmem:[%s2182] sm:$0xff]
        %v2200 = vunpack.c.l.b16 %v2158
        %v2201 = vunpack.c.l.b16 %v2159
        %v2202 = vunpack.c.l.b16 %v2160
        %v2203 = vunpack.c.l.b16 %v2161
        %v2204 = vunpack.c.l.b16 %v2162
        %v2205 = vunpack.c.l.b16 %v2163
        %v2206 = vunpack.c.l.b16 %v2164
        %v2207 = vunpack.c.l.b16 %v2165
        %v2208 = vunpack.c.l.b16 %v2166
        %v2209 = vunpack.c.l.b16 %v2167
        %v2210 = vunpack.c.l.b16 %v2168
        %v2211 = vunpack.c.l.b16 %v2169
        %v2212 = vunpack.c.l.b16 %v2170
        %v2213 = vunpack.c.l.b16 %v2171
        %v2214 = vunpack.c.l.b16 %v2172
        %v2215 = vunpack.c.l.b16 %v2173
        %v2216 = vpack.c.b16 %v2201, %v2200
        %v2217 = vpack.c.b16 %v2203, %v2202
        %v2218 = vpack.c.b16 %v2205, %v2204
        %v2219 = vpack.c.b16 %v2207, %v2206
        %v2220 = vpack.c.b16 %v2209, %v2208
        %v2221 = vpack.c.b16 %v2211, %v2210
        %v2222 = vpack.c.b16 %v2213, %v2212
        %v2223 = vpack.c.b16 %v2215, %v2214
        %2232 = vmatprep.subr.bf16.mxu0 0
        %2233 = vmatpush1.bf16.msra.mxu0 %v2174
        %2234 = vmatprep.subr.bf16.mxu0 0
        %2235 = vmatpush1.bf16.msra.mxu0 %v2175
        %2236 = vmatprep.subr.bf16.mxu0 0
        %2237 = vmatpush1.bf16.msra.mxu0 %v2176
        %2238 = vmatprep.subr.bf16.mxu0 0
        %2239 = vmatpush1.bf16.msra.mxu0 %v2177
        %2240 = vmatprep.subr.bf16.mxu0 0
        %2241 = vmatpush1.bf16.msra.mxu0 %v2178
        %2242 = vmatprep.subr.bf16.mxu0 0
        %2243 = vmatpush1.bf16.msra.mxu0 %v2179
        %2244 = vmatprep.subr.bf16.mxu0 0
        %2245 = vmatpush1.bf16.msra.mxu0 %v2180
        %2246 = vmatprep.subr.bf16.mxu0 0
        %2247 = vmatpush1.bf16.msra.mxu0 %v2181
        %2248 = vmatprep.subr.bf16.mxu0 0
        %2249 = vmatpush1.bf16.msra.mxu0 0
        %2250 = vmatprep.subr.bf16.mxu0 0
        %2251 = vmatpush1.bf16.msra.mxu0 0
        %2252 = vmatprep.subr.bf16.mxu0 0
        %2253 = vmatpush1.bf16.msra.mxu0 0
        %2254 = vmatprep.subr.bf16.mxu0 0
        %2255 = vmatpush1.bf16.msra.mxu0 0
        %2256 = vmatprep.subr.bf16.mxu0 0
        %2257 = vmatpush1.bf16.msra.mxu0 0
        %2258 = vmatprep.subr.bf16.mxu0 0
        %2259 = vmatpush1.bf16.msra.mxu0 0
        %2260 = vmatprep.subr.bf16.mxu0 0
        %2261 = vmatpush1.bf16.msra.mxu0 0
        %2262 = vmatprep.subr.bf16.mxu0 0
        %2263 = vmatpush1.bf16.msra.mxu0 0
        %2264 = vmatprep.mubr.bf16.mxu0 0
        %2265 = vmatmul.mubr.bf16.gmra.mrb[0].mxu0 %v2216
        %v2266 = vpop.f32.mrb[0].mxu0
        %v2267 = vadd.f32 %v2183, %v2266
        %v2268 = vpop.f32.mrb[0].mxu0
        %v2269 = vpop.f32.mrb[0].mxu0
        %v2270 = vpop.f32.mrb[0].mxu0
        %2271 = vmatprep.mubr.bf16.mxu0 0
        %2272 = vmatmul.mubr.bf16.gmra.mrb[0].mxu0 %v2217
        %v2273 = vpop.f32.mrb[0].mxu0
        %v2274 = vpop.f32.mrb[0].mxu0
        %v2275 = vpop.f32.mrb[0].mxu0
        %v2276 = vpop.f32.mrb[0].mxu0
        %2277 = vmatprep.mubr.bf16.mxu0 0
        %2278 = vmatmul.mubr.bf16.gmra.mrb[0].mxu0 %v2218
        %v2279 = vpop.f32.mrb[0].mxu0
        %v2280 = vpop.f32.mrb[0].mxu0
        %v2281 = vpop.f32.mrb[0].mxu0
        %v2282 = vpop.f32.mrb[0].mxu0
        %2283 = vmatprep.mubr.bf16.mxu0 0
        %2284 = vmatmul.mubr.bf16.gmra.mrb[0].mxu0 %v2219
        %v2285 = vpop.f32.mrb[0].mxu0
        %v2286 = vpop.f32.mrb[0].mxu0
        %v2287 = vpop.f32.mrb[0].mxu0
        %v2288 = vpop.f32.mrb[0].mxu0
        %2289 = vmatprep.mubr.bf16.mxu0 0
        %2290 = vmatmul.mubr.bf16.gmra.mrb[0].mxu0 %v2220
        %v2291 = vpop.f32.mrb[0].mxu0
        %v2292 = vpop.f32.mrb[0].mxu0
        %v2293 = vpop.f32.mrb[0].mxu0
        %v2294 = vpop.f32.mrb[0].mxu0
        %2295 = vmatprep.mubr.bf16.mxu0 0
        %2296 = vmatmul.mubr.bf16.gmra.mrb[0].mxu0 %v2221
        %v2297 = vpop.f32.mrb[0].mxu0
        %v2298 = vpop.f32.mrb[0].mxu0
        %v2299 = vpop.f32.mrb[0].mxu0
        %v2300 = vpop.f32.mrb[0].mxu0
        %2301 = vmatprep.mubr.bf16.mxu0 0
        %2302 = vmatmul.mubr.bf16.gmra.mrb[0].mxu0 %v2222
        %v2303 = vpop.f32.mrb[0].mxu0
        %v2304 = vpop.f32.mrb[0].mxu0
        %v2305 = vpop.f32.mrb[0].mxu0
        %v2306 = vpop.f32.mrb[0].mxu0
        %2307 = vmatprep.mubr.bf16.mxu0 0
        %2308 = vmatmul.mubr.bf16.gmra.mrb[0].mxu0 %v2223
        %v2309 = vpop.f32.mrb[0].mxu0
        %v2310 = vpop.f32.mrb[0].mxu0
        %v2311 = vpop.f32.mrb[0].mxu0
        %v2312 = vpop.f32.mrb[0].mxu0
        %2313 = vdwg.mxu0
        %2314 = vst.msk [vmem:[%s330] sm:$0xff] %vm1314, %v2267
      $region56: #{pointnet_forward.3} parent=47 // pred_fallthru
        _
      %p2315 = scmp.lt.s32.totalorder %s22, 1
      %s2316 = scalar_select %p2315, %s22, 1
      %s2317 = smul.addr %s2316, 8
      %s2318 = scalar_lea.vmem %s7, %s2317
      // Predicated region
      $region57: #{pointnet_forward.3} parent=47 // pred_check
        %p2319 = pneg %p212
      $region58: #{pointnet_forward.3} parent=47 // pred_check_branch
        %2321 = sbr.rel (%p2319) target = $region60
      $region59: #{pointnet_forward.3} parent=47 // pred_region
        _
      $region60: #{pointnet_forward.3} parent=47 // pred_fallthru
        _
    $region48: #{pointnet_forward.3} parent=5 // pred_fallthru
      _
    %p2322 = scmp.le.s32.totalorder 2, %s13
    // Predicated region
    $region61: #{pointnet_forward.3} parent=5 // pred_check
      %p2323 = pneg %p2322
    $region62: #{pointnet_forward.3} parent=5 // pred_check_branch
      %2325 = sbr.rel (%p2323) target = $region64
    $region63: #{pointnet_forward.3} parent=5 // pred_region
      %s2326 = ssub.s32 %s13, 2
      // Predicated region
      $region65: #{pointnet_forward.3} parent=63 // pred_check
        %p2327 = pneg %p218
      $region66: #{pointnet_forward.3} parent=63 // pred_check_branch
        %2329 = sbr.rel (%p2327) target = $region68
      $region67: #{pointnet_forward.3} parent=63 // pred_region
        %p2330 = scmp.lt.s32.totalorder %s24, 1
        %s2331 = scalar_select %p2330, %s24, 1
        %s2332 = smul.addr %s2331, 8
        %s2333 = scalar_lea.vmem %s7, %s2332
      $region68: #{pointnet_forward.3} parent=63 // pred_fallthru
        _
    $region64: #{pointnet_forward.3} parent=5 // pred_fallthru
      _
  $region6: #{pointnet_forward.3} parent=0 // loop_footer
    %s17 = sadd.s32 1, %s13
  $region7: #{pointnet_forward.3} parent=0 // loop_footer_branch
    %12 = sbr.rel target = $region3
  $region8: #{pointnet_forward.3} parent=0 // loop_exit
    _

</llo_original>
